<compile_context>
chip_gen: v7x
topology: tpu7x:2x2x1
jax: 0.10.0
libtpu: 0.0.40
codegen_flags: <defaults>
</compile_context>

<pallas_src>
import jax
import jax.numpy as jnp
from jax.experimental import pallas as pl
from jax.experimental.pallas import tpu as pltpu

H1, H2 = 1600, 400        # hidden dims hard-coded in the Encoder
LANE = 128
TM = 256                  # row tile (MXU M-fill); fine on v5e/v6e/v7x
TK = 512                  # A-column (reduction) tile; multiple of TM so one pad granule works
FUSE_MAX = 512            # padded graphs up to this size take the single-invocation fused path
H1_CHUNKS = (512, 512, 640)   # sums to 1664; each chunk lane- (128) and bf16-sublane- (16) aligned
VMEM_LIMIT = 32 * 1024 * 1024


def _pad_to(n, m):
    return ((n + m - 1) // m) * m


def _pad2(arr, shape, dtype):
    out = jnp.zeros(shape, dtype)
    return out.at[: arr.shape[0], : arr.shape[1]].set(arr.astype(dtype))


def _h1_chunked_ffn(ax_bf16, w1_ref, b1_ref, w2_ref, out_cols):
    """relu(ax @ W1 + b1) @ W2 with the H1 axis processed in static chunks so the full
    (rows, 1664) f32 intermediate is never live (saves ~2 MiB VMEM + vld/vst traffic)."""
    rows = ax_bf16.shape[0]
    m = jnp.zeros((rows, out_cols), jnp.float32)
    off = 0
    for size in H1_CHUNKS:          # static Python loop -> unrolled, slices are tile-aligned
        h = jnp.dot(ax_bf16, w1_ref[:, off:off + size],
                    preferred_element_type=jnp.float32) + b1_ref[:, off:off + size]
        h = jnp.maximum(h, 0.0).astype(jnp.bfloat16)
        m = m + jnp.dot(h, w2_ref[off:off + size, :],
                        preferred_element_type=jnp.float32)
        off += size
    return m


# ---- pass 1 (K-tiled):  AX_acc += A[i,k] @ X[k];  at last k:  M[i] = relu(AX@W1+b1)@W2 ----
def conv1_kernel(a_ref, x_ref, w1_ref, b1_ref, w2_ref, m_ref, acc_ref):
    k = pl.program_id(1)

    @pl.when(k == 0)
    def _():
        acc_ref[...] = jnp.zeros_like(acc_ref)

    acc_ref[...] += jnp.dot(a_ref[...], x_ref[...], preferred_element_type=jnp.float32)

    @pl.when(k == pl.num_programs(1) - 1)
    def _():
        ax = acc_ref[...].astype(jnp.bfloat16)
        m = _h1_chunked_ffn(ax, w1_ref, b1_ref, w2_ref, m_ref.shape[1])
        m_ref[...] = m.astype(m_ref.dtype)


# ---- pass 2 (K-tiled):  Z_acc += A[i,k] @ M[k];  at last k:  Z[i] = Z_acc + b2 ----
def conv2_kernel(a_ref, m_ref, b2_ref, z_ref, acc_ref):
    k = pl.program_id(1)

    @pl.when(k == 0)
    def _():
        acc_ref[...] = jnp.zeros_like(acc_ref)

    acc_ref[...] += jnp.dot(a_ref[...], m_ref[...], preferred_element_type=jnp.float32)

    @pl.when(k == pl.num_programs(1) - 1)
    def _():
        z_ref[...] = (acc_ref[...] + b2_ref[...]).astype(z_ref.dtype)


# ---- small-graph fast path: both GCN layers in one invocation, M never leaves VMEM ----
def fused_kernel(a_ref, x_ref, w1_ref, b1_ref, w2_ref, b2_ref, z_ref):
    a = a_ref[...]
    ax = jnp.dot(a, x_ref[...], preferred_element_type=jnp.float32).astype(jnp.bfloat16)
    m = _h1_chunked_ffn(ax, w1_ref, b1_ref, w2_ref, z_ref.shape[1])
    z = jnp.dot(a, m.astype(jnp.bfloat16), preferred_element_type=jnp.float32)
    z_ref[...] = (z + b2_ref[...]).astype(z_ref.dtype)


def gcn_norm_adj(edge_index, num_nodes):
    """Dense GCN-normalized adjacency (PyG gcn_norm, improved=False): duplicate edges are
    scatter-ADDed, self-loops only added where missing (add_remaining_self_loops),
    symmetric D^{-1/2} A D^{-1/2} normalization."""
    src, dst = edge_index[0], edge_index[1]
    a = jnp.zeros((num_nodes, num_nodes), jnp.float32)
    # message flows src -> dst: out[dst] aggregates x[src]  =>  A[dst, src] += 1
    a = a.at[dst, src].add(1.0)
    diag = jnp.diagonal(a)
    a = a + jnp.diag(jnp.where(diag == 0.0, 1.0, 0.0))
    deg = a.sum(axis=1)
    d_inv_sqrt = jnp.where(deg > 0.0, 1.0 / jnp.sqrt(deg), 0.0)
    return a * d_inv_sqrt[:, None] * d_inv_sqrt[None, :]


def gae_forward(x, edge_index, params):
    n, f = x.shape
    w1, b1, w2, b2 = params
    a = gcn_norm_adj(edge_index, n)

    f_pad = _pad_to(f, LANE)
    h1_pad = _pad_to(H1, LANE)    # 1664
    h2_pad = _pad_to(H2, LANE)    # 512
    assert sum(H1_CHUNKS) == h1_pad

    # zero padding is semantics-preserving: padded A rows/cols and padded weight rows/cols
    # contribute nothing to the real rows; padded output rows/cols are sliced off below.
    w1_p = _pad2(w1, (f_pad, h1_pad), jnp.bfloat16)
    b1_p = _pad2(b1.reshape(1, H1), (1, h1_pad), jnp.float32)
    w2_p = _pad2(w2, (h1_pad, h2_pad), jnp.bfloat16)
    b2_p = _pad2(b2.reshape(1, H2), (1, h2_pad), jnp.float32)

    n_small = _pad_to(max(n, 1), LANE)

    # ---------------- small-graph fused path ----------------
    if n_small <= FUSE_MAX:
        n_pad = n_small
        a_p = _pad2(a, (n_pad, n_pad), jnp.bfloat16)
        x_p = _pad2(x, (n_pad, f_pad), jnp.bfloat16)
        full = lambda s: pl.BlockSpec(s, lambda i: (0, 0))
        cost = pl.CostEstimate(
            flops=2 * n_pad * n_pad * (f_pad + h2_pad)
            + 2 * n_pad * h1_pad * (f_pad + h2_pad),
            transcendentals=0,
            bytes_accessed=2 * (int(a_p.size) + int(x_p.size) + int(w1_p.size) + int(w2_p.size))
            + 4 * (int(b1_p.size) + int(b2_p.size)) + 4 * n_pad * h2_pad,
        )
        z = pl.pallas_call(
            fused_kernel,
            out_shape=jax.ShapeDtypeStruct((n_pad, h2_pad), jnp.float32),
            grid_spec=pltpu.PrefetchScalarGridSpec(
                num_scalar_prefetch=0,
                grid=(1,),
                in_specs=[full(a_p.shape), full(x_p.shape), full(w1_p.shape),
                          full(b1_p.shape), full(w2_p.shape), full(b2_p.shape)],
                out_specs=full((n_pad, h2_pad)),
            ),
            compiler_params=pltpu.CompilerParams(
                dimension_semantics=("arbitrary",),
                vmem_limit_bytes=VMEM_LIMIT),
            cost_estimate=cost,
        )(a_p, x_p, w1_p, b1_p, w2_p, b2_p)
        return z[:n, :H2]

    # ---------------- large-graph two-pass K-tiled path ----------------
    n_pad = _pad_to(n, TK)                 # TK is a multiple of TM, and n > FUSE_MAX => >= 2 row tiles
    a_p = _pad2(a, (n_pad, n_pad), jnp.bfloat16)
    x_p = _pad2(x, (n_pad, f_pad), jnp.bfloat16)

    grid = (n_pad // TM, n_pad // TK)
    cparams = pltpu.CompilerParams(
        dimension_semantics=("parallel", "arbitrary"),
        vmem_limit_bytes=VMEM_LIMIT)

    # pass 1: M = relu((A @ X) @ W1 + b1) @ W2     (all row-wise after the A@X hop)
    cost1 = pl.CostEstimate(
        flops=2 * n_pad * (n_pad * f_pad + f_pad * h1_pad + h1_pad * h2_pad),
        transcendentals=0,
        bytes_accessed=2 * int(a_p.size) + 2 * int(x_p.size) * (n_pad // TM)
        + 2 * (int(w1_p.size) + int(w2_p.size)) + 4 * int(b1_p.size) + 2 * n_pad * h2_pad,
    )
    m = pl.pallas_call(
        conv1_kernel,
        out_shape=jax.ShapeDtypeStruct((n_pad, h2_pad), jnp.bfloat16),
        grid_spec=pltpu.PrefetchScalarGridSpec(
            num_scalar_prefetch=0,
            grid=grid,
            in_specs=[
                pl.BlockSpec((TM, TK), lambda i, k: (i, k)),       # A row/col tile
                pl.BlockSpec((TK, f_pad), lambda i, k: (k, 0)),    # X k-tile
                pl.BlockSpec(w1_p.shape, lambda i, k: (0, 0)),     # grid-invariant weights
                pl.BlockSpec(b1_p.shape, lambda i, k: (0, 0)),
                pl.BlockSpec(w2_p.shape, lambda i, k: (0, 0)),
            ],
            out_specs=pl.BlockSpec((TM, h2_pad), lambda i, k: (i, 0)),
            scratch_shapes=[pltpu.VMEM((TM, f_pad), jnp.float32)],
        ),
        compiler_params=cparams,
        cost_estimate=cost1,
    )(a_p, x_p, w1_p, b1_p, w2_p)

    # pass 2: Z = A @ M + b2   (neighborhood hop of conv2)
    cost2 = pl.CostEstimate(
        flops=2 * n_pad * n_pad * h2_pad,
        transcendentals=0,
        bytes_accessed=2 * int(a_p.size) + 2 * int(m.size) * (n_pad // TM)
        + 4 * int(b2_p.size) + 4 * n_pad * h2_pad,
    )
    z = pl.pallas_call(
        conv2_kernel,
        out_shape=jax.ShapeDtypeStruct((n_pad, h2_pad), jnp.float32),
        grid_spec=pltpu.PrefetchScalarGridSpec(
            num_scalar_prefetch=0,
            grid=grid,
            in_specs=[
                pl.BlockSpec((TM, TK), lambda i, k: (i, k)),       # A row/col tile
                pl.BlockSpec((TK, h2_pad), lambda i, k: (k, 0)),   # M k-tile
                pl.BlockSpec(b2_p.shape, lambda i, k: (0, 0)),
            ],
            out_specs=pl.BlockSpec((TM, h2_pad), lambda i, k: (i, 0)),
            scratch_shapes=[pltpu.VMEM((TM, h2_pad), jnp.float32)],
        ),
        compiler_params=cparams,
        cost_estimate=cost2,
    )(a_p, m, b2_p)

    return z[:n, :H2]


def glorot(key, shape):
    # deterministic glorot-uniform init (matches PyG GCNConv weight init scheme)
    limit = jnp.sqrt(6.0 / (shape[0] + shape[1]))
    return jax.random.uniform(key, shape, jnp.float32, -limit, limit)


if __name__ == "__main__":
    key = jax.random.PRNGKey(0)
    num_features = 16
    _, _, _, k4, k5 = jax.random.split(key, 5)

    # parameters: GCNConv(F,1600) and GCNConv(1600,400); biases init to zero (as PyG)
    w1 = glorot(k4, (num_features, H1))
    b1 = jnp.zeros((1, H1), jnp.float32)
    w2 = glorot(k5, (H1, H2))
    b2 = jnp.zeros((1, H2), jnp.float32)
    params = (w1, b1, w2, b2)

    # exercise both code paths: fused small-graph (n=32) and K-tiled two-pass (n=600)
    for n_nodes, n_edges in ((32, 64), (600, 1200)):
        kk = jax.random.fold_in(key, n_nodes)
        kx, ks, kd = jax.random.split(kk, 3)
        x = jax.random.normal(kx, (n_nodes, num_features), jnp.float32)
        src = jax.random.randint(ks, (n_edges,), 0, n_nodes)
        dst = jax.random.randint(kd, (n_edges,), 0, n_nodes)
        edge_index = jnp.stack(
            [jnp.concatenate([src, dst]), jnp.concatenate([dst, src])]
        ).astype(jnp.int32)

        out = gae_forward(x, edge_index, params)
        jax.block_until_ready(out)
        assert out.shape == (n_nodes, H2) and out.dtype == jnp.float32
        assert bool(jnp.isfinite(out).all())

    print("KERNEL_OK")
</pallas_src>

<mosaic_0001>
module attributes {stable_mosaic.version = 11 : i64} {
  func.func @fused_kernel(%arg0: i32, %arg1: memref<128x128xbf16, #tpu.memory_space<vmem>>, %arg2: memref<128x128xbf16, #tpu.memory_space<vmem>>, %arg3: memref<128x1664xbf16, #tpu.memory_space<vmem>>, %arg4: memref<1x1664xf32, #tpu.memory_space<vmem>>, %arg5: memref<1664x512xbf16, #tpu.memory_space<vmem>>, %arg6: memref<1x512xf32, #tpu.memory_space<vmem>>, %arg7: memref<128x512xf32, #tpu.memory_space<vmem>>) attributes {dimension_semantics = [#tpu.dimension_semantics<arbitrary>], iteration_bounds = array<i64: 1>, scalar_prefetch = 0 : i64, scratch_operands = 0 : i64, tpu.core_type = #tpu.core_type<tc>, window_params = [{pipeline_mode = #tpu.pipeline_mode<synchronous>, transform_indices = @transform_0, window_bounds = array<i64: 128, 128>}, {pipeline_mode = #tpu.pipeline_mode<synchronous>, transform_indices = @transform_1, window_bounds = array<i64: 128, 128>}, {pipeline_mode = #tpu.pipeline_mode<synchronous>, transform_indices = @transform_2, window_bounds = array<i64: 128, 1664>}, {pipeline_mode = #tpu.pipeline_mode<synchronous>, transform_indices = @transform_3, window_bounds = array<i64: 1, 1664>}, {pipeline_mode = #tpu.pipeline_mode<synchronous>, transform_indices = @transform_4, window_bounds = array<i64: 1664, 512>}, {pipeline_mode = #tpu.pipeline_mode<synchronous>, transform_indices = @transform_5, window_bounds = array<i64: 1, 512>}, {pipeline_mode = #tpu.pipeline_mode<synchronous>, transform_indices = @transform_6, window_bounds = array<i64: 128, 512>}]} {
    %c0 = arith.constant 0 : index
    %c0_0 = arith.constant 0 : index
    %0 = vector.load %arg1[%c0, %c0_0] : memref<128x128xbf16, #tpu.memory_space<vmem>>, vector<128x128xbf16>
    %c0_1 = arith.constant 0 : index
    %c0_2 = arith.constant 0 : index
    %1 = vector.load %arg2[%c0_1, %c0_2] : memref<128x128xbf16, #tpu.memory_space<vmem>>, vector<128x128xbf16>
    %cst = arith.constant dense<0.000000e+00> : vector<128x128xf32>
    %2 = tpu.matmul %0, %1, %cst {dimension_numbers = #tpu.dot_dimension_numbers<[1], [0], [0], [1], [0, 0, 1, 1], [], []>} : vector<128x128xbf16>, vector<128x128xbf16>, vector<128x128xf32> -> vector<128x128xf32>
    %3 = arith.truncf %2 : vector<128x128xf32> to vector<128x128xbf16>
    %cst_3 = arith.constant 0.000000e+00 : f32
    %4 = vector.broadcast %cst_3 : f32 to vector<128x512xf32>
    %c0_4 = arith.constant 0 : index
    %c0_5 = arith.constant 0 : index
    %5 = vector.load %arg3[%c0_4, %c0_5] : memref<128x1664xbf16, #tpu.memory_space<vmem>>, vector<128x512xbf16>
    %cst_6 = arith.constant dense<0.000000e+00> : vector<128x512xf32>
    %6 = tpu.matmul %3, %5, %cst_6 {dimension_numbers = #tpu.dot_dimension_numbers<[1], [0], [0], [1], [0, 0, 1, 1], [], []>} : vector<128x128xbf16>, vector<128x512xbf16>, vector<128x512xf32> -> vector<128x512xf32>
    %c0_7 = arith.constant 0 : index
    %c0_8 = arith.constant 0 : index
    %7 = vector.load %arg4[%c0_7, %c0_8] : memref<1x1664xf32, #tpu.memory_space<vmem>>, vector<1x512xf32>
    %8 = vector.broadcast %7 : vector<1x512xf32> to vector<128x512xf32>
    %9 = arith.addf %6, %8 : vector<128x512xf32>
    %cst_9 = arith.constant 0.000000e+00 : f32
    %10 = vector.broadcast %cst_9 : f32 to vector<128x512xf32>
    %11 = arith.maximumf %9, %10 : vector<128x512xf32>
    %12 = arith.truncf %11 : vector<128x512xf32> to vector<128x512xbf16>
    %c0_10 = arith.constant 0 : index
    %c0_11 = arith.constant 0 : index
    %13 = vector.load %arg5[%c0_10, %c0_11] : memref<1664x512xbf16, #tpu.memory_space<vmem>>, vector<512x512xbf16>
    %cst_12 = arith.constant dense<0.000000e+00> : vector<128x512xf32>
    %14 = tpu.matmul %12, %13, %cst_12 {dimension_numbers = #tpu.dot_dimension_numbers<[1], [0], [0], [1], [0, 0, 1, 1], [], []>} : vector<128x512xbf16>, vector<512x512xbf16>, vector<128x512xf32> -> vector<128x512xf32>
    %15 = arith.addf %4, %14 : vector<128x512xf32>
    %c0_13 = arith.constant 0 : index
    %c512 = arith.constant 512 : index
    %16 = vector.load %arg3[%c0_13, %c512] : memref<128x1664xbf16, #tpu.memory_space<vmem>>, vector<128x512xbf16>
    %cst_14 = arith.constant dense<0.000000e+00> : vector<128x512xf32>
    %17 = tpu.matmul %3, %16, %cst_14 {dimension_numbers = #tpu.dot_dimension_numbers<[1], [0], [0], [1], [0, 0, 1, 1], [], []>} : vector<128x128xbf16>, vector<128x512xbf16>, vector<128x512xf32> -> vector<128x512xf32>
    %c0_15 = arith.constant 0 : index
    %c512_16 = arith.constant 512 : index
    %18 = vector.load %arg4[%c0_15, %c512_16] : memref<1x1664xf32, #tpu.memory_space<vmem>>, vector<1x512xf32>
    %19 = vector.broadcast %18 : vector<1x512xf32> to vector<128x512xf32>
    %20 = arith.addf %17, %19 : vector<128x512xf32>
    %cst_17 = arith.constant 0.000000e+00 : f32
    %21 = vector.broadcast %cst_17 : f32 to vector<128x512xf32>
    %22 = arith.maximumf %20, %21 : vector<128x512xf32>
    %23 = arith.truncf %22 : vector<128x512xf32> to vector<128x512xbf16>
    %c512_18 = arith.constant 512 : index
    %c0_19 = arith.constant 0 : index
    %24 = vector.load %arg5[%c512_18, %c0_19] : memref<1664x512xbf16, #tpu.memory_space<vmem>>, vector<512x512xbf16>
    %cst_20 = arith.constant dense<0.000000e+00> : vector<128x512xf32>
    %25 = tpu.matmul %23, %24, %cst_20 {dimension_numbers = #tpu.dot_dimension_numbers<[1], [0], [0], [1], [0, 0, 1, 1], [], []>} : vector<128x512xbf16>, vector<512x512xbf16>, vector<128x512xf32> -> vector<128x512xf32>
    %26 = arith.addf %15, %25 : vector<128x512xf32>
    %c0_21 = arith.constant 0 : index
    %c1024 = arith.constant 1024 : index
    %27 = vector.load %arg3[%c0_21, %c1024] : memref<128x1664xbf16, #tpu.memory_space<vmem>>, vector<128x640xbf16>
    %cst_22 = arith.constant dense<0.000000e+00> : vector<128x640xf32>
    %28 = tpu.matmul %3, %27, %cst_22 {dimension_numbers = #tpu.dot_dimension_numbers<[1], [0], [0], [1], [0, 0, 1, 1], [], []>} : vector<128x128xbf16>, vector<128x640xbf16>, vector<128x640xf32> -> vector<128x640xf32>
    %c0_23 = arith.constant 0 : index
    %c1024_24 = arith.constant 1024 : index
    %29 = vector.load %arg4[%c0_23, %c1024_24] : memref<1x1664xf32, #tpu.memory_space<vmem>>, vector<1x640xf32>
    %30 = vector.broadcast %29 : vector<1x640xf32> to vector<128x640xf32>
    %31 = arith.addf %28, %30 : vector<128x640xf32>
    %cst_25 = arith.constant 0.000000e+00 : f32
    %32 = vector.broadcast %cst_25 : f32 to vector<128x640xf32>
    %33 = arith.maximumf %31, %32 : vector<128x640xf32>
    %34 = arith.truncf %33 : vector<128x640xf32> to vector<128x640xbf16>
    %c1024_26 = arith.constant 1024 : index
    %c0_27 = arith.constant 0 : index
    %35 = vector.load %arg5[%c1024_26, %c0_27] : memref<1664x512xbf16, #tpu.memory_space<vmem>>, vector<640x512xbf16>
    %cst_28 = arith.constant dense<0.000000e+00> : vector<128x512xf32>
    %36 = tpu.matmul %34, %35, %cst_28 {dimension_numbers = #tpu.dot_dimension_numbers<[1], [0], [0], [1], [0, 0, 1, 1], [], []>} : vector<128x640xbf16>, vector<640x512xbf16>, vector<128x512xf32> -> vector<128x512xf32>
    %37 = arith.addf %26, %36 : vector<128x512xf32>
    %38 = arith.truncf %37 : vector<128x512xf32> to vector<128x512xbf16>
    %cst_29 = arith.constant dense<0.000000e+00> : vector<128x512xf32>
    %39 = tpu.matmul %0, %38, %cst_29 {dimension_numbers = #tpu.dot_dimension_numbers<[1], [0], [0], [1], [0, 0, 1, 1], [], []>} : vector<128x128xbf16>, vector<128x512xbf16>, vector<128x512xf32> -> vector<128x512xf32>
    %c0_30 = arith.constant 0 : index
    %c0_31 = arith.constant 0 : index
    %40 = vector.load %arg6[%c0_30, %c0_31] : memref<1x512xf32, #tpu.memory_space<vmem>>, vector<1x512xf32>
    %41 = vector.broadcast %40 : vector<1x512xf32> to vector<128x512xf32>
    %42 = arith.addf %39, %41 : vector<128x512xf32>
    %c0_32 = arith.constant 0 : index
    %c0_33 = arith.constant 0 : index
    %43 = vector.load %arg7[%c0_32, %c0_33] : memref<128x512xf32, #tpu.memory_space<vmem>>, vector<128x512xf32>
    tpu.vector_store %arg7[%c0_32, %c0_33], %42 {strides = array<i32>} : memref<128x512xf32, #tpu.memory_space<vmem>>, vector<128x512xf32>,
    return
  }
  func.func @transform_0(%arg0: i32) -> (i32, i32) {
    %c0_i32 = arith.constant 0 : i32
    %c0_i32_0 = arith.constant 0 : i32
    %c0_i32_1 = arith.constant 0 : i32
    return %c0_i32, %c0_i32_0 : i32, i32
  }
  func.func @transform_1(%arg0: i32) -> (i32, i32) {
    %c0_i32 = arith.constant 0 : i32
    %c0_i32_0 = arith.constant 0 : i32
    %c0_i32_1 = arith.constant 0 : i32
    return %c0_i32, %c0_i32_0 : i32, i32
  }
  func.func @transform_2(%arg0: i32) -> (i32, i32) {
    %c0_i32 = arith.constant 0 : i32
    %c0_i32_0 = arith.constant 0 : i32
    %c0_i32_1 = arith.constant 0 : i32
    return %c0_i32, %c0_i32_0 : i32, i32
  }
  func.func @transform_3(%arg0: i32) -> (i32, i32) {
    %c0_i32 = arith.constant 0 : i32
    %c0_i32_0 = arith.constant 0 : i32
    %c0_i32_1 = arith.constant 0 : i32
    return %c0_i32, %c0_i32_0 : i32, i32
  }
  func.func @transform_4(%arg0: i32) -> (i32, i32) {
    %c0_i32 = arith.constant 0 : i32
    %c0_i32_0 = arith.constant 0 : i32
    %c0_i32_1 = arith.constant 0 : i32
    return %c0_i32, %c0_i32_0 : i32, i32
  }
  func.func @transform_5(%arg0: i32) -> (i32, i32) {
    %c0_i32 = arith.constant 0 : i32
    %c0_i32_0 = arith.constant 0 : i32
    %c0_i32_1 = arith.constant 0 : i32
    return %c0_i32, %c0_i32_0 : i32, i32
  }
  func.func @transform_6(%arg0: i32) -> (i32, i32) {
    %c0_i32 = arith.constant 0 : i32
    %c0_i32_0 = arith.constant 0 : i32
    %c0_i32_1 = arith.constant 0 : i32
    return %c0_i32, %c0_i32_0 : i32, i32
  }
}

</mosaic_0001>

<llo_original>
// kernel: tpu_custom_call.1
$region0: #{tpu_custom_call.1}
  #allocation0 [shape = 'u32[]', space=smem, size = 0x4, offset = 0x4, fixed_abs, tag = 'smem constant byte address 0x4 - core index']
  #allocation1 [shape = 'u32[144,128]{1,0:T(1,128)}', space=vmem, size = 0x12000, scoped, tag = 'internal scratch']
  %s0 = inlined_call_operand.hbm [shape: bf16[128,128], index: 0, kind: input, shape index: {}]
  %s1 = inlined_call_operand.hbm [shape: bf16[128,128], index: 1, kind: input, shape index: {}]
  %s2 = inlined_call_operand.hbm [shape: bf16[128,1664], index: 2, kind: input, shape index: {}]
  %s3 = inlined_call_operand.hbm [shape: f32[1,1664], index: 3, kind: input, shape index: {}]
  %s4 = inlined_call_operand.hbm [shape: bf16[1664,512], index: 4, kind: input, shape index: {}]
  %s5 = inlined_call_operand.hbm [shape: f32[1,512], index: 5, kind: input, shape index: {}]
  %s6 = inlined_call_operand.hbm [shape: f32[128,512], index: 6, kind: output, shape index: {}]
  %s7 = sld [smem:[#allocation0]]
  $region58: #{tpu_custom_call.1} parent=0
    _
  %s9 = ssub.s32 1, %s7
  %s10 = scalar_select 0, %s9, %s7
  $region1: #{tpu_custom_call.1} parent=0
    #allocation2 [shape = 'u8[32768]{0}', space=vmem, size = 0x8000, scoped, tag = 'input window, operand 0, single buffered']
    #allocation3 [shape = 's32[1]{0}', space=sflag, size = 0x4, scoped, tag = 'scoped memory for tpu_custom_call.1']
    #allocation4 [shape = 's32[1]{0}', space=sflag, size = 0x4, scoped, tag = 'scoped memory for tpu_custom_call.1']
    #allocation5 [shape = 'u8[32768]{0}', space=vmem, size = 0x8000, scoped, tag = 'input window, operand 1, single buffered']
    #allocation6 [shape = 's32[1]{0}', space=sflag, size = 0x4, scoped, tag = 'scoped memory for tpu_custom_call.1']
    #allocation7 [shape = 'u8[425984]{0}', space=vmem, size = 0x68000, scoped, tag = 'input window, operand 2, single buffered']
    #allocation8 [shape = 'u8[6656]{0}', space=vmem, size = 0x1c00, scoped, tag = 'input window, operand 3, single buffered']
    #allocation9 [shape = 's32[1]{0}', space=sflag, size = 0x4, scoped, tag = 'scoped memory for tpu_custom_call.1']
    #allocation10 [shape = 'u8[1703936]{0}', space=vmem, size = 0x1a0000, scoped, tag = 'input window, operand 4, single buffered']
    #allocation11 [shape = 'u8[2048]{0}', space=vmem, size = 0x800, scoped, tag = 'input window, operand 5, single buffered']
    #allocation12 [shape = 's32[1]{0}', space=sflag, size = 0x4, scoped, tag = 'scoped memory for tpu_custom_call.1']
    #allocation13 [shape = 'u8[262144]{0}', space=vmem, size = 0x40000, scoped, tag = 'output window, operand 0, single buffered']
    %11 = vsyncpa [#allocation3], 0
    %12 = vsyncpa [#allocation6], 0
    %13 = vsyncpa [#allocation9], 0
    %14 = vsyncpa [#allocation12], 0
    %15 = vsyncpa [#allocation4], 0
    // Predicated region
    $region2: #{tpu_custom_call.1} parent=1 // pred_check
      _
    $region3: #{tpu_custom_call.1} parent=1 // pred_check_branch
      %17 = sbr.rel (0) target = $region5
    $region4: #{tpu_custom_call.1} parent=1 // pred_region
      %s19 = ssub.s32 1024, 1024
      %20 = vsyncadd [#allocation3], %s19
      %s21 = sshll.u32 [#allocation2], 4
      %s22 = int_to_ptr.vmem [resolvable:$true] %s21
      %27 = dma.hbm_to_vmem [thread:$0]  %s0, 1024, %s22, [#allocation3], 64, 64, 4
    $region5: #{tpu_custom_call.1} parent=1 // pred_fallthru
      _
    // Predicated region
    $region6: #{tpu_custom_call.1} parent=1 // pred_check
      _
    $region7: #{tpu_custom_call.1} parent=1 // pred_check_branch
      %29 = sbr.rel (0) target = $region9
    $region8: #{tpu_custom_call.1} parent=1 // pred_region
      %s31 = ssub.s32 1024, 1024
      %32 = vsyncadd [#allocation6], %s31
      %s33 = sshll.u32 [#allocation5], 4
      %s34 = int_to_ptr.vmem [resolvable:$true] %s33
      %39 = dma.hbm_to_vmem [thread:$0]  %s1, 1024, %s34, [#allocation6], 64, 64, 4
    $region9: #{tpu_custom_call.1} parent=1 // pred_fallthru
      _
    // Predicated region
    $region10: #{tpu_custom_call.1} parent=1 // pred_check
      _
    $region11: #{tpu_custom_call.1} parent=1 // pred_check_branch
      %41 = sbr.rel (0) target = $region13
    $region12: #{tpu_custom_call.1} parent=1 // pred_region
      %s43 = ssub.s32 13312, 13312
      %44 = vsyncadd [#allocation6], %s43
      %s45 = sshll.u32 [#allocation7], 4
      %s46 = int_to_ptr.vmem [resolvable:$true] %s45
      %51 = dma.hbm_to_vmem [thread:$0]  %s2, 13312, %s46, [#allocation6], 832, 832, 52
    $region13: #{tpu_custom_call.1} parent=1 // pred_fallthru
      _
    // Predicated region
    $region14: #{tpu_custom_call.1} parent=1 // pred_check
      _
    $region15: #{tpu_custom_call.1} parent=1 // pred_check_branch
      %53 = sbr.rel (0) target = $region17
    $region16: #{tpu_custom_call.1} parent=1 // pred_region
      %s55 = ssub.s32 208, 208
      %56 = vsyncadd [#allocation9], %s55
      %s58 = sshll.u32 [#allocation8], 4
      %s59 = int_to_ptr.vmem [resolvable:$true] %s58
      %61 = dma.hbm_to_vmem [thread:$0]  %s3, 208, %s59, [#allocation9]
    $region17: #{tpu_custom_call.1} parent=1 // pred_fallthru
      _
    // Predicated region
    $region18: #{tpu_custom_call.1} parent=1 // pred_check
      _
    $region19: #{tpu_custom_call.1} parent=1 // pred_check_branch
      %63 = sbr.rel (0) target = $region21
    $region20: #{tpu_custom_call.1} parent=1 // pred_region
      %s65 = ssub.s32 53248, 53248
      %66 = vsyncadd [#allocation9], %s65
      %s67 = sshll.u32 [#allocation10], 4
      %s68 = int_to_ptr.vmem [resolvable:$true] %s67
      %73 = dma.hbm_to_vmem [thread:$0]  %s4, 53248, %s68, [#allocation9], 256, 256, 16
    $region21: #{tpu_custom_call.1} parent=1 // pred_fallthru
      _
    // Predicated region
    $region22: #{tpu_custom_call.1} parent=1 // pred_check
      _
    $region23: #{tpu_custom_call.1} parent=1 // pred_check_branch
      %75 = sbr.rel (0) target = $region25
    $region24: #{tpu_custom_call.1} parent=1 // pred_region
      %s77 = ssub.s32 64, 64
      %78 = vsyncadd [#allocation12], %s77
      %s80 = sshll.u32 [#allocation11], 4
      %s81 = int_to_ptr.vmem [resolvable:$true] %s80
      %83 = dma.hbm_to_vmem [thread:$0]  %s5, 64, %s81, [#allocation12]
    $region25: #{tpu_custom_call.1} parent=1 // pred_fallthru
      _
    // Predicated region
    $region26: #{tpu_custom_call.1} parent=1 // pred_check
      _
    $region27: #{tpu_custom_call.1} parent=1 // pred_check_branch
      %85 = sbr.rel (0) target = $region29
    $region28: #{tpu_custom_call.1} parent=1 // pred_region
      %86 = dma.done [#allocation3], 1024
    $region29: #{tpu_custom_call.1} parent=1 // pred_fallthru
      _
    // Predicated region
    $region30: #{tpu_custom_call.1} parent=1 // pred_check
      _
    $region31: #{tpu_custom_call.1} parent=1 // pred_check_branch
      %88 = sbr.rel (0) target = $region33
    $region32: #{tpu_custom_call.1} parent=1 // pred_region
      %89 = dma.done [#allocation6], 1024
    $region33: #{tpu_custom_call.1} parent=1 // pred_fallthru
      _
    // Predicated region
    $region34: #{tpu_custom_call.1} parent=1 // pred_check
      _
    $region35: #{tpu_custom_call.1} parent=1 // pred_check_branch
      %91 = sbr.rel (0) target = $region37
    $region36: #{tpu_custom_call.1} parent=1 // pred_region
      %92 = dma.done [#allocation6], 13312
    $region37: #{tpu_custom_call.1} parent=1 // pred_fallthru
      _
    // Predicated region
    $region38: #{tpu_custom_call.1} parent=1 // pred_check
      _
    $region39: #{tpu_custom_call.1} parent=1 // pred_check_branch
      %94 = sbr.rel (0) target = $region41
    $region40: #{tpu_custom_call.1} parent=1 // pred_region
      %95 = dma.done [#allocation9], 208
    $region41: #{tpu_custom_call.1} parent=1 // pred_fallthru
      _
    // Predicated region
    $region42: #{tpu_custom_call.1} parent=1 // pred_check
      _
    $region43: #{tpu_custom_call.1} parent=1 // pred_check_branch
      %97 = sbr.rel (0) target = $region45
    $region44: #{tpu_custom_call.1} parent=1 // pred_region
      %98 = dma.done [#allocation9], 53248
    $region45: #{tpu_custom_call.1} parent=1 // pred_fallthru
      _
    // Predicated region
    $region46: #{tpu_custom_call.1} parent=1 // pred_check
      _
    $region47: #{tpu_custom_call.1} parent=1 // pred_check_branch
      %100 = sbr.rel (0) target = $region49
    $region48: #{tpu_custom_call.1} parent=1 // pred_region
      %101 = dma.done [#allocation12], 64
    $region49: #{tpu_custom_call.1} parent=1 // pred_fallthru
      _
    %v103 = vld [vmem:[#allocation2] sm:$0xf]
    %v104 = vld [vmem:[#allocation2 + $0x4] sm:$0xf]
    %v105 = vld [vmem:[#allocation2 + $0x8] sm:$0xf]
    %v106 = vld [vmem:[#allocation2 + $0xc] sm:$0xf]
    %v107 = vld [vmem:[#allocation2 + $0x10] sm:$0xf]
    %v108 = vld [vmem:[#allocation2 + $0x14] sm:$0xf]
    %v109 = vld [vmem:[#allocation2 + $0x18] sm:$0xf]
    %v110 = vld [vmem:[#allocation2 + $0x1c] sm:$0xf]
    %v111 = vld [vmem:[#allocation2 + $0x20] sm:$0xf]
    %v112 = vld [vmem:[#allocation2 + $0x24] sm:$0xf]
    %v113 = vld [vmem:[#allocation2 + $0x28] sm:$0xf]
    %v114 = vld [vmem:[#allocation2 + $0x2c] sm:$0xf]
    %v115 = vld [vmem:[#allocation2 + $0x30] sm:$0xf]
    %v116 = vld [vmem:[#allocation2 + $0x34] sm:$0xf]
    %v117 = vld [vmem:[#allocation2 + $0x38] sm:$0xf]
    %v118 = vld [vmem:[#allocation2 + $0x3c] sm:$0xf]
    %v119 = vld [vmem:[#allocation5] sm:$0xf]
    %v120 = vld [vmem:[#allocation5 + $0x4] sm:$0xf]
    %v121 = vld [vmem:[#allocation5 + $0x8] sm:$0xf]
    %v122 = vld [vmem:[#allocation5 + $0xc] sm:$0xf]
    %v123 = vld [vmem:[#allocation5 + $0x10] sm:$0xf]
    %v124 = vld [vmem:[#allocation5 + $0x14] sm:$0xf]
    %v125 = vld [vmem:[#allocation5 + $0x18] sm:$0xf]
    %v126 = vld [vmem:[#allocation5 + $0x1c] sm:$0xf]
    %v127 = vld [vmem:[#allocation5 + $0x20] sm:$0xf]
    %v128 = vld [vmem:[#allocation5 + $0x24] sm:$0xf]
    %v129 = vld [vmem:[#allocation5 + $0x28] sm:$0xf]
    %v130 = vld [vmem:[#allocation5 + $0x2c] sm:$0xf]
    %v131 = vld [vmem:[#allocation5 + $0x30] sm:$0xf]
    %v132 = vld [vmem:[#allocation5 + $0x34] sm:$0xf]
    %v133 = vld [vmem:[#allocation5 + $0x38] sm:$0xf]
    %v134 = vld [vmem:[#allocation5 + $0x3c] sm:$0xf]
    %v151 = vunpack.c.l.b16 %v103
    %v152 = vunpack.c.l.b16 %v104
    %v153 = vunpack.c.l.b16 %v105
    %v154 = vunpack.c.l.b16 %v106
    %v155 = vunpack.c.l.b16 %v107
    %v156 = vunpack.c.l.b16 %v108
    %v157 = vunpack.c.l.b16 %v109
    %v158 = vunpack.c.l.b16 %v110
    %v159 = vunpack.c.l.b16 %v111
    %v160 = vunpack.c.l.b16 %v112
    %v161 = vunpack.c.l.b16 %v113
    %v162 = vunpack.c.l.b16 %v114
    %v163 = vunpack.c.l.b16 %v115
    %v164 = vunpack.c.l.b16 %v116
    %v165 = vunpack.c.l.b16 %v117
    %v166 = vunpack.c.l.b16 %v118
    %v167 = vpack.c.b16 %v152, %v151
    %v168 = vpack.c.b16 %v154, %v153
    %v169 = vpack.c.b16 %v156, %v155
    %v170 = vpack.c.b16 %v158, %v157
    %v171 = vpack.c.b16 %v160, %v159
    %v172 = vpack.c.b16 %v162, %v161
    %v173 = vpack.c.b16 %v164, %v163
    %v174 = vpack.c.b16 %v166, %v165
    %v199 = vunpack.c.l.b16 %v119
    %v200 = vunpack.c.l.b16 %v120
    %v201 = vunpack.c.l.b16 %v121
    %v202 = vunpack.c.l.b16 %v122
    %v203 = vunpack.c.l.b16 %v123
    %v204 = vunpack.c.l.b16 %v124
    %v205 = vunpack.c.l.b16 %v125
    %v206 = vunpack.c.l.b16 %v126
    %v207 = vunpack.c.l.b16 %v127
    %v208 = vunpack.c.l.b16 %v128
    %v209 = vunpack.c.l.b16 %v129
    %v210 = vunpack.c.l.b16 %v130
    %v211 = vunpack.c.l.b16 %v131
    %v212 = vunpack.c.l.b16 %v132
    %v213 = vunpack.c.l.b16 %v133
    %v214 = vunpack.c.l.b16 %v134
    %v215 = vpack.c.b16 %v200, %v199
    %v216 = vpack.c.b16 %v202, %v201
    %v217 = vpack.c.b16 %v204, %v203
    %v218 = vpack.c.b16 %v206, %v205
    %v219 = vpack.c.b16 %v208, %v207
    %v220 = vpack.c.b16 %v210, %v209
    %v221 = vpack.c.b16 %v212, %v211
    %v222 = vpack.c.b16 %v214, %v213
    %231 = vmatprep.subr.bf16.mxu0 0
    %232 = vmatpush1.bf16.msra.mxu0 %v215
    %233 = vmatprep.subr.bf16.mxu0 0
    %234 = vmatpush1.bf16.msra.mxu0 %v216
    %235 = vmatprep.subr.bf16.mxu0 0
    %236 = vmatpush1.bf16.msra.mxu0 %v217
    %237 = vmatprep.subr.bf16.mxu0 0
    %238 = vmatpush1.bf16.msra.mxu0 %v218
    %239 = vmatprep.subr.bf16.mxu0 0
    %240 = vmatpush1.bf16.msra.mxu0 %v219
    %241 = vmatprep.subr.bf16.mxu0 0
    %242 = vmatpush1.bf16.msra.mxu0 %v220
    %243 = vmatprep.subr.bf16.mxu0 0
    %244 = vmatpush1.bf16.msra.mxu0 %v221
    %245 = vmatprep.subr.bf16.mxu0 0
    %246 = vmatpush1.bf16.msra.mxu0 %v222
    %247 = vmatprep.subr.bf16.mxu0 0
    %248 = vmatpush1.bf16.msra.mxu0 0
    %249 = vmatprep.subr.bf16.mxu0 0
    %250 = vmatpush1.bf16.msra.mxu0 0
    %251 = vmatprep.subr.bf16.mxu0 0
    %252 = vmatpush1.bf16.msra.mxu0 0
    %253 = vmatprep.subr.bf16.mxu0 0
    %254 = vmatpush1.bf16.msra.mxu0 0
    %255 = vmatprep.subr.bf16.mxu0 0
    %256 = vmatpush1.bf16.msra.mxu0 0
    %257 = vmatprep.subr.bf16.mxu0 0
    %258 = vmatpush1.bf16.msra.mxu0 0
    %259 = vmatprep.subr.bf16.mxu0 0
    %260 = vmatpush1.bf16.msra.mxu0 0
    %261 = vmatprep.subr.bf16.mxu0 0
    %262 = vmatpush1.bf16.msra.mxu0 0
    %263 = vmatprep.mubr.bf16.mxu0 0
    %264 = vmatmul.mubr.bf16.gmra.mrb[0].mxu0 %v167
    %v265 = vpop.f32.mrb[0].mxu0
    %v266 = vadd.f32 0.0, %v265
    %v267 = vpop.f32.mrb[0].mxu0
    %v268 = vpop.f32.mrb[0].mxu0
    %v269 = vadd.f32 0.0, %v268
    %v270 = vpop.f32.mrb[0].mxu0
    %271 = vmatprep.mubr.bf16.mxu0 0
    %272 = vmatmul.mubr.bf16.gmra.mrb[0].mxu0 %v168
    %v273 = vpop.f32.mrb[0].mxu0
    %v274 = vadd.f32 0.0, %v273
    %v275 = vpop.f32.mrb[0].mxu0
    %v276 = vpop.f32.mrb[0].mxu0
    %v277 = vadd.f32 0.0, %v276
    %v278 = vpop.f32.mrb[0].mxu0
    %279 = vmatprep.mubr.bf16.mxu0 0
    %280 = vmatmul.mubr.bf16.gmra.mrb[0].mxu0 %v169
    %v281 = vpop.f32.mrb[0].mxu0
    %v282 = vadd.f32 0.0, %v281
    %v283 = vpop.f32.mrb[0].mxu0
    %v284 = vpop.f32.mrb[0].mxu0
    %v285 = vadd.f32 0.0, %v284
    %v286 = vpop.f32.mrb[0].mxu0
    %287 = vmatprep.mubr.bf16.mxu0 0
    %288 = vmatmul.mubr.bf16.gmra.mrb[0].mxu0 %v170
    %v289 = vpop.f32.mrb[0].mxu0
    %v290 = vadd.f32 0.0, %v289
    %v291 = vpop.f32.mrb[0].mxu0
    %v292 = vpop.f32.mrb[0].mxu0
    %v293 = vadd.f32 0.0, %v292
    %v294 = vpop.f32.mrb[0].mxu0
    %295 = vmatprep.mubr.bf16.mxu0 0
    %296 = vmatmul.mubr.bf16.gmra.mrb[0].mxu0 %v171
    %v297 = vpop.f32.mrb[0].mxu0
    %v298 = vadd.f32 0.0, %v297
    %v299 = vpop.f32.mrb[0].mxu0
    %v300 = vpop.f32.mrb[0].mxu0
    %v301 = vadd.f32 0.0, %v300
    %v302 = vpop.f32.mrb[0].mxu0
    %303 = vmatprep.mubr.bf16.mxu0 0
    %304 = vmatmul.mubr.bf16.gmra.mrb[0].mxu0 %v172
    %v305 = vpop.f32.mrb[0].mxu0
    %v306 = vadd.f32 0.0, %v305
    %v307 = vpop.f32.mrb[0].mxu0
    %v308 = vpop.f32.mrb[0].mxu0
    %v309 = vadd.f32 0.0, %v308
    %v310 = vpop.f32.mrb[0].mxu0
    %311 = vmatprep.mubr.bf16.mxu0 0
    %312 = vmatmul.mubr.bf16.gmra.mrb[0].mxu0 %v173
    %v313 = vpop.f32.mrb[0].mxu0
    %v314 = vadd.f32 0.0, %v313
    %v315 = vpop.f32.mrb[0].mxu0
    %v316 = vpop.f32.mrb[0].mxu0
    %v317 = vadd.f32 0.0, %v316
    %v318 = vpop.f32.mrb[0].mxu0
    %319 = vmatprep.mubr.bf16.mxu0 0
    %320 = vmatmul.mubr.bf16.gmra.mrb[0].mxu0 %v174
    %v321 = vpop.f32.mrb[0].mxu0
    %v322 = vadd.f32 0.0, %v321
    %v323 = vpop.f32.mrb[0].mxu0
    %v324 = vpop.f32.mrb[0].mxu0
    %v325 = vadd.f32 0.0, %v324
    %v326 = vpop.f32.mrb[0].mxu0
    %327 = vdwg.mxu0
    %v328 = vpack.c.bf16 %v269, %v266
    %v329 = vpack.c.bf16 %v277, %v274
    %v330 = vpack.c.bf16 %v285, %v282
    %v331 = vpack.c.bf16 %v293, %v290
    %v332 = vpack.c.bf16 %v301, %v298
    %v333 = vpack.c.bf16 %v309, %v306
    %v334 = vpack.c.bf16 %v317, %v314
    %v335 = vpack.c.bf16 %v325, %v322
    %v336 = vld [vmem:[#allocation7] sm:$0xff]
    %v337 = vld [vmem:[#allocation7 + $0x8] sm:$0xff]
    %v338 = vld [vmem:[#allocation7 + $0x34] sm:$0xff]
    %v339 = vld [vmem:[#allocation7 + $0x3c] sm:$0xff]
    %v340 = vld [vmem:[#allocation7 + $0x68] sm:$0xff]
    %v341 = vld [vmem:[#allocation7 + $0x70] sm:$0xff]
    %v342 = vld [vmem:[#allocation7 + $0x9c] sm:$0xff]
    %v343 = vld [vmem:[#allocation7 + $0xa4] sm:$0xff]
    %v344 = vld [vmem:[#allocation7 + $0xd0] sm:$0xff]
    %v345 = vld [vmem:[#allocation7 + $0xd8] sm:$0xff]
    %v346 = vld [vmem:[#allocation7 + $0x104] sm:$0xff]
    %v347 = vld [vmem:[#allocation7 + $0x10c] sm:$0xff]
    %v348 = vld [vmem:[#allocation7 + $0x138] sm:$0xff]
    %v349 = vld [vmem:[#allocation7 + $0x140] sm:$0xff]
    %v350 = vld [vmem:[#allocation7 + $0x16c] sm:$0xff]
    %v351 = vld [vmem:[#allocation7 + $0x174] sm:$0xff]
    %v352 = vld [vmem:[#allocation7 + $0x1a0] sm:$0xff]
    %v353 = vld [vmem:[#allocation7 + $0x1a8] sm:$0xff]
    %v354 = vld [vmem:[#allocation7 + $0x1d4] sm:$0xff]
    %v355 = vld [vmem:[#allocation7 + $0x1dc] sm:$0xff]
    %v356 = vld [vmem:[#allocation7 + $0x208] sm:$0xff]
    %v357 = vld [vmem:[#allocation7 + $0x210] sm:$0xff]
    %v358 = vld [vmem:[#allocation7 + $0x23c] sm:$0xff]
    %v359 = vld [vmem:[#allocation7 + $0x244] sm:$0xff]
    %v360 = vld [vmem:[#allocation7 + $0x270] sm:$0xff]
    %v361 = vld [vmem:[#allocation7 + $0x278] sm:$0xff]
    %v362 = vld [vmem:[#allocation7 + $0x2a4] sm:$0xff]
    %v363 = vld [vmem:[#allocation7 + $0x2ac] sm:$0xff]
    %v364 = vld [vmem:[#allocation7 + $0x2d8] sm:$0xff]
    %v365 = vld [vmem:[#allocation7 + $0x2e0] sm:$0xff]
    %v366 = vld [vmem:[#allocation7 + $0x30c] sm:$0xff]
    %v367 = vld [vmem:[#allocation7 + $0x314] sm:$0xff]
    %v368 = vld [vmem:[#allocation8] sm:$0xf]
    %v370 = vlaneseq
    %v371 = vshrl.u32 %v370, 7
    %v372 = vsub.s32 0, %v371
    %v373 = vrot.slane %v368, %v372
    %v374 = vlaneseq
    %v375 = vshrl.u32 %v374, 7
    %v376 = vsub.s32 1, %v375
    %v377 = vrot.slane %v368, %v376
    %v378 = vlaneseq
    %v379 = vshrl.u32 %v378, 7
    %v380 = vsub.s32 2, %v379
    %v381 = vrot.slane %v368, %v380
    %v382 = vlaneseq
    %v383 = vshrl.u32 %v382, 7
    %v384 = vsub.s32 3, %v383
    %v385 = vrot.slane %v368, %v384
    %v422 = vunpack.c.l.b16 %v336
    %v423 = vunpack.c.h.b16 %v336
    %v424 = vunpack.c.l.b16 %v337
    %v425 = vunpack.c.h.b16 %v337
    %v426 = vunpack.c.l.b16 %v338
    %v427 = vunpack.c.h.b16 %v338
    %v428 = vunpack.c.l.b16 %v339
    %v429 = vunpack.c.h.b16 %v339
    %v430 = vunpack.c.l.b16 %v340
    %v431 = vunpack.c.h.b16 %v340
    %v432 = vunpack.c.l.b16 %v341
    %v433 = vunpack.c.h.b16 %v341
    %v434 = vunpack.c.l.b16 %v342
    %v435 = vunpack.c.h.b16 %v342
    %v436 = vunpack.c.l.b16 %v343
    %v437 = vunpack.c.h.b16 %v343
    %v438 = vunpack.c.l.b16 %v344
    %v439 = vunpack.c.h.b16 %v344
    %v440 = vunpack.c.l.b16 %v345
    %v441 = vunpack.c.h.b16 %v345
    %v442 = vunpack.c.l.b16 %v346
    %v443 = vunpack.c.h.b16 %v346
    %v444 = vunpack.c.l.b16 %v347
    %v445 = vunpack.c.h.b16 %v347
    %v446 = vunpack.c.l.b16 %v348
    %v447 = vunpack.c.h.b16 %v348
    %v448 = vunpack.c.l.b16 %v349
    %v449 = vunpack.c.h.b16 %v349
    %v450 = vunpack.c.l.b16 %v350
    %v451 = vunpack.c.h.b16 %v350
    %v452 = vunpack.c.l.b16 %v351
    %v453 = vunpack.c.h.b16 %v351
    %v454 = vunpack.c.l.b16 %v352
    %v455 = vunpack.c.h.b16 %v352
    %v456 = vunpack.c.l.b16 %v353
    %v457 = vunpack.c.h.b16 %v353
    %v458 = vunpack.c.l.b16 %v354
    %v459 = vunpack.c.h.b16 %v354
    %v460 = vunpack.c.l.b16 %v355
    %v461 = vunpack.c.h.b16 %v355
    %v462 = vunpack.c.l.b16 %v356
    %v463 = vunpack.c.h.b16 %v356
    %v464 = vunpack.c.l.b16 %v357
    %v465 = vunpack.c.h.b16 %v357
    %v466 = vunpack.c.l.b16 %v358
    %v467 = vunpack.c.h.b16 %v358
    %v468 = vunpack.c.l.b16 %v359
    %v469 = vunpack.c.h.b16 %v359
    %v470 = vunpack.c.l.b16 %v360
    %v471 = vunpack.c.h.b16 %v360
    %v472 = vunpack.c.l.b16 %v361
    %v473 = vunpack.c.h.b16 %v361
    %v474 = vunpack.c.l.b16 %v362
    %v475 = vunpack.c.h.b16 %v362
    %v476 = vunpack.c.l.b16 %v363
    %v477 = vunpack.c.h.b16 %v363
    %v478 = vunpack.c.l.b16 %v364
    %v479 = vunpack.c.h.b16 %v364
    %v480 = vunpack.c.l.b16 %v365
    %v481 = vunpack.c.h.b16 %v365
    %v482 = vunpack.c.l.b16 %v366
    %v483 = vunpack.c.h.b16 %v366
    %v484 = vunpack.c.l.b16 %v367
    %v485 = vunpack.c.h.b16 %v367
    %v486 = vpack.c.b16 %v426, %v422
    %v487 = vpack.c.b16 %v427, %v423
    %v488 = vpack.c.b16 %v428, %v424
    %v489 = vpack.c.b16 %v429, %v425
    %v490 = vpack.c.b16 %v434, %v430
    %v491 = vpack.c.b16 %v435, %v431
    %v492 = vpack.c.b16 %v436, %v432
    %v493 = vpack.c.b16 %v437, %v433
    %v494 = vpack.c.b16 %v442, %v438
    %v495 = vpack.c.b16 %v443, %v439
    %v496 = vpack.c.b16 %v444, %v440
    %v497 = vpack.c.b16 %v445, %v441
    %v498 = vpack.c.b16 %v450, %v446
    %v499 = vpack.c.b16 %v451, %v447
    %v500 = vpack.c.b16 %v452, %v448
    %v501 = vpack.c.b16 %v453, %v449
    %v502 = vpack.c.b16 %v458, %v454
    %v503 = vpack.c.b16 %v459, %v455
    %v504 = vpack.c.b16 %v460, %v456
    %v505 = vpack.c.b16 %v461, %v457
    %v506 = vpack.c.b16 %v466, %v462
    %v507 = vpack.c.b16 %v467, %v463
    %v508 = vpack.c.b16 %v468, %v464
    %v509 = vpack.c.b16 %v469, %v465
    %v510 = vpack.c.b16 %v474, %v470
    %v511 = vpack.c.b16 %v475, %v471
    %v512 = vpack.c.b16 %v476, %v472
    %v513 = vpack.c.b16 %v477, %v473
    %v514 = vpack.c.b16 %v482, %v478
    %v515 = vpack.c.b16 %v483, %v479
    %v516 = vpack.c.b16 %v484, %v480
    %v517 = vpack.c.b16 %v485, %v481
    %550 = vmatprep.subr.bf16.mxu0 %v487
    %551 = vmatpush1.bf16.msra.mxu0 %v486
    %552 = vmatprep.subr.bf16.mxu0 %v491
    %553 = vmatpush1.bf16.msra.mxu0 %v490
    %554 = vmatprep.subr.bf16.mxu0 %v495
    %555 = vmatpush1.bf16.msra.mxu0 %v494
    %556 = vmatprep.subr.bf16.mxu0 %v499
    %557 = vmatpush1.bf16.msra.mxu0 %v498
    %558 = vmatprep.subr.bf16.mxu0 %v503
    %559 = vmatpush1.bf16.msra.mxu0 %v502
    %560 = vmatprep.subr.bf16.mxu0 %v507
    %561 = vmatpush1.bf16.msra.mxu0 %v506
    %562 = vmatprep.subr.bf16.mxu0 %v511
    %563 = vmatpush1.bf16.msra.mxu0 %v510
    %564 = vmatprep.subr.bf16.mxu0 %v515
    %565 = vmatpush1.bf16.msra.mxu0 %v514
    %566 = vmatprep.subr.bf16.mxu0 0
    %567 = vmatpush1.bf16.msra.mxu0 0
    %568 = vmatprep.subr.bf16.mxu0 0
    %569 = vmatpush1.bf16.msra.mxu0 0
    %570 = vmatprep.subr.bf16.mxu0 0
    %571 = vmatpush1.bf16.msra.mxu0 0
    %572 = vmatprep.subr.bf16.mxu0 0
    %573 = vmatpush1.bf16.msra.mxu0 0
    %574 = vmatprep.subr.bf16.mxu0 0
    %575 = vmatpush1.bf16.msra.mxu0 0
    %576 = vmatprep.subr.bf16.mxu0 0
    %577 = vmatpush1.bf16.msra.mxu0 0
    %578 = vmatprep.subr.bf16.mxu0 0
    %579 = vmatpush1.bf16.msra.mxu0 0
    %580 = vmatprep.subr.bf16.mxu0 0
    %581 = vmatpush1.bf16.msra.mxu0 0
    %582 = vmatprep.mubr.bf16.mxu0 0
    %583 = vmatmul.mubr.bf16.gmra.mrb[0].mxu0 %v328
    %v584 = vpop.f32.mrb[0].mxu0
    %v585 = vadd.f32 %v373, %v584
    %v586 = vpop.f32.mrb[0].mxu0
    %v587 = vadd.f32 %v377, %v586
    %v588 = vpop.f32.mrb[0].mxu0
    %v589 = vadd.f32 %v373, %v588
    %v590 = vpop.f32.mrb[0].mxu0
    %v591 = vadd.f32 %v377, %v590
    %592 = vmatprep.mubr.bf16.mxu0 0
    %593 = vmatmul.mubr.bf16.gmra.mrb[0].mxu0 %v329
    %v594 = vpop.f32.mrb[0].mxu0
    %v595 = vadd.f32 %v373, %v594
    %v596 = vpop.f32.mrb[0].mxu0
    %v597 = vadd.f32 %v377, %v596
    %v598 = vpop.f32.mrb[0].mxu0
    %v599 = vadd.f32 %v373, %v598
    %v600 = vpop.f32.mrb[0].mxu0
    %v601 = vadd.f32 %v377, %v600
    %602 = vmatprep.mubr.bf16.mxu0 0
    %603 = vmatmul.mubr.bf16.gmra.mrb[0].mxu0 %v330
    %v604 = vpop.f32.mrb[0].mxu0
    %v605 = vadd.f32 %v373, %v604
    %v606 = vpop.f32.mrb[0].mxu0
    %v607 = vadd.f32 %v377, %v606
    %v608 = vpop.f32.mrb[0].mxu0
    %v609 = vadd.f32 %v373, %v608
    %v610 = vpop.f32.mrb[0].mxu0
    %v611 = vadd.f32 %v377, %v610
    %612 = vmatprep.mubr.bf16.mxu0 0
    %613 = vmatmul.mubr.bf16.gmra.mrb[0].mxu0 %v331
    %v614 = vpop.f32.mrb[0].mxu0
    %v615 = vadd.f32 %v373, %v614
    %v616 = vpop.f32.mrb[0].mxu0
    %v617 = vadd.f32 %v377, %v616
    %v618 = vpop.f32.mrb[0].mxu0
    %v619 = vadd.f32 %v373, %v618
    %v620 = vpop.f32.mrb[0].mxu0
    %v621 = vadd.f32 %v377, %v620
    %622 = vmatprep.mubr.bf16.mxu0 0
    %623 = vmatmul.mubr.bf16.gmra.mrb[0].mxu0 %v332
    %v624 = vpop.f32.mrb[0].mxu0
    %v625 = vadd.f32 %v373, %v624
    %v626 = vpop.f32.mrb[0].mxu0
    %v627 = vadd.f32 %v377, %v626
    %v628 = vpop.f32.mrb[0].mxu0
    %v629 = vadd.f32 %v373, %v628
    %v630 = vpop.f32.mrb[0].mxu0
    %v631 = vadd.f32 %v377, %v630
    %632 = vmatprep.mubr.bf16.mxu0 0
    %633 = vmatmul.mubr.bf16.gmra.mrb[0].mxu0 %v333
    %v634 = vpop.f32.mrb[0].mxu0
    %v635 = vadd.f32 %v373, %v634
    %v636 = vpop.f32.mrb[0].mxu0
    %v637 = vadd.f32 %v377, %v636
    %v638 = vpop.f32.mrb[0].mxu0
    %v639 = vadd.f32 %v373, %v638
    %v640 = vpop.f32.mrb[0].mxu0
    %v641 = vadd.f32 %v377, %v640
    %642 = vmatprep.mubr.bf16.mxu0 0
    %643 = vmatmul.mubr.bf16.gmra.mrb[0].mxu0 %v334
    %v644 = vpop.f32.mrb[0].mxu0
    %v645 = vadd.f32 %v373, %v644
    %v646 = vpop.f32.mrb[0].mxu0
    %v647 = vadd.f32 %v377, %v646
    %v648 = vpop.f32.mrb[0].mxu0
    %v649 = vadd.f32 %v373, %v648
    %v650 = vpop.f32.mrb[0].mxu0
    %v651 = vadd.f32 %v377, %v650
    %652 = vmatprep.mubr.bf16.mxu0 0
    %653 = vmatmul.mubr.bf16.gmra.mrb[0].mxu0 %v335
    %v654 = vpop.f32.mrb[0].mxu0
    %v655 = vadd.f32 %v373, %v654
    %v656 = vpop.f32.mrb[0].mxu0
    %v657 = vadd.f32 %v377, %v656
    %v658 = vpop.f32.mrb[0].mxu0
    %v659 = vadd.f32 %v373, %v658
    %v660 = vpop.f32.mrb[0].mxu0
    %v661 = vadd.f32 %v377, %v660
    %662 = vdwg.mxu0
    %663 = vmatprep.subr.bf16.mxu0 %v489
    %664 = vmatpush1.bf16.msra.mxu0 %v488
    %665 = vmatprep.subr.bf16.mxu0 %v493
    %666 = vmatpush1.bf16.msra.mxu0 %v492
    %667 = vmatprep.subr.bf16.mxu0 %v497
    %668 = vmatpush1.bf16.msra.mxu0 %v496
    %669 = vmatprep.subr.bf16.mxu0 %v501
    %670 = vmatpush1.bf16.msra.mxu0 %v500
    %671 = vmatprep.subr.bf16.mxu0 %v505
    %672 = vmatpush1.bf16.msra.mxu0 %v504
    %673 = vmatprep.subr.bf16.mxu0 %v509
    %674 = vmatpush1.bf16.msra.mxu0 %v508
    %675 = vmatprep.subr.bf16.mxu0 %v513
    %676 = vmatpush1.bf16.msra.mxu0 %v512
    %677 = vmatprep.subr.bf16.mxu0 %v517
    %678 = vmatpush1.bf16.msra.mxu0 %v516
    %679 = vmatprep.subr.bf16.mxu0 0
    %680 = vmatpush1.bf16.msra.mxu0 0
    %681 = vmatprep.subr.bf16.mxu0 0
    %682 = vmatpush1.bf16.msra.mxu0 0
    %683 = vmatprep.subr.bf16.mxu0 0
    %684 = vmatpush1.bf16.msra.mxu0 0
    %685 = vmatprep.subr.bf16.mxu0 0
    %686 = vmatpush1.bf16.msra.mxu0 0
    %687 = vmatprep.subr.bf16.mxu0 0
    %688 = vmatpush1.bf16.msra.mxu0 0
    %689 = vmatprep.subr.bf16.mxu0 0
    %690 = vmatpush1.bf16.msra.mxu0 0
    %691 = vmatprep.subr.bf16.mxu0 0
    %692 = vmatpush1.bf16.msra.mxu0 0
    %693 = vmatprep.subr.bf16.mxu0 0
    %694 = vmatpush1.bf16.msra.mxu0 0
    %695 = vmatprep.mubr.bf16.mxu0 0
    %696 = vmatmul.mubr.bf16.gmra.mrb[0].mxu0 %v328
    %v697 = vpop.f32.mrb[0].mxu0
    %v698 = vadd.f32 %v381, %v697
    %v699 = vpop.f32.mrb[0].mxu0
    %v700 = vadd.f32 %v385, %v699
    %v701 = vpop.f32.mrb[0].mxu0
    %v702 = vadd.f32 %v381, %v701
    %v703 = vpop.f32.mrb[0].mxu0
    %v704 = vadd.f32 %v385, %v703
    %705 = vmatprep.mubr.bf16.mxu0 0
    %706 = vmatmul.mubr.bf16.gmra.mrb[0].mxu0 %v329
    %v707 = vpop.f32.mrb[0].mxu0
    %v708 = vadd.f32 %v381, %v707
    %v709 = vpop.f32.mrb[0].mxu0
    %v710 = vadd.f32 %v385, %v709
    %v711 = vpop.f32.mrb[0].mxu0
    %v712 = vadd.f32 %v381, %v711
    %v713 = vpop.f32.mrb[0].mxu0
    %v714 = vadd.f32 %v385, %v713
    %715 = vmatprep.mubr.bf16.mxu0 0
    %716 = vmatmul.mubr.bf16.gmra.mrb[0].mxu0 %v330
    %v717 = vpop.f32.mrb[0].mxu0
    %v718 = vadd.f32 %v381, %v717
    %v719 = vpop.f32.mrb[0].mxu0
    %v720 = vadd.f32 %v385, %v719
    %v721 = vpop.f32.mrb[0].mxu0
    %v722 = vadd.f32 %v381, %v721
    %v723 = vpop.f32.mrb[0].mxu0
    %v724 = vadd.f32 %v385, %v723
    %725 = vmatprep.mubr.bf16.mxu0 0
    %726 = vmatmul.mubr.bf16.gmra.mrb[0].mxu0 %v331
    %v727 = vpop.f32.mrb[0].mxu0
    %v728 = vadd.f32 %v381, %v727
    %v729 = vpop.f32.mrb[0].mxu0
    %v730 = vadd.f32 %v385, %v729
    %v731 = vpop.f32.mrb[0].mxu0
    %v732 = vadd.f32 %v381, %v731
    %v733 = vpop.f32.mrb[0].mxu0
    %v734 = vadd.f32 %v385, %v733
    %735 = vmatprep.mubr.bf16.mxu0 0
    %736 = vmatmul.mubr.bf16.gmra.mrb[0].mxu0 %v332
    %v737 = vpop.f32.mrb[0].mxu0
    %v738 = vadd.f32 %v381, %v737
    %v739 = vpop.f32.mrb[0].mxu0
    %v740 = vadd.f32 %v385, %v739
    %v741 = vpop.f32.mrb[0].mxu0
    %v742 = vadd.f32 %v381, %v741
    %v743 = vpop.f32.mrb[0].mxu0
    %v744 = vadd.f32 %v385, %v743
    %745 = vmatprep.mubr.bf16.mxu0 0
    %746 = vmatmul.mubr.bf16.gmra.mrb[0].mxu0 %v333
    %v747 = vpop.f32.mrb[0].mxu0
    %v748 = vadd.f32 %v381, %v747
    %v749 = vpop.f32.mrb[0].mxu0
    %v750 = vadd.f32 %v385, %v749
    %v751 = vpop.f32.mrb[0].mxu0
    %v752 = vadd.f32 %v381, %v751
    %v753 = vpop.f32.mrb[0].mxu0
    %v754 = vadd.f32 %v385, %v753
    %755 = vmatprep.mubr.bf16.mxu0 0
    %756 = vmatmul.mubr.bf16.gmra.mrb[0].mxu0 %v334
    %v757 = vpop.f32.mrb[0].mxu0
    %v758 = vadd.f32 %v381, %v757
    %v759 = vpop.f32.mrb[0].mxu0
    %v760 = vadd.f32 %v385, %v759
    %v761 = vpop.f32.mrb[0].mxu0
    %v762 = vadd.f32 %v381, %v761
    %v763 = vpop.f32.mrb[0].mxu0
    %v764 = vadd.f32 %v385, %v763
    %765 = vmatprep.mubr.bf16.mxu0 0
    %766 = vmatmul.mubr.bf16.gmra.mrb[0].mxu0 %v335
    %v767 = vpop.f32.mrb[0].mxu0
    %v768 = vadd.f32 %v381, %v767
    %v769 = vpop.f32.mrb[0].mxu0
    %v770 = vadd.f32 %v385, %v769
    %v771 = vpop.f32.mrb[0].mxu0
    %v772 = vadd.f32 %v381, %v771
    %v773 = vpop.f32.mrb[0].mxu0
    %v774 = vadd.f32 %v385, %v773
    %775 = vdwg.mxu0
    %v776 = vmax.f32 %v585, 0.0
    %v777 = vmax.f32 %v587, 0.0
    %v778 = vmax.f32 %v698, 0.0
    %v779 = vmax.f32 %v700, 0.0
    %v780 = vmax.f32 %v589, 0.0
    %v781 = vmax.f32 %v591, 0.0
    %v782 = vmax.f32 %v702, 0.0
    %v783 = vmax.f32 %v704, 0.0
    %v784 = vmax.f32 %v595, 0.0
    %v785 = vmax.f32 %v597, 0.0
    %v786 = vmax.f32 %v708, 0.0
    %v787 = vmax.f32 %v710, 0.0
    %v788 = vmax.f32 %v599, 0.0
    %v789 = vmax.f32 %v601, 0.0
    %v790 = vmax.f32 %v712, 0.0
    %v791 = vmax.f32 %v714, 0.0
    %v792 = vmax.f32 %v605, 0.0
    %v793 = vmax.f32 %v607, 0.0
    %v794 = vmax.f32 %v718, 0.0
    %v795 = vmax.f32 %v720, 0.0
    %v796 = vmax.f32 %v609, 0.0
    %v797 = vmax.f32 %v611, 0.0
    %v798 = vmax.f32 %v722, 0.0
    %v799 = vmax.f32 %v724, 0.0
    %v800 = vmax.f32 %v615, 0.0
    %v801 = vmax.f32 %v617, 0.0
    %v802 = vmax.f32 %v728, 0.0
    %v803 = vmax.f32 %v730, 0.0
    %v804 = vmax.f32 %v619, 0.0
    %v805 = vmax.f32 %v621, 0.0
    %v806 = vmax.f32 %v732, 0.0
    %v807 = vmax.f32 %v734, 0.0
    %v808 = vmax.f32 %v625, 0.0
    %v809 = vmax.f32 %v627, 0.0
    %v810 = vmax.f32 %v738, 0.0
    %v811 = vmax.f32 %v740, 0.0
    %v812 = vmax.f32 %v629, 0.0
    %v813 = vmax.f32 %v631, 0.0
    %v814 = vmax.f32 %v742, 0.0
    %v815 = vmax.f32 %v744, 0.0
    %v816 = vmax.f32 %v635, 0.0
    %v817 = vmax.f32 %v637, 0.0
    %v818 = vmax.f32 %v748, 0.0
    %v819 = vmax.f32 %v750, 0.0
    %v820 = vmax.f32 %v639, 0.0
    %v821 = vmax.f32 %v641, 0.0
    %v822 = vmax.f32 %v752, 0.0
    %v823 = vmax.f32 %v754, 0.0
    %v824 = vmax.f32 %v645, 0.0
    %v825 = vmax.f32 %v647, 0.0
    %v826 = vmax.f32 %v758, 0.0
    %v827 = vmax.f32 %v760, 0.0
    %v828 = vmax.f32 %v649, 0.0
    %v829 = vmax.f32 %v651, 0.0
    %v830 = vmax.f32 %v762, 0.0
    %v831 = vmax.f32 %v764, 0.0
    %v832 = vmax.f32 %v655, 0.0
    %v833 = vmax.f32 %v657, 0.0
    %v834 = vmax.f32 %v768, 0.0
    %v835 = vmax.f32 %v770, 0.0
    %v836 = vmax.f32 %v659, 0.0
    %v837 = vmax.f32 %v661, 0.0
    %v838 = vmax.f32 %v772, 0.0
    %v839 = vmax.f32 %v774, 0.0
    %v840 = vpack.c.bf16 %v780, %v776
    %v841 = vpack.c.bf16 %v781, %v777
    %v842 = vpack.c.bf16 %v782, %v778
    %v843 = vpack.c.bf16 %v783, %v779
    %v844 = vpack.c.bf16 %v788, %v784
    %v845 = vpack.c.bf16 %v789, %v785
    %v846 = vpack.c.bf16 %v790, %v786
    %v847 = vpack.c.bf16 %v791, %v787
    %v848 = vpack.c.bf16 %v796, %v792
    %v849 = vpack.c.bf16 %v797, %v793
    %v850 = vpack.c.bf16 %v798, %v794
    %v851 = vpack.c.bf16 %v799, %v795
    %v852 = vpack.c.bf16 %v804, %v800
    %v853 = vpack.c.bf16 %v805, %v801
    %v854 = vpack.c.bf16 %v806, %v802
    %v855 = vpack.c.bf16 %v807, %v803
    %v856 = vpack.c.bf16 %v812, %v808
    %v857 = vpack.c.bf16 %v813, %v809
    %v858 = vpack.c.bf16 %v814, %v810
    %v859 = vpack.c.bf16 %v815, %v811
    %v860 = vpack.c.bf16 %v820, %v816
    %v861 = vpack.c.bf16 %v821, %v817
    %v862 = vpack.c.bf16 %v822, %v818
    %v863 = vpack.c.bf16 %v823, %v819
    %v864 = vpack.c.bf16 %v828, %v824
    %v865 = vpack.c.bf16 %v829, %v825
    %v866 = vpack.c.bf16 %v830, %v826
    %v867 = vpack.c.bf16 %v831, %v827
    %v868 = vpack.c.bf16 %v836, %v832
    %v869 = vpack.c.bf16 %v837, %v833
    %v870 = vpack.c.bf16 %v838, %v834
    %v871 = vpack.c.bf16 %v839, %v835
    %v872 = vld [vmem:[#allocation10] sm:$0xff]
    %v873 = vld [vmem:[#allocation10 + $0x8] sm:$0xff]
    %v874 = vld [vmem:[#allocation10 + $0x10] sm:$0xff]
    %v875 = vld [vmem:[#allocation10 + $0x18] sm:$0xff]
    %v876 = vld [vmem:[#allocation10 + $0x20] sm:$0xff]
    %v877 = vld [vmem:[#allocation10 + $0x28] sm:$0xff]
    %v878 = vld [vmem:[#allocation10 + $0x30] sm:$0xff]
    %v879 = vld [vmem:[#allocation10 + $0x38] sm:$0xff]
    %v880 = vld [vmem:[#allocation10 + $0x40] sm:$0xff]
    %v881 = vld [vmem:[#allocation10 + $0x48] sm:$0xff]
    %v882 = vld [vmem:[#allocation10 + $0x50] sm:$0xff]
    %v883 = vld [vmem:[#allocation10 + $0x58] sm:$0xff]
    %v884 = vld [vmem:[#allocation10 + $0x60] sm:$0xff]
    %v885 = vld [vmem:[#allocation10 + $0x68] sm:$0xff]
    %v886 = vld [vmem:[#allocation10 + $0x70] sm:$0xff]
    %v887 = vld [vmem:[#allocation10 + $0x78] sm:$0xff]
    %v888 = vld [vmem:[#allocation10 + $0x80] sm:$0xff]
    %v889 = vld [vmem:[#allocation10 + $0x88] sm:$0xff]
    %v890 = vld [vmem:[#allocation10 + $0x90] sm:$0xff]
    %v891 = vld [vmem:[#allocation10 + $0x98] sm:$0xff]
    %v892 = vld [vmem:[#allocation10 + $0xa0] sm:$0xff]
    %v893 = vld [vmem:[#allocation10 + $0xa8] sm:$0xff]
    %v894 = vld [vmem:[#allocation10 + $0xb0] sm:$0xff]
    %v895 = vld [vmem:[#allocation10 + $0xb8] sm:$0xff]
    %v896 = vld [vmem:[#allocation10 + $0xc0] sm:$0xff]
    %v897 = vld [vmem:[#allocation10 + $0xc8] sm:$0xff]
    %v898 = vld [vmem:[#allocation10 + $0xd0] sm:$0xff]
    %v899 = vld [vmem:[#allocation10 + $0xd8] sm:$0xff]
    %v900 = vld [vmem:[#allocation10 + $0xe0] sm:$0xff]
    %v901 = vld [vmem:[#allocation10 + $0xe8] sm:$0xff]
    %v902 = vld [vmem:[#allocation10 + $0xf0] sm:$0xff]
    %v903 = vld [vmem:[#allocation10 + $0xf8] sm:$0xff]
    %v904 = vld [vmem:[#allocation10 + $0x100] sm:$0xff]
    %v905 = vld [vmem:[#allocation10 + $0x108] sm:$0xff]
    %v906 = vld [vmem:[#allocation10 + $0x110] sm:$0xff]
    %v907 = vld [vmem:[#allocation10 + $0x118] sm:$0xff]
    %v908 = vld [vmem:[#allocation10 + $0x120] sm:$0xff]
    %v909 = vld [vmem:[#allocation10 + $0x128] sm:$0xff]
    %v910 = vld [vmem:[#allocation10 + $0x130] sm:$0xff]
    %v911 = vld [vmem:[#allocation10 + $0x138] sm:$0xff]
    %v912 = vld [vmem:[#allocation10 + $0x140] sm:$0xff]
    %v913 = vld [vmem:[#allocation10 + $0x148] sm:$0xff]
    %v914 = vld [vmem:[#allocation10 + $0x150] sm:$0xff]
    %v915 = vld [vmem:[#allocation10 + $0x158] sm:$0xff]
    %v916 = vld [vmem:[#allocation10 + $0x160] sm:$0xff]
    %v917 = vld [vmem:[#allocation10 + $0x168] sm:$0xff]
    %v918 = vld [vmem:[#allocation10 + $0x170] sm:$0xff]
    %v919 = vld [vmem:[#allocation10 + $0x178] sm:$0xff]
    %v920 = vld [vmem:[#allocation10 + $0x180] sm:$0xff]
    %v921 = vld [vmem:[#allocation10 + $0x188] sm:$0xff]
    %v922 = vld [vmem:[#allocation10 + $0x190] sm:$0xff]
    %v923 = vld [vmem:[#allocation10 + $0x198] sm:$0xff]
    %v924 = vld [vmem:[#allocation10 + $0x1a0] sm:$0xff]
    %v925 = vld [vmem:[#allocation10 + $0x1a8] sm:$0xff]
    %v926 = vld [vmem:[#allocation10 + $0x1b0] sm:$0xff]
    %v927 = vld [vmem:[#allocation10 + $0x1b8] sm:$0xff]
    %v928 = vld [vmem:[#allocation10 + $0x1c0] sm:$0xff]
    %v929 = vld [vmem:[#allocation10 + $0x1c8] sm:$0xff]
    %v930 = vld [vmem:[#allocation10 + $0x1d0] sm:$0xff]
    %v931 = vld [vmem:[#allocation10 + $0x1d8] sm:$0xff]
    %v932 = vld [vmem:[#allocation10 + $0x1e0] sm:$0xff]
    %v933 = vld [vmem:[#allocation10 + $0x1e8] sm:$0xff]
    %v934 = vld [vmem:[#allocation10 + $0x1f0] sm:$0xff]
    %v935 = vld [vmem:[#allocation10 + $0x1f8] sm:$0xff]
    %v936 = vld [vmem:[#allocation10 + $0x200] sm:$0xff]
    %v937 = vld [vmem:[#allocation10 + $0x208] sm:$0xff]
    %v938 = vld [vmem:[#allocation10 + $0x210] sm:$0xff]
    %v939 = vld [vmem:[#allocation10 + $0x218] sm:$0xff]
    %v940 = vld [vmem:[#allocation10 + $0x220] sm:$0xff]
    %v941 = vld [vmem:[#allocation10 + $0x228] sm:$0xff]
    %v942 = vld [vmem:[#allocation10 + $0x230] sm:$0xff]
    %v943 = vld [vmem:[#allocation10 + $0x238] sm:$0xff]
    %v944 = vld [vmem:[#allocation10 + $0x240] sm:$0xff]
    %v945 = vld [vmem:[#allocation10 + $0x248] sm:$0xff]
    %v946 = vld [vmem:[#allocation10 + $0x250] sm:$0xff]
    %v947 = vld [vmem:[#allocation10 + $0x258] sm:$0xff]
    %v948 = vld [vmem:[#allocation10 + $0x260] sm:$0xff]
    %v949 = vld [vmem:[#allocation10 + $0x268] sm:$0xff]
    %v950 = vld [vmem:[#allocation10 + $0x270] sm:$0xff]
    %v951 = vld [vmem:[#allocation10 + $0x278] sm:$0xff]
    %v952 = vld [vmem:[#allocation10 + $0x280] sm:$0xff]
    %v953 = vld [vmem:[#allocation10 + $0x288] sm:$0xff]
    %v954 = vld [vmem:[#allocation10 + $0x290] sm:$0xff]
    %v955 = vld [vmem:[#allocation10 + $0x298] sm:$0xff]
    %v956 = vld [vmem:[#allocation10 + $0x2a0] sm:$0xff]
    %v957 = vld [vmem:[#allocation10 + $0x2a8] sm:$0xff]
    %v958 = vld [vmem:[#allocation10 + $0x2b0] sm:$0xff]
    %v959 = vld [vmem:[#allocation10 + $0x2b8] sm:$0xff]
    %v960 = vld [vmem:[#allocation10 + $0x2c0] sm:$0xff]
    %v961 = vld [vmem:[#allocation10 + $0x2c8] sm:$0xff]
    %v962 = vld [vmem:[#allocation10 + $0x2d0] sm:$0xff]
    %v963 = vld [vmem:[#allocation10 + $0x2d8] sm:$0xff]
    %v964 = vld [vmem:[#allocation10 + $0x2e0] sm:$0xff]
    %v965 = vld [vmem:[#allocation10 + $0x2e8] sm:$0xff]
    %v966 = vld [vmem:[#allocation10 + $0x2f0] sm:$0xff]
    %v967 = vld [vmem:[#allocation10 + $0x2f8] sm:$0xff]
    %v968 = vld [vmem:[#allocation10 + $0x300] sm:$0xff]
    %v969 = vld [vmem:[#allocation10 + $0x308] sm:$0xff]
    %v970 = vld [vmem:[#allocation10 + $0x310] sm:$0xff]
    %v971 = vld [vmem:[#allocation10 + $0x318] sm:$0xff]
    %v972 = vld [vmem:[#allocation10 + $0x320] sm:$0xff]
    %v973 = vld [vmem:[#allocation10 + $0x328] sm:$0xff]
    %v974 = vld [vmem:[#allocation10 + $0x330] sm:$0xff]
    %v975 = vld [vmem:[#allocation10 + $0x338] sm:$0xff]
    %v976 = vld [vmem:[#allocation10 + $0x340] sm:$0xff]
    %v977 = vld [vmem:[#allocation10 + $0x348] sm:$0xff]
    %v978 = vld [vmem:[#allocation10 + $0x350] sm:$0xff]
    %v979 = vld [vmem:[#allocation10 + $0x358] sm:$0xff]
    %v980 = vld [vmem:[#allocation10 + $0x360] sm:$0xff]
    %v981 = vld [vmem:[#allocation10 + $0x368] sm:$0xff]
    %v982 = vld [vmem:[#allocation10 + $0x370] sm:$0xff]
    %v983 = vld [vmem:[#allocation10 + $0x378] sm:$0xff]
    %v984 = vld [vmem:[#allocation10 + $0x380] sm:$0xff]
    %v985 = vld [vmem:[#allocation10 + $0x388] sm:$0xff]
    %v986 = vld [vmem:[#allocation10 + $0x390] sm:$0xff]
    %v987 = vld [vmem:[#allocation10 + $0x398] sm:$0xff]
    %v988 = vld [vmem:[#allocation10 + $0x3a0] sm:$0xff]
    %v989 = vld [vmem:[#allocation10 + $0x3a8] sm:$0xff]
    %v990 = vld [vmem:[#allocation10 + $0x3b0] sm:$0xff]
    %v991 = vld [vmem:[#allocation10 + $0x3b8] sm:$0xff]
    %v992 = vld [vmem:[#allocation10 + $0x3c0] sm:$0xff]
    %v993 = vld [vmem:[#allocation10 + $0x3c8] sm:$0xff]
    %v994 = vld [vmem:[#allocation10 + $0x3d0] sm:$0xff]
    %v995 = vld [vmem:[#allocation10 + $0x3d8] sm:$0xff]
    %v996 = vld [vmem:[#allocation10 + $0x3e0] sm:$0xff]
    %v997 = vld [vmem:[#allocation10 + $0x3e8] sm:$0xff]
    %v998 = vld [vmem:[#allocation10 + $0x3f0] sm:$0xff]
    %v999 = vld [vmem:[#allocation10 + $0x3f8] sm:$0xff]
    %v1000 = vld [vmem:[#allocation7 + $0x10] sm:$0xff]
    %v1001 = vld [vmem:[#allocation7 + $0x18] sm:$0xff]
    %v1002 = vld [vmem:[#allocation7 + $0x44] sm:$0xff]
    %v1003 = vld [vmem:[#allocation7 + $0x4c] sm:$0xff]
    %v1004 = vld [vmem:[#allocation7 + $0x78] sm:$0xff]
    %v1005 = vld [vmem:[#allocation7 + $0x80] sm:$0xff]
    %v1006 = vld [vmem:[#allocation7 + $0xac] sm:$0xff]
    %v1007 = vld [vmem:[#allocation7 + $0xb4] sm:$0xff]
    %v1008 = vld [vmem:[#allocation7 + $0xe0] sm:$0xff]
    %v1009 = vld [vmem:[#allocation7 + $0xe8] sm:$0xff]
    %v1010 = vld [vmem:[#allocation7 + $0x114] sm:$0xff]
    %v1011 = vld [vmem:[#allocation7 + $0x11c] sm:$0xff]
    %v1012 = vld [vmem:[#allocation7 + $0x148] sm:$0xff]
    %v1013 = vld [vmem:[#allocation7 + $0x150] sm:$0xff]
    %v1014 = vld [vmem:[#allocation7 + $0x17c] sm:$0xff]
    %v1015 = vld [vmem:[#allocation7 + $0x184] sm:$0xff]
    %v1016 = vld [vmem:[#allocation7 + $0x1b0] sm:$0xff]
    %v1017 = vld [vmem:[#allocation7 + $0x1b8] sm:$0xff]
    %v1018 = vld [vmem:[#allocation7 + $0x1e4] sm:$0xff]
    %v1019 = vld [vmem:[#allocation7 + $0x1ec] sm:$0xff]
    %v1020 = vld [vmem:[#allocation7 + $0x218] sm:$0xff]
    %v1021 = vld [vmem:[#allocation7 + $0x220] sm:$0xff]
    %v1022 = vld [vmem:[#allocation7 + $0x24c] sm:$0xff]
    %v1023 = vld [vmem:[#allocation7 + $0x254] sm:$0xff]
    %v1024 = vld [vmem:[#allocation7 + $0x280] sm:$0xff]
    %v1025 = vld [vmem:[#allocation7 + $0x288] sm:$0xff]
    %v1026 = vld [vmem:[#allocation7 + $0x2b4] sm:$0xff]
    %v1027 = vld [vmem:[#allocation7 + $0x2bc] sm:$0xff]
    %v1028 = vld [vmem:[#allocation7 + $0x2e8] sm:$0xff]
    %v1029 = vld [vmem:[#allocation7 + $0x2f0] sm:$0xff]
    %v1030 = vld [vmem:[#allocation7 + $0x31c] sm:$0xff]
    %v1031 = vld [vmem:[#allocation7 + $0x324] sm:$0xff]
    %v1032 = vld [vmem:[#allocation8 + $0x4] sm:$0xf]
    %v1034 = vlaneseq
    %v1035 = vshrl.u32 %v1034, 7
    %v1036 = vsub.s32 0, %v1035
    %v1037 = vrot.slane %v1032, %v1036
    %v1038 = vlaneseq
    %v1039 = vshrl.u32 %v1038, 7
    %v1040 = vsub.s32 1, %v1039
    %v1041 = vrot.slane %v1032, %v1040
    %v1042 = vlaneseq
    %v1043 = vshrl.u32 %v1042, 7
    %v1044 = vsub.s32 2, %v1043
    %v1045 = vrot.slane %v1032, %v1044
    %v1046 = vlaneseq
    %v1047 = vshrl.u32 %v1046, 7
    %v1048 = vsub.s32 3, %v1047
    %v1049 = vrot.slane %v1032, %v1048
    %v1086 = vunpack.c.l.b16 %v1000
    %v1087 = vunpack.c.h.b16 %v1000
    %v1088 = vunpack.c.l.b16 %v1001
    %v1089 = vunpack.c.h.b16 %v1001
    %v1090 = vunpack.c.l.b16 %v1002
    %v1091 = vunpack.c.h.b16 %v1002
    %v1092 = vunpack.c.l.b16 %v1003
    %v1093 = vunpack.c.h.b16 %v1003
    %v1094 = vunpack.c.l.b16 %v1004
    %v1095 = vunpack.c.h.b16 %v1004
    %v1096 = vunpack.c.l.b16 %v1005
    %v1097 = vunpack.c.h.b16 %v1005
    %v1098 = vunpack.c.l.b16 %v1006
    %v1099 = vunpack.c.h.b16 %v1006
    %v1100 = vunpack.c.l.b16 %v1007
    %v1101 = vunpack.c.h.b16 %v1007
    %v1102 = vunpack.c.l.b16 %v1008
    %v1103 = vunpack.c.h.b16 %v1008
    %v1104 = vunpack.c.l.b16 %v1009
    %v1105 = vunpack.c.h.b16 %v1009
    %v1106 = vunpack.c.l.b16 %v1010
    %v1107 = vunpack.c.h.b16 %v1010
    %v1108 = vunpack.c.l.b16 %v1011
    %v1109 = vunpack.c.h.b16 %v1011
    %v1110 = vunpack.c.l.b16 %v1012
    %v1111 = vunpack.c.h.b16 %v1012
    %v1112 = vunpack.c.l.b16 %v1013
    %v1113 = vunpack.c.h.b16 %v1013
    %v1114 = vunpack.c.l.b16 %v1014
    %v1115 = vunpack.c.h.b16 %v1014
    %v1116 = vunpack.c.l.b16 %v1015
    %v1117 = vunpack.c.h.b16 %v1015
    %v1118 = vunpack.c.l.b16 %v1016
    %v1119 = vunpack.c.h.b16 %v1016
    %v1120 = vunpack.c.l.b16 %v1017
    %v1121 = vunpack.c.h.b16 %v1017
    %v1122 = vunpack.c.l.b16 %v1018
    %v1123 = vunpack.c.h.b16 %v1018
    %v1124 = vunpack.c.l.b16 %v1019
    %v1125 = vunpack.c.h.b16 %v1019
    %v1126 = vunpack.c.l.b16 %v1020
    %v1127 = vunpack.c.h.b16 %v1020
    %v1128 = vunpack.c.l.b16 %v1021
    %v1129 = vunpack.c.h.b16 %v1021
    %v1130 = vunpack.c.l.b16 %v1022
    %v1131 = vunpack.c.h.b16 %v1022
    %v1132 = vunpack.c.l.b16 %v1023
    %v1133 = vunpack.c.h.b16 %v1023
    %v1134 = vunpack.c.l.b16 %v1024
    %v1135 = vunpack.c.h.b16 %v1024
    %v1136 = vunpack.c.l.b16 %v1025
    %v1137 = vunpack.c.h.b16 %v1025
    %v1138 = vunpack.c.l.b16 %v1026
    %v1139 = vunpack.c.h.b16 %v1026
    %v1140 = vunpack.c.l.b16 %v1027
    %v1141 = vunpack.c.h.b16 %v1027
    %v1142 = vunpack.c.l.b16 %v1028
    %v1143 = vunpack.c.h.b16 %v1028
    %v1144 = vunpack.c.l.b16 %v1029
    %v1145 = vunpack.c.h.b16 %v1029
    %v1146 = vunpack.c.l.b16 %v1030
    %v1147 = vunpack.c.h.b16 %v1030
    %v1148 = vunpack.c.l.b16 %v1031
    %v1149 = vunpack.c.h.b16 %v1031
    %v1150 = vpack.c.b16 %v1090, %v1086
    %v1151 = vpack.c.b16 %v1091, %v1087
    %v1152 = vpack.c.b16 %v1092, %v1088
    %v1153 = vpack.c.b16 %v1093, %v1089
    %v1154 = vpack.c.b16 %v1098, %v1094
    %v1155 = vpack.c.b16 %v1099, %v1095
    %v1156 = vpack.c.b16 %v1100, %v1096
    %v1157 = vpack.c.b16 %v1101, %v1097
    %v1158 = vpack.c.b16 %v1106, %v1102
    %v1159 = vpack.c.b16 %v1107, %v1103
    %v1160 = vpack.c.b16 %v1108, %v1104
    %v1161 = vpack.c.b16 %v1109, %v1105
    %v1162 = vpack.c.b16 %v1114, %v1110
    %v1163 = vpack.c.b16 %v1115, %v1111
    %v1164 = vpack.c.b16 %v1116, %v1112
    %v1165 = vpack.c.b16 %v1117, %v1113
    %v1166 = vpack.c.b16 %v1122, %v1118
    %v1167 = vpack.c.b16 %v1123, %v1119
    %v1168 = vpack.c.b16 %v1124, %v1120
    %v1169 = vpack.c.b16 %v1125, %v1121
    %v1170 = vpack.c.b16 %v1130, %v1126
    %v1171 = vpack.c.b16 %v1131, %v1127
    %v1172 = vpack.c.b16 %v1132, %v1128
    %v1173 = vpack.c.b16 %v1133, %v1129
    %v1174 = vpack.c.b16 %v1138, %v1134
    %v1175 = vpack.c.b16 %v1139, %v1135
    %v1176 = vpack.c.b16 %v1140, %v1136
    %v1177 = vpack.c.b16 %v1141, %v1137
    %v1178 = vpack.c.b16 %v1146, %v1142
    %v1179 = vpack.c.b16 %v1147, %v1143
    %v1180 = vpack.c.b16 %v1148, %v1144
    %v1181 = vpack.c.b16 %v1149, %v1145
    %1214 = vmatprep.subr.bf16.mxu0 %v1151
    %1215 = vmatpush1.bf16.msra.mxu0 %v1150
    %1216 = vmatprep.subr.bf16.mxu0 %v1155
    %1217 = vmatpush1.bf16.msra.mxu0 %v1154
    %1218 = vmatprep.subr.bf16.mxu0 %v1159
    %1219 = vmatpush1.bf16.msra.mxu0 %v1158
    %1220 = vmatprep.subr.bf16.mxu0 %v1163
    %1221 = vmatpush1.bf16.msra.mxu0 %v1162
    %1222 = vmatprep.subr.bf16.mxu0 %v1167
    %1223 = vmatpush1.bf16.msra.mxu0 %v1166
    %1224 = vmatprep.subr.bf16.mxu0 %v1171
    %1225 = vmatpush1.bf16.msra.mxu0 %v1170
    %1226 = vmatprep.subr.bf16.mxu0 %v1175
    %1227 = vmatpush1.bf16.msra.mxu0 %v1174
    %1228 = vmatprep.subr.bf16.mxu0 %v1179
    %1229 = vmatpush1.bf16.msra.mxu0 %v1178
    %1230 = vmatprep.subr.bf16.mxu0 0
    %1231 = vmatpush1.bf16.msra.mxu0 0
    %1232 = vmatprep.subr.bf16.mxu0 0
    %1233 = vmatpush1.bf16.msra.mxu0 0
    %1234 = vmatprep.subr.bf16.mxu0 0
    %1235 = vmatpush1.bf16.msra.mxu0 0
    %1236 = vmatprep.subr.bf16.mxu0 0
    %1237 = vmatpush1.bf16.msra.mxu0 0
    %1238 = vmatprep.subr.bf16.mxu0 0
    %1239 = vmatpush1.bf16.msra.mxu0 0
    %1240 = vmatprep.subr.bf16.mxu0 0
    %1241 = vmatpush1.bf16.msra.mxu0 0
    %1242 = vmatprep.subr.bf16.mxu0 0
    %1243 = vmatpush1.bf16.msra.mxu0 0
    %1244 = vmatprep.subr.bf16.mxu0 0
    %1245 = vmatpush1.bf16.msra.mxu0 0
    %1246 = vmatprep.mubr.bf16.mxu0 0
    %1247 = vmatmul.mubr.bf16.gmra.mrb[0].mxu0 %v328
    %v1248 = vpop.f32.mrb[0].mxu0
    %v1249 = vadd.f32 %v1037, %v1248
    %v1250 = vpop.f32.mrb[0].mxu0
    %v1251 = vadd.f32 %v1041, %v1250
    %v1252 = vpop.f32.mrb[0].mxu0
    %v1253 = vadd.f32 %v1037, %v1252
    %v1254 = vpop.f32.mrb[0].mxu0
    %v1255 = vadd.f32 %v1041, %v1254
    %1256 = vmatprep.mubr.bf16.mxu0 0
    %1257 = vmatmul.mubr.bf16.gmra.mrb[0].mxu0 %v329
    %v1258 = vpop.f32.mrb[0].mxu0
    %v1259 = vadd.f32 %v1037, %v1258
    %v1260 = vpop.f32.mrb[0].mxu0
    %v1261 = vadd.f32 %v1041, %v1260
    %v1262 = vpop.f32.mrb[0].mxu0
    %v1263 = vadd.f32 %v1037, %v1262
    %v1264 = vpop.f32.mrb[0].mxu0
    %v1265 = vadd.f32 %v1041, %v1264
    %1266 = vmatprep.mubr.bf16.mxu0 0
    %1267 = vmatmul.mubr.bf16.gmra.mrb[0].mxu0 %v330
    %v1268 = vpop.f32.mrb[0].mxu0
    %v1269 = vadd.f32 %v1037, %v1268
    %v1270 = vpop.f32.mrb[0].mxu0
    %v1271 = vadd.f32 %v1041, %v1270
    %v1272 = vpop.f32.mrb[0].mxu0
    %v1273 = vadd.f32 %v1037, %v1272
    %v1274 = vpop.f32.mrb[0].mxu0
    %v1275 = vadd.f32 %v1041, %v1274
    %1276 = vmatprep.mubr.bf16.mxu0 0
    %1277 = vmatmul.mubr.bf16.gmra.mrb[0].mxu0 %v331
    %v1278 = vpop.f32.mrb[0].mxu0
    %v1279 = vadd.f32 %v1037, %v1278
    %v1280 = vpop.f32.mrb[0].mxu0
    %v1281 = vadd.f32 %v1041, %v1280
    %v1282 = vpop.f32.mrb[0].mxu0
    %v1283 = vadd.f32 %v1037, %v1282
    %v1284 = vpop.f32.mrb[0].mxu0
    %v1285 = vadd.f32 %v1041, %v1284
    %1286 = vmatprep.mubr.bf16.mxu0 0
    %1287 = vmatmul.mubr.bf16.gmra.mrb[0].mxu0 %v332
    %v1288 = vpop.f32.mrb[0].mxu0
    %v1289 = vadd.f32 %v1037, %v1288
    %v1290 = vpop.f32.mrb[0].mxu0
    %v1291 = vadd.f32 %v1041, %v1290
    %v1292 = vpop.f32.mrb[0].mxu0
    %v1293 = vadd.f32 %v1037, %v1292
    %v1294 = vpop.f32.mrb[0].mxu0
    %v1295 = vadd.f32 %v1041, %v1294
    %1296 = vmatprep.mubr.bf16.mxu0 0
    %1297 = vmatmul.mubr.bf16.gmra.mrb[0].mxu0 %v333
    %v1298 = vpop.f32.mrb[0].mxu0
    %v1299 = vadd.f32 %v1037, %v1298
    %v1300 = vpop.f32.mrb[0].mxu0
    %v1301 = vadd.f32 %v1041, %v1300
    %v1302 = vpop.f32.mrb[0].mxu0
    %v1303 = vadd.f32 %v1037, %v1302
    %v1304 = vpop.f32.mrb[0].mxu0
    %v1305 = vadd.f32 %v1041, %v1304
    %1306 = vmatprep.mubr.bf16.mxu0 0
    %1307 = vmatmul.mubr.bf16.gmra.mrb[0].mxu0 %v334
    %v1308 = vpop.f32.mrb[0].mxu0
    %v1309 = vadd.f32 %v1037, %v1308
    %v1310 = vpop.f32.mrb[0].mxu0
    %v1311 = vadd.f32 %v1041, %v1310
    %v1312 = vpop.f32.mrb[0].mxu0
    %v1313 = vadd.f32 %v1037, %v1312
    %v1314 = vpop.f32.mrb[0].mxu0
    %v1315 = vadd.f32 %v1041, %v1314
    %1316 = vmatprep.mubr.bf16.mxu0 0
    %1317 = vmatmul.mubr.bf16.gmra.mrb[0].mxu0 %v335
    %v1318 = vpop.f32.mrb[0].mxu0
    %v1319 = vadd.f32 %v1037, %v1318
    %v1320 = vpop.f32.mrb[0].mxu0
    %v1321 = vadd.f32 %v1041, %v1320
    %v1322 = vpop.f32.mrb[0].mxu0
    %v1323 = vadd.f32 %v1037, %v1322
    %v1324 = vpop.f32.mrb[0].mxu0
    %v1325 = vadd.f32 %v1041, %v1324
    %1326 = vdwg.mxu0
    %1327 = vmatprep.subr.bf16.mxu0 %v1153
    %1328 = vmatpush1.bf16.msra.mxu0 %v1152
    %1329 = vmatprep.subr.bf16.mxu0 %v1157
    %1330 = vmatpush1.bf16.msra.mxu0 %v1156
    %1331 = vmatprep.subr.bf16.mxu0 %v1161
    %1332 = vmatpush1.bf16.msra.mxu0 %v1160
    %1333 = vmatprep.subr.bf16.mxu0 %v1165
    %1334 = vmatpush1.bf16.msra.mxu0 %v1164
    %1335 = vmatprep.subr.bf16.mxu0 %v1169
    %1336 = vmatpush1.bf16.msra.mxu0 %v1168
    %1337 = vmatprep.subr.bf16.mxu0 %v1173
    %1338 = vmatpush1.bf16.msra.mxu0 %v1172
    %1339 = vmatprep.subr.bf16.mxu0 %v1177
    %1340 = vmatpush1.bf16.msra.mxu0 %v1176
    %1341 = vmatprep.subr.bf16.mxu0 %v1181
    %1342 = vmatpush1.bf16.msra.mxu0 %v1180
    %1343 = vmatprep.subr.bf16.mxu0 0
    %1344 = vmatpush1.bf16.msra.mxu0 0
    %1345 = vmatprep.subr.bf16.mxu0 0
    %1346 = vmatpush1.bf16.msra.mxu0 0
    %1347 = vmatprep.subr.bf16.mxu0 0
    %1348 = vmatpush1.bf16.msra.mxu0 0
    %1349 = vmatprep.subr.bf16.mxu0 0
    %1350 = vmatpush1.bf16.msra.mxu0 0
    %1351 = vmatprep.subr.bf16.mxu0 0
    %1352 = vmatpush1.bf16.msra.mxu0 0
    %1353 = vmatprep.subr.bf16.mxu0 0
    %1354 = vmatpush1.bf16.msra.mxu0 0
    %1355 = vmatprep.subr.bf16.mxu0 0
    %1356 = vmatpush1.bf16.msra.mxu0 0
    %1357 = vmatprep.subr.bf16.mxu0 0
    %1358 = vmatpush1.bf16.msra.mxu0 0
    %1359 = vmatprep.mubr.bf16.mxu0 0
    %1360 = vmatmul.mubr.bf16.gmra.mrb[0].mxu0 %v328
    %v1361 = vpop.f32.mrb[0].mxu0
    %v1362 = vadd.f32 %v1045, %v1361
    %v1363 = vpop.f32.mrb[0].mxu0
    %v1364 = vadd.f32 %v1049, %v1363
    %v1365 = vpop.f32.mrb[0].mxu0
    %v1366 = vadd.f32 %v1045, %v1365
    %v1367 = vpop.f32.mrb[0].mxu0
    %v1368 = vadd.f32 %v1049, %v1367
    %1369 = vmatprep.mubr.bf16.mxu0 0
    %1370 = vmatmul.mubr.bf16.gmra.mrb[0].mxu0 %v329
    %v1371 = vpop.f32.mrb[0].mxu0
    %v1372 = vadd.f32 %v1045, %v1371
    %v1373 = vpop.f32.mrb[0].mxu0
    %v1374 = vadd.f32 %v1049, %v1373
    %v1375 = vpop.f32.mrb[0].mxu0
    %v1376 = vadd.f32 %v1045, %v1375
    %v1377 = vpop.f32.mrb[0].mxu0
    %v1378 = vadd.f32 %v1049, %v1377
    %1379 = vmatprep.mubr.bf16.mxu0 0
    %1380 = vmatmul.mubr.bf16.gmra.mrb[0].mxu0 %v330
    %v1381 = vpop.f32.mrb[0].mxu0
    %v1382 = vadd.f32 %v1045, %v1381
    %v1383 = vpop.f32.mrb[0].mxu0
    %v1384 = vadd.f32 %v1049, %v1383
    %v1385 = vpop.f32.mrb[0].mxu0
    %v1386 = vadd.f32 %v1045, %v1385
    %v1387 = vpop.f32.mrb[0].mxu0
    %v1388 = vadd.f32 %v1049, %v1387
    %1389 = vmatprep.mubr.bf16.mxu0 0
    %1390 = vmatmul.mubr.bf16.gmra.mrb[0].mxu0 %v331
    %v1391 = vpop.f32.mrb[0].mxu0
    %v1392 = vadd.f32 %v1045, %v1391
    %v1393 = vpop.f32.mrb[0].mxu0
    %v1394 = vadd.f32 %v1049, %v1393
    %v1395 = vpop.f32.mrb[0].mxu0
    %v1396 = vadd.f32 %v1045, %v1395
    %v1397 = vpop.f32.mrb[0].mxu0
    %v1398 = vadd.f32 %v1049, %v1397
    %1399 = vmatprep.mubr.bf16.mxu0 0
    %1400 = vmatmul.mubr.bf16.gmra.mrb[0].mxu0 %v332
    %v1401 = vpop.f32.mrb[0].mxu0
    %v1402 = vadd.f32 %v1045, %v1401
    %v1403 = vpop.f32.mrb[0].mxu0
    %v1404 = vadd.f32 %v1049, %v1403
    %v1405 = vpop.f32.mrb[0].mxu0
    %v1406 = vadd.f32 %v1045, %v1405
    %v1407 = vpop.f32.mrb[0].mxu0
    %v1408 = vadd.f32 %v1049, %v1407
    %1409 = vmatprep.mubr.bf16.mxu0 0
    %1410 = vmatmul.mubr.bf16.gmra.mrb[0].mxu0 %v333
    %v1411 = vpop.f32.mrb[0].mxu0
    %v1412 = vadd.f32 %v1045, %v1411
    %v1413 = vpop.f32.mrb[0].mxu0
    %v1414 = vadd.f32 %v1049, %v1413
    %v1415 = vpop.f32.mrb[0].mxu0
    %v1416 = vadd.f32 %v1045, %v1415
    %v1417 = vpop.f32.mrb[0].mxu0
    %v1418 = vadd.f32 %v1049, %v1417
    %1419 = vmatprep.mubr.bf16.mxu0 0
    %1420 = vmatmul.mubr.bf16.gmra.mrb[0].mxu0 %v334
    %v1421 = vpop.f32.mrb[0].mxu0
    %v1422 = vadd.f32 %v1045, %v1421
    %v1423 = vpop.f32.mrb[0].mxu0
    %v1424 = vadd.f32 %v1049, %v1423
    %v1425 = vpop.f32.mrb[0].mxu0
    %v1426 = vadd.f32 %v1045, %v1425
    %v1427 = vpop.f32.mrb[0].mxu0
    %v1428 = vadd.f32 %v1049, %v1427
    %1429 = vmatprep.mubr.bf16.mxu0 0
    %1430 = vmatmul.mubr.bf16.gmra.mrb[0].mxu0 %v335
    %v1431 = vpop.f32.mrb[0].mxu0
    %v1432 = vadd.f32 %v1045, %v1431
    %v1433 = vpop.f32.mrb[0].mxu0
    %v1434 = vadd.f32 %v1049, %v1433
    %v1435 = vpop.f32.mrb[0].mxu0
    %v1436 = vadd.f32 %v1045, %v1435
    %v1437 = vpop.f32.mrb[0].mxu0
    %v1438 = vadd.f32 %v1049, %v1437
    %1439 = vdwg.mxu0
    %v1440 = vmax.f32 %v1249, 0.0
    %v1441 = vmax.f32 %v1251, 0.0
    %v1442 = vmax.f32 %v1362, 0.0
    %v1443 = vmax.f32 %v1364, 0.0
    %v1444 = vmax.f32 %v1253, 0.0
    %v1445 = vmax.f32 %v1255, 0.0
    %v1446 = vmax.f32 %v1366, 0.0
    %v1447 = vmax.f32 %v1368, 0.0
    %v1448 = vmax.f32 %v1259, 0.0
    %v1449 = vmax.f32 %v1261, 0.0
    %v1450 = vmax.f32 %v1372, 0.0
    %v1451 = vmax.f32 %v1374, 0.0
    %v1452 = vmax.f32 %v1263, 0.0
    %v1453 = vmax.f32 %v1265, 0.0
    %v1454 = vmax.f32 %v1376, 0.0
    %v1455 = vmax.f32 %v1378, 0.0
    %v1456 = vmax.f32 %v1269, 0.0
    %v1457 = vmax.f32 %v1271, 0.0
    %v1458 = vmax.f32 %v1382, 0.0
    %v1459 = vmax.f32 %v1384, 0.0
    %v1460 = vmax.f32 %v1273, 0.0
    %v1461 = vmax.f32 %v1275, 0.0
    %v1462 = vmax.f32 %v1386, 0.0
    %v1463 = vmax.f32 %v1388, 0.0
    %v1464 = vmax.f32 %v1279, 0.0
    %v1465 = vmax.f32 %v1281, 0.0
    %v1466 = vmax.f32 %v1392, 0.0
    %v1467 = vmax.f32 %v1394, 0.0
    %v1468 = vmax.f32 %v1283, 0.0
    %v1469 = vmax.f32 %v1285, 0.0
    %v1470 = vmax.f32 %v1396, 0.0
    %v1471 = vmax.f32 %v1398, 0.0
    %v1472 = vmax.f32 %v1289, 0.0
    %v1473 = vmax.f32 %v1291, 0.0
    %v1474 = vmax.f32 %v1402, 0.0
    %v1475 = vmax.f32 %v1404, 0.0
    %v1476 = vmax.f32 %v1293, 0.0
    %v1477 = vmax.f32 %v1295, 0.0
    %v1478 = vmax.f32 %v1406, 0.0
    %v1479 = vmax.f32 %v1408, 0.0
    %v1480 = vmax.f32 %v1299, 0.0
    %v1481 = vmax.f32 %v1301, 0.0
    %v1482 = vmax.f32 %v1412, 0.0
    %v1483 = vmax.f32 %v1414, 0.0
    %v1484 = vmax.f32 %v1303, 0.0
    %v1485 = vmax.f32 %v1305, 0.0
    %v1486 = vmax.f32 %v1416, 0.0
    %v1487 = vmax.f32 %v1418, 0.0
    %v1488 = vmax.f32 %v1309, 0.0
    %v1489 = vmax.f32 %v1311, 0.0
    %v1490 = vmax.f32 %v1422, 0.0
    %v1491 = vmax.f32 %v1424, 0.0
    %v1492 = vmax.f32 %v1313, 0.0
    %v1493 = vmax.f32 %v1315, 0.0
    %v1494 = vmax.f32 %v1426, 0.0
    %v1495 = vmax.f32 %v1428, 0.0
    %v1496 = vmax.f32 %v1319, 0.0
    %v1497 = vmax.f32 %v1321, 0.0
    %v1498 = vmax.f32 %v1432, 0.0
    %v1499 = vmax.f32 %v1434, 0.0
    %v1500 = vmax.f32 %v1323, 0.0
    %v1501 = vmax.f32 %v1325, 0.0
    %v1502 = vmax.f32 %v1436, 0.0
    %v1503 = vmax.f32 %v1438, 0.0
    %v1504 = vpack.c.bf16 %v1444, %v1440
    %v1505 = vpack.c.bf16 %v1445, %v1441
    %v1506 = vpack.c.bf16 %v1446, %v1442
    %v1507 = vpack.c.bf16 %v1447, %v1443
    %v1508 = vpack.c.bf16 %v1452, %v1448
    %v1509 = vpack.c.bf16 %v1453, %v1449
    %v1510 = vpack.c.bf16 %v1454, %v1450
    %v1511 = vpack.c.bf16 %v1455, %v1451
    %v1512 = vpack.c.bf16 %v1460, %v1456
    %v1513 = vpack.c.bf16 %v1461, %v1457
    %v1514 = vpack.c.bf16 %v1462, %v1458
    %v1515 = vpack.c.bf16 %v1463, %v1459
    %v1516 = vpack.c.bf16 %v1468, %v1464
    %v1517 = vpack.c.bf16 %v1469, %v1465
    %v1518 = vpack.c.bf16 %v1470, %v1466
    %v1519 = vpack.c.bf16 %v1471, %v1467
    %v1520 = vpack.c.bf16 %v1476, %v1472
    %v1521 = vpack.c.bf16 %v1477, %v1473
    %v1522 = vpack.c.bf16 %v1478, %v1474
    %v1523 = vpack.c.bf16 %v1479, %v1475
    %v1524 = vpack.c.bf16 %v1484, %v1480
    %v1525 = vpack.c.bf16 %v1485, %v1481
    %v1526 = vpack.c.bf16 %v1486, %v1482
    %v1527 = vpack.c.bf16 %v1487, %v1483
    %v1528 = vpack.c.bf16 %v1492, %v1488
    %v1529 = vpack.c.bf16 %v1493, %v1489
    %v1530 = vpack.c.bf16 %v1494, %v1490
    %v1531 = vpack.c.bf16 %v1495, %v1491
    %v1532 = vpack.c.bf16 %v1500, %v1496
    %v1533 = vpack.c.bf16 %v1501, %v1497
    %v1534 = vpack.c.bf16 %v1502, %v1498
    %v1535 = vpack.c.bf16 %v1503, %v1499
    %v1536 = vld [vmem:[#allocation10 + $0x400] sm:$0xff]
    %v1537 = vld [vmem:[#allocation10 + $0x408] sm:$0xff]
    %v1538 = vld [vmem:[#allocation10 + $0x410] sm:$0xff]
    %v1539 = vld [vmem:[#allocation10 + $0x418] sm:$0xff]
    %v1540 = vld [vmem:[#allocation10 + $0x420] sm:$0xff]
    %v1541 = vld [vmem:[#allocation10 + $0x428] sm:$0xff]
    %v1542 = vld [vmem:[#allocation10 + $0x430] sm:$0xff]
    %v1543 = vld [vmem:[#allocation10 + $0x438] sm:$0xff]
    %v1544 = vld [vmem:[#allocation10 + $0x440] sm:$0xff]
    %v1545 = vld [vmem:[#allocation10 + $0x448] sm:$0xff]
    %v1546 = vld [vmem:[#allocation10 + $0x450] sm:$0xff]
    %v1547 = vld [vmem:[#allocation10 + $0x458] sm:$0xff]
    %v1548 = vld [vmem:[#allocation10 + $0x460] sm:$0xff]
    %v1549 = vld [vmem:[#allocation10 + $0x468] sm:$0xff]
    %v1550 = vld [vmem:[#allocation10 + $0x470] sm:$0xff]
    %v1551 = vld [vmem:[#allocation10 + $0x478] sm:$0xff]
    %v1552 = vld [vmem:[#allocation10 + $0x480] sm:$0xff]
    %v1553 = vld [vmem:[#allocation10 + $0x488] sm:$0xff]
    %v1554 = vld [vmem:[#allocation10 + $0x490] sm:$0xff]
    %v1555 = vld [vmem:[#allocation10 + $0x498] sm:$0xff]
    %v1556 = vld [vmem:[#allocation10 + $0x4a0] sm:$0xff]
    %v1557 = vld [vmem:[#allocation10 + $0x4a8] sm:$0xff]
    %v1558 = vld [vmem:[#allocation10 + $0x4b0] sm:$0xff]
    %v1559 = vld [vmem:[#allocation10 + $0x4b8] sm:$0xff]
    %v1560 = vld [vmem:[#allocation10 + $0x4c0] sm:$0xff]
    %v1561 = vld [vmem:[#allocation10 + $0x4c8] sm:$0xff]
    %v1562 = vld [vmem:[#allocation10 + $0x4d0] sm:$0xff]
    %v1563 = vld [vmem:[#allocation10 + $0x4d8] sm:$0xff]
    %v1564 = vld [vmem:[#allocation10 + $0x4e0] sm:$0xff]
    %v1565 = vld [vmem:[#allocation10 + $0x4e8] sm:$0xff]
    %v1566 = vld [vmem:[#allocation10 + $0x4f0] sm:$0xff]
    %v1567 = vld [vmem:[#allocation10 + $0x4f8] sm:$0xff]
    %v1568 = vld [vmem:[#allocation10 + $0x500] sm:$0xff]
    %v1569 = vld [vmem:[#allocation10 + $0x508] sm:$0xff]
    %v1570 = vld [vmem:[#allocation10 + $0x510] sm:$0xff]
    %v1571 = vld [vmem:[#allocation10 + $0x518] sm:$0xff]
    %v1572 = vld [vmem:[#allocation10 + $0x520] sm:$0xff]
    %v1573 = vld [vmem:[#allocation10 + $0x528] sm:$0xff]
    %v1574 = vld [vmem:[#allocation10 + $0x530] sm:$0xff]
    %v1575 = vld [vmem:[#allocation10 + $0x538] sm:$0xff]
    %v1576 = vld [vmem:[#allocation10 + $0x540] sm:$0xff]
    %v1577 = vld [vmem:[#allocation10 + $0x548] sm:$0xff]
    %v1578 = vld [vmem:[#allocation10 + $0x550] sm:$0xff]
    %v1579 = vld [vmem:[#allocation10 + $0x558] sm:$0xff]
    %v1580 = vld [vmem:[#allocation10 + $0x560] sm:$0xff]
    %v1581 = vld [vmem:[#allocation10 + $0x568] sm:$0xff]
    %v1582 = vld [vmem:[#allocation10 + $0x570] sm:$0xff]
    %v1583 = vld [vmem:[#allocation10 + $0x578] sm:$0xff]
    %v1584 = vld [vmem:[#allocation10 + $0x580] sm:$0xff]
    %v1585 = vld [vmem:[#allocation10 + $0x588] sm:$0xff]
    %v1586 = vld [vmem:[#allocation10 + $0x590] sm:$0xff]
    %v1587 = vld [vmem:[#allocation10 + $0x598] sm:$0xff]
    %v1588 = vld [vmem:[#allocation10 + $0x5a0] sm:$0xff]
    %v1589 = vld [vmem:[#allocation10 + $0x5a8] sm:$0xff]
    %v1590 = vld [vmem:[#allocation10 + $0x5b0] sm:$0xff]
    %v1591 = vld [vmem:[#allocation10 + $0x5b8] sm:$0xff]
    %v1592 = vld [vmem:[#allocation10 + $0x5c0] sm:$0xff]
    %v1593 = vld [vmem:[#allocation10 + $0x5c8] sm:$0xff]
    %v1594 = vld [vmem:[#allocation10 + $0x5d0] sm:$0xff]
    %v1595 = vld [vmem:[#allocation10 + $0x5d8] sm:$0xff]
    %v1596 = vld [vmem:[#allocation10 + $0x5e0] sm:$0xff]
    %v1597 = vld [vmem:[#allocation10 + $0x5e8] sm:$0xff]
    %v1598 = vld [vmem:[#allocation10 + $0x5f0] sm:$0xff]
    %v1599 = vld [vmem:[#allocation10 + $0x5f8] sm:$0xff]
    %v1600 = vld [vmem:[#allocation10 + $0x600] sm:$0xff]
    %v1601 = vld [vmem:[#allocation10 + $0x608] sm:$0xff]
    %v1602 = vld [vmem:[#allocation10 + $0x610] sm:$0xff]
    %v1603 = vld [vmem:[#allocation10 + $0x618] sm:$0xff]
    %v1604 = vld [vmem:[#allocation10 + $0x620] sm:$0xff]
    %v1605 = vld [vmem:[#allocation10 + $0x628] sm:$0xff]
    %v1606 = vld [vmem:[#allocation10 + $0x630] sm:$0xff]
    %v1607 = vld [vmem:[#allocation10 + $0x638] sm:$0xff]
    %v1608 = vld [vmem:[#allocation10 + $0x640] sm:$0xff]
    %v1609 = vld [vmem:[#allocation10 + $0x648] sm:$0xff]
    %v1610 = vld [vmem:[#allocation10 + $0x650] sm:$0xff]
    %v1611 = vld [vmem:[#allocation10 + $0x658] sm:$0xff]
    %v1612 = vld [vmem:[#allocation10 + $0x660] sm:$0xff]
    %v1613 = vld [vmem:[#allocation10 + $0x668] sm:$0xff]
    %v1614 = vld [vmem:[#allocation10 + $0x670] sm:$0xff]
    %v1615 = vld [vmem:[#allocation10 + $0x678] sm:$0xff]
    %v1616 = vld [vmem:[#allocation10 + $0x680] sm:$0xff]
    %v1617 = vld [vmem:[#allocation10 + $0x688] sm:$0xff]
    %v1618 = vld [vmem:[#allocation10 + $0x690] sm:$0xff]
    %v1619 = vld [vmem:[#allocation10 + $0x698] sm:$0xff]
    %v1620 = vld [vmem:[#allocation10 + $0x6a0] sm:$0xff]
    %v1621 = vld [vmem:[#allocation10 + $0x6a8] sm:$0xff]
    %v1622 = vld [vmem:[#allocation10 + $0x6b0] sm:$0xff]
    %v1623 = vld [vmem:[#allocation10 + $0x6b8] sm:$0xff]
    %v1624 = vld [vmem:[#allocation10 + $0x6c0] sm:$0xff]
    %v1625 = vld [vmem:[#allocation10 + $0x6c8] sm:$0xff]
    %v1626 = vld [vmem:[#allocation10 + $0x6d0] sm:$0xff]
    %v1627 = vld [vmem:[#allocation10 + $0x6d8] sm:$0xff]
    %v1628 = vld [vmem:[#allocation10 + $0x6e0] sm:$0xff]
    %v1629 = vld [vmem:[#allocation10 + $0x6e8] sm:$0xff]
    %v1630 = vld [vmem:[#allocation10 + $0x6f0] sm:$0xff]
    %v1631 = vld [vmem:[#allocation10 + $0x6f8] sm:$0xff]
    %v1632 = vld [vmem:[#allocation10 + $0x700] sm:$0xff]
    %v1633 = vld [vmem:[#allocation10 + $0x708] sm:$0xff]
    %v1634 = vld [vmem:[#allocation10 + $0x710] sm:$0xff]
    %v1635 = vld [vmem:[#allocation10 + $0x718] sm:$0xff]
    %v1636 = vld [vmem:[#allocation10 + $0x720] sm:$0xff]
    %v1637 = vld [vmem:[#allocation10 + $0x728] sm:$0xff]
    %v1638 = vld [vmem:[#allocation10 + $0x730] sm:$0xff]
    %v1639 = vld [vmem:[#allocation10 + $0x738] sm:$0xff]
    %v1640 = vld [vmem:[#allocation10 + $0x740] sm:$0xff]
    %v1641 = vld [vmem:[#allocation10 + $0x748] sm:$0xff]
    %v1642 = vld [vmem:[#allocation10 + $0x750] sm:$0xff]
    %v1643 = vld [vmem:[#allocation10 + $0x758] sm:$0xff]
    %v1644 = vld [vmem:[#allocation10 + $0x760] sm:$0xff]
    %v1645 = vld [vmem:[#allocation10 + $0x768] sm:$0xff]
    %v1646 = vld [vmem:[#allocation10 + $0x770] sm:$0xff]
    %v1647 = vld [vmem:[#allocation10 + $0x778] sm:$0xff]
    %v1648 = vld [vmem:[#allocation10 + $0x780] sm:$0xff]
    %v1649 = vld [vmem:[#allocation10 + $0x788] sm:$0xff]
    %v1650 = vld [vmem:[#allocation10 + $0x790] sm:$0xff]
    %v1651 = vld [vmem:[#allocation10 + $0x798] sm:$0xff]
    %v1652 = vld [vmem:[#allocation10 + $0x7a0] sm:$0xff]
    %v1653 = vld [vmem:[#allocation10 + $0x7a8] sm:$0xff]
    %v1654 = vld [vmem:[#allocation10 + $0x7b0] sm:$0xff]
    %v1655 = vld [vmem:[#allocation10 + $0x7b8] sm:$0xff]
    %v1656 = vld [vmem:[#allocation10 + $0x7c0] sm:$0xff]
    %v1657 = vld [vmem:[#allocation10 + $0x7c8] sm:$0xff]
    %v1658 = vld [vmem:[#allocation10 + $0x7d0] sm:$0xff]
    %v1659 = vld [vmem:[#allocation10 + $0x7d8] sm:$0xff]
    %v1660 = vld [vmem:[#allocation10 + $0x7e0] sm:$0xff]
    %v1661 = vld [vmem:[#allocation10 + $0x7e8] sm:$0xff]
    %v1662 = vld [vmem:[#allocation10 + $0x7f0] sm:$0xff]
    %v1663 = vld [vmem:[#allocation10 + $0x7f8] sm:$0xff]
    %v1792 = vunpack.c.l.b16 %v1536
    %v1793 = vunpack.c.h.b16 %v1536
    %v1794 = vunpack.c.l.b16 %v1537
    %v1795 = vunpack.c.h.b16 %v1537
    %v1796 = vunpack.c.l.b16 %v1538
    %v1797 = vunpack.c.h.b16 %v1538
    %v1798 = vunpack.c.l.b16 %v1539
    %v1799 = vunpack.c.h.b16 %v1539
    %v1800 = vunpack.c.l.b16 %v1540
    %v1801 = vunpack.c.h.b16 %v1540
    %v1802 = vunpack.c.l.b16 %v1541
    %v1803 = vunpack.c.h.b16 %v1541
    %v1804 = vunpack.c.l.b16 %v1542
    %v1805 = vunpack.c.h.b16 %v1542
    %v1806 = vunpack.c.l.b16 %v1543
    %v1807 = vunpack.c.h.b16 %v1543
    %v1808 = vunpack.c.l.b16 %v1544
    %v1809 = vunpack.c.h.b16 %v1544
    %v1810 = vunpack.c.l.b16 %v1545
    %v1811 = vunpack.c.h.b16 %v1545
    %v1812 = vunpack.c.l.b16 %v1546
    %v1813 = vunpack.c.h.b16 %v1546
    %v1814 = vunpack.c.l.b16 %v1547
    %v1815 = vunpack.c.h.b16 %v1547
    %v1816 = vunpack.c.l.b16 %v1548
    %v1817 = vunpack.c.h.b16 %v1548
    %v1818 = vunpack.c.l.b16 %v1549
    %v1819 = vunpack.c.h.b16 %v1549
    %v1820 = vunpack.c.l.b16 %v1550
    %v1821 = vunpack.c.h.b16 %v1550
    %v1822 = vunpack.c.l.b16 %v1551
    %v1823 = vunpack.c.h.b16 %v1551
    %v1824 = vunpack.c.l.b16 %v1552
    %v1825 = vunpack.c.h.b16 %v1552
    %v1826 = vunpack.c.l.b16 %v1553
    %v1827 = vunpack.c.h.b16 %v1553
    %v1828 = vunpack.c.l.b16 %v1554
    %v1829 = vunpack.c.h.b16 %v1554
    %v1830 = vunpack.c.l.b16 %v1555
    %v1831 = vunpack.c.h.b16 %v1555
    %v1832 = vunpack.c.l.b16 %v1556
    %v1833 = vunpack.c.h.b16 %v1556
    %v1834 = vunpack.c.l.b16 %v1557
    %v1835 = vunpack.c.h.b16 %v1557
    %v1836 = vunpack.c.l.b16 %v1558
    %v1837 = vunpack.c.h.b16 %v1558
    %v1838 = vunpack.c.l.b16 %v1559
    %v1839 = vunpack.c.h.b16 %v1559
    %v1840 = vunpack.c.l.b16 %v1560
    %v1841 = vunpack.c.h.b16 %v1560
    %v1842 = vunpack.c.l.b16 %v1561
    %v1843 = vunpack.c.h.b16 %v1561
    %v1844 = vunpack.c.l.b16 %v1562
    %v1845 = vunpack.c.h.b16 %v1562
    %v1846 = vunpack.c.l.b16 %v1563
    %v1847 = vunpack.c.h.b16 %v1563
    %v1848 = vunpack.c.l.b16 %v1564
    %v1849 = vunpack.c.h.b16 %v1564
    %v1850 = vunpack.c.l.b16 %v1565
    %v1851 = vunpack.c.h.b16 %v1565
    %v1852 = vunpack.c.l.b16 %v1566
    %v1853 = vunpack.c.h.b16 %v1566
    %v1854 = vunpack.c.l.b16 %v1567
    %v1855 = vunpack.c.h.b16 %v1567
    %v1856 = vunpack.c.l.b16 %v1568
    %v1857 = vunpack.c.h.b16 %v1568
    %v1858 = vunpack.c.l.b16 %v1569
    %v1859 = vunpack.c.h.b16 %v1569
    %v1860 = vunpack.c.l.b16 %v1570
    %v1861 = vunpack.c.h.b16 %v1570
    %v1862 = vunpack.c.l.b16 %v1571
    %v1863 = vunpack.c.h.b16 %v1571
    %v1864 = vunpack.c.l.b16 %v1572
    %v1865 = vunpack.c.h.b16 %v1572
    %v1866 = vunpack.c.l.b16 %v1573
    %v1867 = vunpack.c.h.b16 %v1573
    %v1868 = vunpack.c.l.b16 %v1574
    %v1869 = vunpack.c.h.b16 %v1574
    %v1870 = vunpack.c.l.b16 %v1575
    %v1871 = vunpack.c.h.b16 %v1575
    %v1872 = vunpack.c.l.b16 %v1576
    %v1873 = vunpack.c.h.b16 %v1576
    %v1874 = vunpack.c.l.b16 %v1577
    %v1875 = vunpack.c.h.b16 %v1577
    %v1876 = vunpack.c.l.b16 %v1578
    %v1877 = vunpack.c.h.b16 %v1578
    %v1878 = vunpack.c.l.b16 %v1579
    %v1879 = vunpack.c.h.b16 %v1579
    %v1880 = vunpack.c.l.b16 %v1580
    %v1881 = vunpack.c.h.b16 %v1580
    %v1882 = vunpack.c.l.b16 %v1581
    %v1883 = vunpack.c.h.b16 %v1581
    %v1884 = vunpack.c.l.b16 %v1582
    %v1885 = vunpack.c.h.b16 %v1582
    %v1886 = vunpack.c.l.b16 %v1583
    %v1887 = vunpack.c.h.b16 %v1583
    %v1888 = vunpack.c.l.b16 %v1584
    %v1889 = vunpack.c.h.b16 %v1584
    %v1890 = vunpack.c.l.b16 %v1585
    %v1891 = vunpack.c.h.b16 %v1585
    %v1892 = vunpack.c.l.b16 %v1586
    %v1893 = vunpack.c.h.b16 %v1586
    %v1894 = vunpack.c.l.b16 %v1587
    %v1895 = vunpack.c.h.b16 %v1587
    %v1896 = vunpack.c.l.b16 %v1588
    %v1897 = vunpack.c.h.b16 %v1588
    %v1898 = vunpack.c.l.b16 %v1589
    %v1899 = vunpack.c.h.b16 %v1589
    %v1900 = vunpack.c.l.b16 %v1590
    %v1901 = vunpack.c.h.b16 %v1590
    %v1902 = vunpack.c.l.b16 %v1591
    %v1903 = vunpack.c.h.b16 %v1591
    %v1904 = vunpack.c.l.b16 %v1592
    %v1905 = vunpack.c.h.b16 %v1592
    %v1906 = vunpack.c.l.b16 %v1593
    %v1907 = vunpack.c.h.b16 %v1593
    %v1908 = vunpack.c.l.b16 %v1594
    %v1909 = vunpack.c.h.b16 %v1594
    %v1910 = vunpack.c.l.b16 %v1595
    %v1911 = vunpack.c.h.b16 %v1595
    %v1912 = vunpack.c.l.b16 %v1596
    %v1913 = vunpack.c.h.b16 %v1596
    %v1914 = vunpack.c.l.b16 %v1597
    %v1915 = vunpack.c.h.b16 %v1597
    %v1916 = vunpack.c.l.b16 %v1598
    %v1917 = vunpack.c.h.b16 %v1598
    %v1918 = vunpack.c.l.b16 %v1599
    %v1919 = vunpack.c.h.b16 %v1599
    %v1920 = vunpack.c.l.b16 %v1600
    %v1921 = vunpack.c.h.b16 %v1600
    %v1922 = vunpack.c.l.b16 %v1601
    %v1923 = vunpack.c.h.b16 %v1601
    %v1924 = vunpack.c.l.b16 %v1602
    %v1925 = vunpack.c.h.b16 %v1602
    %v1926 = vunpack.c.l.b16 %v1603
    %v1927 = vunpack.c.h.b16 %v1603
    %v1928 = vunpack.c.l.b16 %v1604
    %v1929 = vunpack.c.h.b16 %v1604
    %v1930 = vunpack.c.l.b16 %v1605
    %v1931 = vunpack.c.h.b16 %v1605
    %v1932 = vunpack.c.l.b16 %v1606
    %v1933 = vunpack.c.h.b16 %v1606
    %v1934 = vunpack.c.l.b16 %v1607
    %v1935 = vunpack.c.h.b16 %v1607
    %v1936 = vunpack.c.l.b16 %v1608
    %v1937 = vunpack.c.h.b16 %v1608
    %v1938 = vunpack.c.l.b16 %v1609
    %v1939 = vunpack.c.h.b16 %v1609
    %v1940 = vunpack.c.l.b16 %v1610
    %v1941 = vunpack.c.h.b16 %v1610
    %v1942 = vunpack.c.l.b16 %v1611
    %v1943 = vunpack.c.h.b16 %v1611
    %v1944 = vunpack.c.l.b16 %v1612
    %v1945 = vunpack.c.h.b16 %v1612
    %v1946 = vunpack.c.l.b16 %v1613
    %v1947 = vunpack.c.h.b16 %v1613
    %v1948 = vunpack.c.l.b16 %v1614
    %v1949 = vunpack.c.h.b16 %v1614
    %v1950 = vunpack.c.l.b16 %v1615
    %v1951 = vunpack.c.h.b16 %v1615
    %v1952 = vunpack.c.l.b16 %v1616
    %v1953 = vunpack.c.h.b16 %v1616
    %v1954 = vunpack.c.l.b16 %v1617
    %v1955 = vunpack.c.h.b16 %v1617
    %v1956 = vunpack.c.l.b16 %v1618
    %v1957 = vunpack.c.h.b16 %v1618
    %v1958 = vunpack.c.l.b16 %v1619
    %v1959 = vunpack.c.h.b16 %v1619
    %v1960 = vunpack.c.l.b16 %v1620
    %v1961 = vunpack.c.h.b16 %v1620
    %v1962 = vunpack.c.l.b16 %v1621
    %v1963 = vunpack.c.h.b16 %v1621
    %v1964 = vunpack.c.l.b16 %v1622
    %v1965 = vunpack.c.h.b16 %v1622
    %v1966 = vunpack.c.l.b16 %v1623
    %v1967 = vunpack.c.h.b16 %v1623
    %v1968 = vunpack.c.l.b16 %v1624
    %v1969 = vunpack.c.h.b16 %v1624
    %v1970 = vunpack.c.l.b16 %v1625
    %v1971 = vunpack.c.h.b16 %v1625
    %v1972 = vunpack.c.l.b16 %v1626
    %v1973 = vunpack.c.h.b16 %v1626
    %v1974 = vunpack.c.l.b16 %v1627
    %v1975 = vunpack.c.h.b16 %v1627
    %v1976 = vunpack.c.l.b16 %v1628
    %v1977 = vunpack.c.h.b16 %v1628
    %v1978 = vunpack.c.l.b16 %v1629
    %v1979 = vunpack.c.h.b16 %v1629
    %v1980 = vunpack.c.l.b16 %v1630
    %v1981 = vunpack.c.h.b16 %v1630
    %v1982 = vunpack.c.l.b16 %v1631
    %v1983 = vunpack.c.h.b16 %v1631
    %v1984 = vunpack.c.l.b16 %v1632
    %v1985 = vunpack.c.h.b16 %v1632
    %v1986 = vunpack.c.l.b16 %v1633
    %v1987 = vunpack.c.h.b16 %v1633
    %v1988 = vunpack.c.l.b16 %v1634
    %v1989 = vunpack.c.h.b16 %v1634
    %v1990 = vunpack.c.l.b16 %v1635
    %v1991 = vunpack.c.h.b16 %v1635
    %v1992 = vunpack.c.l.b16 %v1636
    %v1993 = vunpack.c.h.b16 %v1636
    %v1994 = vunpack.c.l.b16 %v1637
    %v1995 = vunpack.c.h.b16 %v1637
    %v1996 = vunpack.c.l.b16 %v1638
    %v1997 = vunpack.c.h.b16 %v1638
    %v1998 = vunpack.c.l.b16 %v1639
    %v1999 = vunpack.c.h.b16 %v1639
    %v2000 = vunpack.c.l.b16 %v1640
    %v2001 = vunpack.c.h.b16 %v1640
    %v2002 = vunpack.c.l.b16 %v1641
    %v2003 = vunpack.c.h.b16 %v1641
    %v2004 = vunpack.c.l.b16 %v1642
    %v2005 = vunpack.c.h.b16 %v1642
    %v2006 = vunpack.c.l.b16 %v1643
    %v2007 = vunpack.c.h.b16 %v1643
    %v2008 = vunpack.c.l.b16 %v1644
    %v2009 = vunpack.c.h.b16 %v1644
    %v2010 = vunpack.c.l.b16 %v1645
    %v2011 = vunpack.c.h.b16 %v1645
    %v2012 = vunpack.c.l.b16 %v1646
    %v2013 = vunpack.c.h.b16 %v1646
    %v2014 = vunpack.c.l.b16 %v1647
    %v2015 = vunpack.c.h.b16 %v1647
    %v2016 = vunpack.c.l.b16 %v1648
    %v2017 = vunpack.c.h.b16 %v1648
    %v2018 = vunpack.c.l.b16 %v1649
    %v2019 = vunpack.c.h.b16 %v1649
    %v2020 = vunpack.c.l.b16 %v1650
    %v2021 = vunpack.c.h.b16 %v1650
    %v2022 = vunpack.c.l.b16 %v1651
    %v2023 = vunpack.c.h.b16 %v1651
    %v2024 = vunpack.c.l.b16 %v1652
    %v2025 = vunpack.c.h.b16 %v1652
    %v2026 = vunpack.c.l.b16 %v1653
    %v2027 = vunpack.c.h.b16 %v1653
    %v2028 = vunpack.c.l.b16 %v1654
    %v2029 = vunpack.c.h.b16 %v1654
    %v2030 = vunpack.c.l.b16 %v1655
    %v2031 = vunpack.c.h.b16 %v1655
    %v2032 = vunpack.c.l.b16 %v1656
    %v2033 = vunpack.c.h.b16 %v1656
    %v2034 = vunpack.c.l.b16 %v1657
    %v2035 = vunpack.c.h.b16 %v1657
    %v2036 = vunpack.c.l.b16 %v1658
    %v2037 = vunpack.c.h.b16 %v1658
    %v2038 = vunpack.c.l.b16 %v1659
    %v2039 = vunpack.c.h.b16 %v1659
    %v2040 = vunpack.c.l.b16 %v1660
    %v2041 = vunpack.c.h.b16 %v1660
    %v2042 = vunpack.c.l.b16 %v1661
    %v2043 = vunpack.c.h.b16 %v1661
    %v2044 = vunpack.c.l.b16 %v1662
    %v2045 = vunpack.c.h.b16 %v1662
    %v2046 = vunpack.c.l.b16 %v1663
    %v2047 = vunpack.c.h.b16 %v1663
    %v2048 = vpack.c.b16 %v1796, %v1792
    %v2049 = vpack.c.b16 %v1797, %v1793
    %v2050 = vpack.c.b16 %v1798, %v1794
    %v2051 = vpack.c.b16 %v1799, %v1795
    %v2052 = vpack.c.b16 %v1804, %v1800
    %v2053 = vpack.c.b16 %v1805, %v1801
    %v2054 = vpack.c.b16 %v1806, %v1802
    %v2055 = vpack.c.b16 %v1807, %v1803
    %v2056 = vpack.c.b16 %v1812, %v1808
    %v2057 = vpack.c.b16 %v1813, %v1809
    %v2058 = vpack.c.b16 %v1814, %v1810
    %v2059 = vpack.c.b16 %v1815, %v1811
    %v2060 = vpack.c.b16 %v1820, %v1816
    %v2061 = vpack.c.b16 %v1821, %v1817
    %v2062 = vpack.c.b16 %v1822, %v1818
    %v2063 = vpack.c.b16 %v1823, %v1819
    %v2064 = vpack.c.b16 %v1828, %v1824
    %v2065 = vpack.c.b16 %v1829, %v1825
    %v2066 = vpack.c.b16 %v1830, %v1826
    %v2067 = vpack.c.b16 %v1831, %v1827
    %v2068 = vpack.c.b16 %v1836, %v1832
    %v2069 = vpack.c.b16 %v1837, %v1833
    %v2070 = vpack.c.b16 %v1838, %v1834
    %v2071 = vpack.c.b16 %v1839, %v1835
    %v2072 = vpack.c.b16 %v1844, %v1840
    %v2073 = vpack.c.b16 %v1845, %v1841
    %v2074 = vpack.c.b16 %v1846, %v1842
    %v2075 = vpack.c.b16 %v1847, %v1843
    %v2076 = vpack.c.b16 %v1852, %v1848
    %v2077 = vpack.c.b16 %v1853, %v1849
    %v2078 = vpack.c.b16 %v1854, %v1850
    %v2079 = vpack.c.b16 %v1855, %v1851
    %v2080 = vpack.c.b16 %v1860, %v1856
    %v2081 = vpack.c.b16 %v1861, %v1857
    %v2082 = vpack.c.b16 %v1862, %v1858
    %v2083 = vpack.c.b16 %v1863, %v1859
    %v2084 = vpack.c.b16 %v1868, %v1864
    %v2085 = vpack.c.b16 %v1869, %v1865
    %v2086 = vpack.c.b16 %v1870, %v1866
    %v2087 = vpack.c.b16 %v1871, %v1867
    %v2088 = vpack.c.b16 %v1876, %v1872
    %v2089 = vpack.c.b16 %v1877, %v1873
    %v2090 = vpack.c.b16 %v1878, %v1874
    %v2091 = vpack.c.b16 %v1879, %v1875
    %v2092 = vpack.c.b16 %v1884, %v1880
    %v2093 = vpack.c.b16 %v1885, %v1881
    %v2094 = vpack.c.b16 %v1886, %v1882
    %v2095 = vpack.c.b16 %v1887, %v1883
    %v2096 = vpack.c.b16 %v1892, %v1888
    %v2097 = vpack.c.b16 %v1893, %v1889
    %v2098 = vpack.c.b16 %v1894, %v1890
    %v2099 = vpack.c.b16 %v1895, %v1891
    %v2100 = vpack.c.b16 %v1900, %v1896
    %v2101 = vpack.c.b16 %v1901, %v1897
    %v2102 = vpack.c.b16 %v1902, %v1898
    %v2103 = vpack.c.b16 %v1903, %v1899
    %v2104 = vpack.c.b16 %v1908, %v1904
    %v2105 = vpack.c.b16 %v1909, %v1905
    %v2106 = vpack.c.b16 %v1910, %v1906
    %v2107 = vpack.c.b16 %v1911, %v1907
    %v2108 = vpack.c.b16 %v1916, %v1912
    %v2109 = vpack.c.b16 %v1917, %v1913
    %v2110 = vpack.c.b16 %v1918, %v1914
    %v2111 = vpack.c.b16 %v1919, %v1915
    %v2112 = vpack.c.b16 %v1924, %v1920
    %v2113 = vpack.c.b16 %v1925, %v1921
    %v2114 = vpack.c.b16 %v1926, %v1922
    %v2115 = vpack.c.b16 %v1927, %v1923
    %v2116 = vpack.c.b16 %v1932, %v1928
    %v2117 = vpack.c.b16 %v1933, %v1929
    %v2118 = vpack.c.b16 %v1934, %v1930
    %v2119 = vpack.c.b16 %v1935, %v1931
    %v2120 = vpack.c.b16 %v1940, %v1936
    %v2121 = vpack.c.b16 %v1941, %v1937
    %v2122 = vpack.c.b16 %v1942, %v1938
    %v2123 = vpack.c.b16 %v1943, %v1939
    %v2124 = vpack.c.b16 %v1948, %v1944
    %v2125 = vpack.c.b16 %v1949, %v1945
    %v2126 = vpack.c.b16 %v1950, %v1946
    %v2127 = vpack.c.b16 %v1951, %v1947
    %v2128 = vpack.c.b16 %v1956, %v1952
    %v2129 = vpack.c.b16 %v1957, %v1953
    %v2130 = vpack.c.b16 %v1958, %v1954
    %v2131 = vpack.c.b16 %v1959, %v1955
    %v2132 = vpack.c.b16 %v1964, %v1960
    %v2133 = vpack.c.b16 %v1965, %v1961
    %v2134 = vpack.c.b16 %v1966, %v1962
    %v2135 = vpack.c.b16 %v1967, %v1963
    %v2136 = vpack.c.b16 %v1972, %v1968
    %v2137 = vpack.c.b16 %v1973, %v1969
    %v2138 = vpack.c.b16 %v1974, %v1970
    %v2139 = vpack.c.b16 %v1975, %v1971
    %v2140 = vpack.c.b16 %v1980, %v1976
    %v2141 = vpack.c.b16 %v1981, %v1977
    %v2142 = vpack.c.b16 %v1982, %v1978
    %v2143 = vpack.c.b16 %v1983, %v1979
    %v2144 = vpack.c.b16 %v1988, %v1984
    %v2145 = vpack.c.b16 %v1989, %v1985
    %v2146 = vpack.c.b16 %v1990, %v1986
    %v2147 = vpack.c.b16 %v1991, %v1987
    %v2148 = vpack.c.b16 %v1996, %v1992
    %v2149 = vpack.c.b16 %v1997, %v1993
    %v2150 = vpack.c.b16 %v1998, %v1994
    %v2151 = vpack.c.b16 %v1999, %v1995
    %v2152 = vpack.c.b16 %v2004, %v2000
    %v2153 = vpack.c.b16 %v2005, %v2001
    %v2154 = vpack.c.b16 %v2006, %v2002
    %v2155 = vpack.c.b16 %v2007, %v2003
    %v2156 = vpack.c.b16 %v2012, %v2008
    %v2157 = vpack.c.b16 %v2013, %v2009
    %v2158 = vpack.c.b16 %v2014, %v2010
    %v2159 = vpack.c.b16 %v2015, %v2011
    %v2160 = vpack.c.b16 %v2020, %v2016
    %v2161 = vpack.c.b16 %v2021, %v2017
    %v2162 = vpack.c.b16 %v2022, %v2018
    %v2163 = vpack.c.b16 %v2023, %v2019
    %v2164 = vpack.c.b16 %v2028, %v2024
    %v2165 = vpack.c.b16 %v2029, %v2025
    %v2166 = vpack.c.b16 %v2030, %v2026
    %v2167 = vpack.c.b16 %v2031, %v2027
    %v2168 = vpack.c.b16 %v2036, %v2032
    %v2169 = vpack.c.b16 %v2037, %v2033
    %v2170 = vpack.c.b16 %v2038, %v2034
    %v2171 = vpack.c.b16 %v2039, %v2035
    %v2172 = vpack.c.b16 %v2044, %v2040
    %v2173 = vpack.c.b16 %v2045, %v2041
    %v2174 = vpack.c.b16 %v2046, %v2042
    %v2175 = vpack.c.b16 %v2047, %v2043
    %2304 = vmatprep.subr.bf16.mxu0 %v2049
    %2305 = vmatpush1.bf16.msra.mxu0 %v2048
    %2306 = vmatprep.subr.bf16.mxu0 %v2053
    %2307 = vmatpush1.bf16.msra.mxu0 %v2052
    %2308 = vmatprep.subr.bf16.mxu0 %v2057
    %2309 = vmatpush1.bf16.msra.mxu0 %v2056
    %2310 = vmatprep.subr.bf16.mxu0 %v2061
    %2311 = vmatpush1.bf16.msra.mxu0 %v2060
    %2312 = vmatprep.subr.bf16.mxu0 %v2065
    %2313 = vmatpush1.bf16.msra.mxu0 %v2064
    %2314 = vmatprep.subr.bf16.mxu0 %v2069
    %2315 = vmatpush1.bf16.msra.mxu0 %v2068
    %2316 = vmatprep.subr.bf16.mxu0 %v2073
    %2317 = vmatpush1.bf16.msra.mxu0 %v2072
    %2318 = vmatprep.subr.bf16.mxu0 %v2077
    %2319 = vmatpush1.bf16.msra.mxu0 %v2076
    %2320 = vmatprep.subr.bf16.mxu0 %v2081
    %2321 = vmatpush1.bf16.msra.mxu0 %v2080
    %2322 = vmatprep.subr.bf16.mxu0 %v2085
    %2323 = vmatpush1.bf16.msra.mxu0 %v2084
    %2324 = vmatprep.subr.bf16.mxu0 %v2089
    %2325 = vmatpush1.bf16.msra.mxu0 %v2088
    %2326 = vmatprep.subr.bf16.mxu0 %v2093
    %2327 = vmatpush1.bf16.msra.mxu0 %v2092
    %2328 = vmatprep.subr.bf16.mxu0 %v2097
    %2329 = vmatpush1.bf16.msra.mxu0 %v2096
    %2330 = vmatprep.subr.bf16.mxu0 %v2101
    %2331 = vmatpush1.bf16.msra.mxu0 %v2100
    %2332 = vmatprep.subr.bf16.mxu0 %v2105
    %2333 = vmatpush1.bf16.msra.mxu0 %v2104
    %2334 = vmatprep.subr.bf16.mxu0 %v2109
    %2335 = vmatpush1.bf16.msra.mxu0 %v2108
    %2336 = vmatprep.mubr.bf16.mxu0 %v1505
    %2337 = vmatmul.mubr.bf16.gmra.mrb[0].mxu0 %v1504
    %v2338 = vpop.f32.mrb[0].mxu0
    %v2339 = vadd.f32 0.0, %v2338
    %v2340 = vpop.f32.mrb[0].mxu0
    %v2341 = vadd.f32 0.0, %v2340
    %v2342 = vpop.f32.mrb[0].mxu0
    %v2343 = vadd.f32 0.0, %v2342
    %v2344 = vpop.f32.mrb[0].mxu0
    %v2345 = vadd.f32 0.0, %v2344
    %2346 = vmatprep.mubr.bf16.mxu0 %v1509
    %2347 = vmatmul.mubr.bf16.gmra.mrb[0].mxu0 %v1508
    %v2348 = vpop.f32.mrb[0].mxu0
    %v2349 = vadd.f32 0.0, %v2348
    %v2350 = vpop.f32.mrb[0].mxu0
    %v2351 = vadd.f32 0.0, %v2350
    %v2352 = vpop.f32.mrb[0].mxu0
    %v2353 = vadd.f32 0.0, %v2352
    %v2354 = vpop.f32.mrb[0].mxu0
    %v2355 = vadd.f32 0.0, %v2354
    %2356 = vmatprep.mubr.bf16.mxu0 %v1513
    %2357 = vmatmul.mubr.bf16.gmra.mrb[0].mxu0 %v1512
    %v2358 = vpop.f32.mrb[0].mxu0
    %v2359 = vadd.f32 0.0, %v2358
    %v2360 = vpop.f32.mrb[0].mxu0
    %v2361 = vadd.f32 0.0, %v2360
    %v2362 = vpop.f32.mrb[0].mxu0
    %v2363 = vadd.f32 0.0, %v2362
    %v2364 = vpop.f32.mrb[0].mxu0
    %v2365 = vadd.f32 0.0, %v2364
    %2366 = vmatprep.mubr.bf16.mxu0 %v1517
    %2367 = vmatmul.mubr.bf16.gmra.mrb[0].mxu0 %v1516
    %v2368 = vpop.f32.mrb[0].mxu0
    %v2369 = vadd.f32 0.0, %v2368
    %v2370 = vpop.f32.mrb[0].mxu0
    %v2371 = vadd.f32 0.0, %v2370
    %v2372 = vpop.f32.mrb[0].mxu0
    %v2373 = vadd.f32 0.0, %v2372
    %v2374 = vpop.f32.mrb[0].mxu0
    %v2375 = vadd.f32 0.0, %v2374
    %2376 = vmatprep.mubr.bf16.mxu0 %v1521
    %2377 = vmatmul.mubr.bf16.gmra.mrb[0].mxu0 %v1520
    %v2378 = vpop.f32.mrb[0].mxu0
    %v2379 = vadd.f32 0.0, %v2378
    %v2380 = vpop.f32.mrb[0].mxu0
    %v2381 = vadd.f32 0.0, %v2380
    %v2382 = vpop.f32.mrb[0].mxu0
    %v2383 = vadd.f32 0.0, %v2382
    %v2384 = vpop.f32.mrb[0].mxu0
    %v2385 = vadd.f32 0.0, %v2384
    %2386 = vmatprep.mubr.bf16.mxu0 %v1525
    %2387 = vmatmul.mubr.bf16.gmra.mrb[0].mxu0 %v1524
    %v2388 = vpop.f32.mrb[0].mxu0
    %v2389 = vadd.f32 0.0, %v2388
    %v2390 = vpop.f32.mrb[0].mxu0
    %v2391 = vadd.f32 0.0, %v2390
    %v2392 = vpop.f32.mrb[0].mxu0
    %v2393 = vadd.f32 0.0, %v2392
    %v2394 = vpop.f32.mrb[0].mxu0
    %v2395 = vadd.f32 0.0, %v2394
    %2396 = vmatprep.mubr.bf16.mxu0 %v1529
    %2397 = vmatmul.mubr.bf16.gmra.mrb[0].mxu0 %v1528
    %v2398 = vpop.f32.mrb[0].mxu0
    %v2399 = vadd.f32 0.0, %v2398
    %v2400 = vpop.f32.mrb[0].mxu0
    %v2401 = vadd.f32 0.0, %v2400
    %v2402 = vpop.f32.mrb[0].mxu0
    %v2403 = vadd.f32 0.0, %v2402
    %v2404 = vpop.f32.mrb[0].mxu0
    %v2405 = vadd.f32 0.0, %v2404
    %2406 = vmatprep.mubr.bf16.mxu0 %v1533
    %2407 = vmatmul.mubr.bf16.gmra.mrb[0].mxu0 %v1532
    %v2408 = vpop.f32.mrb[0].mxu0
    %v2409 = vadd.f32 0.0, %v2408
    %v2410 = vpop.f32.mrb[0].mxu0
    %v2411 = vadd.f32 0.0, %v2410
    %v2412 = vpop.f32.mrb[0].mxu0
    %v2413 = vadd.f32 0.0, %v2412
    %v2414 = vpop.f32.mrb[0].mxu0
    %v2415 = vadd.f32 0.0, %v2414
    %2416 = vdwg.mxu0
    %2417 = vmatprep.subr.bf16.mxu0 %v2113
    %2418 = vmatpush1.bf16.msra.mxu0 %v2112
    %2419 = vmatprep.subr.bf16.mxu0 %v2117
    %2420 = vmatpush1.bf16.msra.mxu0 %v2116
    %2421 = vmatprep.subr.bf16.mxu0 %v2121
    %2422 = vmatpush1.bf16.msra.mxu0 %v2120
    %2423 = vmatprep.subr.bf16.mxu0 %v2125
    %2424 = vmatpush1.bf16.msra.mxu0 %v2124
    %2425 = vmatprep.subr.bf16.mxu0 %v2129
    %2426 = vmatpush1.bf16.msra.mxu0 %v2128
    %2427 = vmatprep.subr.bf16.mxu0 %v2133
    %2428 = vmatpush1.bf16.msra.mxu0 %v2132
    %2429 = vmatprep.subr.bf16.mxu0 %v2137
    %2430 = vmatpush1.bf16.msra.mxu0 %v2136
    %2431 = vmatprep.subr.bf16.mxu0 %v2141
    %2432 = vmatpush1.bf16.msra.mxu0 %v2140
    %2433 = vmatprep.subr.bf16.mxu0 %v2145
    %2434 = vmatpush1.bf16.msra.mxu0 %v2144
    %2435 = vmatprep.subr.bf16.mxu0 %v2149
    %2436 = vmatpush1.bf16.msra.mxu0 %v2148
    %2437 = vmatprep.subr.bf16.mxu0 %v2153
    %2438 = vmatpush1.bf16.msra.mxu0 %v2152
    %2439 = vmatprep.subr.bf16.mxu0 %v2157
    %2440 = vmatpush1.bf16.msra.mxu0 %v2156
    %2441 = vmatprep.subr.bf16.mxu0 %v2161
    %2442 = vmatpush1.bf16.msra.mxu0 %v2160
    %2443 = vmatprep.subr.bf16.mxu0 %v2165
    %2444 = vmatpush1.bf16.msra.mxu0 %v2164
    %2445 = vmatprep.subr.bf16.mxu0 %v2169
    %2446 = vmatpush1.bf16.msra.mxu0 %v2168
    %2447 = vmatprep.subr.bf16.mxu0 %v2173
    %2448 = vmatpush1.bf16.msra.mxu0 %v2172
    %2449 = vmatprep.mubr.bf16.mxu0 %v1507
    %2450 = vmatmul.mubr.bf16.gmra.mrb[0].mxu0 %v1506
    %v2451 = vpop.f32.mrb[0].mxu0
    %v2452 = vadd.f32 %v2339, %v2451
    %v2453 = vpop.f32.mrb[0].mxu0
    %v2454 = vadd.f32 %v2341, %v2453
    %v2455 = vpop.f32.mrb[0].mxu0
    %v2456 = vadd.f32 %v2343, %v2455
    %v2457 = vpop.f32.mrb[0].mxu0
    %v2458 = vadd.f32 %v2345, %v2457
    %2459 = vmatprep.mubr.bf16.mxu0 %v1511
    %2460 = vmatmul.mubr.bf16.gmra.mrb[0].mxu0 %v1510
    %v2461 = vpop.f32.mrb[0].mxu0
    %v2462 = vadd.f32 %v2349, %v2461
    %v2463 = vpop.f32.mrb[0].mxu0
    %v2464 = vadd.f32 %v2351, %v2463
    %v2465 = vpop.f32.mrb[0].mxu0
    %v2466 = vadd.f32 %v2353, %v2465
    %v2467 = vpop.f32.mrb[0].mxu0
    %v2468 = vadd.f32 %v2355, %v2467
    %2469 = vmatprep.mubr.bf16.mxu0 %v1515
    %2470 = vmatmul.mubr.bf16.gmra.mrb[0].mxu0 %v1514
    %v2471 = vpop.f32.mrb[0].mxu0
    %v2472 = vadd.f32 %v2359, %v2471
    %v2473 = vpop.f32.mrb[0].mxu0
    %v2474 = vadd.f32 %v2361, %v2473
    %v2475 = vpop.f32.mrb[0].mxu0
    %v2476 = vadd.f32 %v2363, %v2475
    %v2477 = vpop.f32.mrb[0].mxu0
    %v2478 = vadd.f32 %v2365, %v2477
    %2479 = vmatprep.mubr.bf16.mxu0 %v1519
    %2480 = vmatmul.mubr.bf16.gmra.mrb[0].mxu0 %v1518
    %v2481 = vpop.f32.mrb[0].mxu0
    %v2482 = vadd.f32 %v2369, %v2481
    %v2483 = vpop.f32.mrb[0].mxu0
    %v2484 = vadd.f32 %v2371, %v2483
    %v2485 = vpop.f32.mrb[0].mxu0
    %v2486 = vadd.f32 %v2373, %v2485
    %v2487 = vpop.f32.mrb[0].mxu0
    %v2488 = vadd.f32 %v2375, %v2487
    %2489 = vmatprep.mubr.bf16.mxu0 %v1523
    %2490 = vmatmul.mubr.bf16.gmra.mrb[0].mxu0 %v1522
    %v2491 = vpop.f32.mrb[0].mxu0
    %v2492 = vadd.f32 %v2379, %v2491
    %v2493 = vpop.f32.mrb[0].mxu0
    %v2494 = vadd.f32 %v2381, %v2493
    %v2495 = vpop.f32.mrb[0].mxu0
    %v2496 = vadd.f32 %v2383, %v2495
    %v2497 = vpop.f32.mrb[0].mxu0
    %v2498 = vadd.f32 %v2385, %v2497
    %2499 = vmatprep.mubr.bf16.mxu0 %v1527
    %2500 = vmatmul.mubr.bf16.gmra.mrb[0].mxu0 %v1526
    %v2501 = vpop.f32.mrb[0].mxu0
    %v2502 = vadd.f32 %v2389, %v2501
    %v2503 = vpop.f32.mrb[0].mxu0
    %v2504 = vadd.f32 %v2391, %v2503
    %v2505 = vpop.f32.mrb[0].mxu0
    %v2506 = vadd.f32 %v2393, %v2505
    %v2507 = vpop.f32.mrb[0].mxu0
    %v2508 = vadd.f32 %v2395, %v2507
    %2509 = vmatprep.mubr.bf16.mxu0 %v1531
    %2510 = vmatmul.mubr.bf16.gmra.mrb[0].mxu0 %v1530
    %v2511 = vpop.f32.mrb[0].mxu0
    %v2512 = vadd.f32 %v2399, %v2511
    %v2513 = vpop.f32.mrb[0].mxu0
    %v2514 = vadd.f32 %v2401, %v2513
    %v2515 = vpop.f32.mrb[0].mxu0
    %v2516 = vadd.f32 %v2403, %v2515
    %v2517 = vpop.f32.mrb[0].mxu0
    %v2518 = vadd.f32 %v2405, %v2517
    %2519 = vmatprep.mubr.bf16.mxu0 %v1535
    %2520 = vmatmul.mubr.bf16.gmra.mrb[0].mxu0 %v1534
    %v2521 = vpop.f32.mrb[0].mxu0
    %v2522 = vadd.f32 %v2409, %v2521
    %v2523 = vpop.f32.mrb[0].mxu0
    %v2524 = vadd.f32 %v2411, %v2523
    %v2525 = vpop.f32.mrb[0].mxu0
    %v2526 = vadd.f32 %v2413, %v2525
    %v2527 = vpop.f32.mrb[0].mxu0
    %v2528 = vadd.f32 %v2415, %v2527
    %2529 = vdwg.mxu0
    %2530 = vmatprep.subr.bf16.mxu0 %v2051
    %2531 = vmatpush1.bf16.msra.mxu0 %v2050
    %2532 = vmatprep.subr.bf16.mxu0 %v2055
    %2533 = vmatpush1.bf16.msra.mxu0 %v2054
    %2534 = vmatprep.subr.bf16.mxu0 %v2059
    %2535 = vmatpush1.bf16.msra.mxu0 %v2058
    %2536 = vmatprep.subr.bf16.mxu0 %v2063
    %2537 = vmatpush1.bf16.msra.mxu0 %v2062
    %2538 = vmatprep.subr.bf16.mxu0 %v2067
    %2539 = vmatpush1.bf16.msra.mxu0 %v2066
    %2540 = vmatprep.subr.bf16.mxu0 %v2071
    %2541 = vmatpush1.bf16.msra.mxu0 %v2070
    %2542 = vmatprep.subr.bf16.mxu0 %v2075
    %2543 = vmatpush1.bf16.msra.mxu0 %v2074
    %2544 = vmatprep.subr.bf16.mxu0 %v2079
    %2545 = vmatpush1.bf16.msra.mxu0 %v2078
    %2546 = vmatprep.subr.bf16.mxu0 %v2083
    %2547 = vmatpush1.bf16.msra.mxu0 %v2082
    %2548 = vmatprep.subr.bf16.mxu0 %v2087
    %2549 = vmatpush1.bf16.msra.mxu0 %v2086
    %2550 = vmatprep.subr.bf16.mxu0 %v2091
    %2551 = vmatpush1.bf16.msra.mxu0 %v2090
    %2552 = vmatprep.subr.bf16.mxu0 %v2095
    %2553 = vmatpush1.bf16.msra.mxu0 %v2094
    %2554 = vmatprep.subr.bf16.mxu0 %v2099
    %2555 = vmatpush1.bf16.msra.mxu0 %v2098
    %2556 = vmatprep.subr.bf16.mxu0 %v2103
    %2557 = vmatpush1.bf16.msra.mxu0 %v2102
    %2558 = vmatprep.subr.bf16.mxu0 %v2107
    %2559 = vmatpush1.bf16.msra.mxu0 %v2106
    %2560 = vmatprep.subr.bf16.mxu0 %v2111
    %2561 = vmatpush1.bf16.msra.mxu0 %v2110
    %2562 = vmatprep.mubr.bf16.mxu0 %v1505
    %2563 = vmatmul.mubr.bf16.gmra.mrb[0].mxu0 %v1504
    %v2564 = vpop.f32.mrb[0].mxu0
    %v2565 = vadd.f32 0.0, %v2564
    %v2566 = vpop.f32.mrb[0].mxu0
    %v2567 = vadd.f32 0.0, %v2566
    %v2568 = vpop.f32.mrb[0].mxu0
    %v2569 = vadd.f32 0.0, %v2568
    %v2570 = vpop.f32.mrb[0].mxu0
    %v2571 = vadd.f32 0.0, %v2570
    %2572 = vmatprep.mubr.bf16.mxu0 %v1509
    %2573 = vmatmul.mubr.bf16.gmra.mrb[0].mxu0 %v1508
    %v2574 = vpop.f32.mrb[0].mxu0
    %v2575 = vadd.f32 0.0, %v2574
    %v2576 = vpop.f32.mrb[0].mxu0
    %v2577 = vadd.f32 0.0, %v2576
    %v2578 = vpop.f32.mrb[0].mxu0
    %v2579 = vadd.f32 0.0, %v2578
    %v2580 = vpop.f32.mrb[0].mxu0
    %v2581 = vadd.f32 0.0, %v2580
    %2582 = vmatprep.mubr.bf16.mxu0 %v1513
    %2583 = vmatmul.mubr.bf16.gmra.mrb[0].mxu0 %v1512
    %v2584 = vpop.f32.mrb[0].mxu0
    %v2585 = vadd.f32 0.0, %v2584
    %v2586 = vpop.f32.mrb[0].mxu0
    %v2587 = vadd.f32 0.0, %v2586
    %v2588 = vpop.f32.mrb[0].mxu0
    %v2589 = vadd.f32 0.0, %v2588
    %v2590 = vpop.f32.mrb[0].mxu0
    %v2591 = vadd.f32 0.0, %v2590
    %2592 = vmatprep.mubr.bf16.mxu0 %v1517
    %2593 = vmatmul.mubr.bf16.gmra.mrb[0].mxu0 %v1516
    %v2594 = vpop.f32.mrb[0].mxu0
    %v2595 = vadd.f32 0.0, %v2594
    %v2596 = vpop.f32.mrb[0].mxu0
    %v2597 = vadd.f32 0.0, %v2596
    %v2598 = vpop.f32.mrb[0].mxu0
    %v2599 = vadd.f32 0.0, %v2598
    %v2600 = vpop.f32.mrb[0].mxu0
    %v2601 = vadd.f32 0.0, %v2600
    %2602 = vmatprep.mubr.bf16.mxu0 %v1521
    %2603 = vmatmul.mubr.bf16.gmra.mrb[0].mxu0 %v1520
    %v2604 = vpop.f32.mrb[0].mxu0
    %v2605 = vadd.f32 0.0, %v2604
    %v2606 = vpop.f32.mrb[0].mxu0
    %v2607 = vadd.f32 0.0, %v2606
    %v2608 = vpop.f32.mrb[0].mxu0
    %v2609 = vadd.f32 0.0, %v2608
    %v2610 = vpop.f32.mrb[0].mxu0
    %v2611 = vadd.f32 0.0, %v2610
    %2612 = vmatprep.mubr.bf16.mxu0 %v1525
    %2613 = vmatmul.mubr.bf16.gmra.mrb[0].mxu0 %v1524
    %v2614 = vpop.f32.mrb[0].mxu0
    %v2615 = vadd.f32 0.0, %v2614
    %v2616 = vpop.f32.mrb[0].mxu0
    %v2617 = vadd.f32 0.0, %v2616
    %v2618 = vpop.f32.mrb[0].mxu0
    %v2619 = vadd.f32 0.0, %v2618
    %v2620 = vpop.f32.mrb[0].mxu0
    %v2621 = vadd.f32 0.0, %v2620
    %2622 = vmatprep.mubr.bf16.mxu0 %v1529
    %2623 = vmatmul.mubr.bf16.gmra.mrb[0].mxu0 %v1528
    %v2624 = vpop.f32.mrb[0].mxu0
    %v2625 = vadd.f32 0.0, %v2624
    %v2626 = vpop.f32.mrb[0].mxu0
    %v2627 = vadd.f32 0.0, %v2626
    %v2628 = vpop.f32.mrb[0].mxu0
    %v2629 = vadd.f32 0.0, %v2628
    %v2630 = vpop.f32.mrb[0].mxu0
    %v2631 = vadd.f32 0.0, %v2630
    %2632 = vmatprep.mubr.bf16.mxu0 %v1533
    %2633 = vmatmul.mubr.bf16.gmra.mrb[0].mxu0 %v1532
    %v2634 = vpop.f32.mrb[0].mxu0
    %v2635 = vadd.f32 0.0, %v2634
    %v2636 = vpop.f32.mrb[0].mxu0
    %v2637 = vadd.f32 0.0, %v2636
    %v2638 = vpop.f32.mrb[0].mxu0
    %v2639 = vadd.f32 0.0, %v2638
    %v2640 = vpop.f32.mrb[0].mxu0
    %v2641 = vadd.f32 0.0, %v2640
    %2642 = vdwg.mxu0
    %2643 = vmatprep.subr.bf16.mxu0 %v2115
    %2644 = vmatpush1.bf16.msra.mxu0 %v2114
    %2645 = vmatprep.subr.bf16.mxu0 %v2119
    %2646 = vmatpush1.bf16.msra.mxu0 %v2118
    %2647 = vmatprep.subr.bf16.mxu0 %v2123
    %2648 = vmatpush1.bf16.msra.mxu0 %v2122
    %2649 = vmatprep.subr.bf16.mxu0 %v2127
    %2650 = vmatpush1.bf16.msra.mxu0 %v2126
    %2651 = vmatprep.subr.bf16.mxu0 %v2131
    %2652 = vmatpush1.bf16.msra.mxu0 %v2130
    %2653 = vmatprep.subr.bf16.mxu0 %v2135
    %2654 = vmatpush1.bf16.msra.mxu0 %v2134
    %2655 = vmatprep.subr.bf16.mxu0 %v2139
    %2656 = vmatpush1.bf16.msra.mxu0 %v2138
    %2657 = vmatprep.subr.bf16.mxu0 %v2143
    %2658 = vmatpush1.bf16.msra.mxu0 %v2142
    %2659 = vmatprep.subr.bf16.mxu0 %v2147
    %2660 = vmatpush1.bf16.msra.mxu0 %v2146
    %2661 = vmatprep.subr.bf16.mxu0 %v2151
    %2662 = vmatpush1.bf16.msra.mxu0 %v2150
    %2663 = vmatprep.subr.bf16.mxu0 %v2155
    %2664 = vmatpush1.bf16.msra.mxu0 %v2154
    %2665 = vmatprep.subr.bf16.mxu0 %v2159
    %2666 = vmatpush1.bf16.msra.mxu0 %v2158
    %2667 = vmatprep.subr.bf16.mxu0 %v2163
    %2668 = vmatpush1.bf16.msra.mxu0 %v2162
    %2669 = vmatprep.subr.bf16.mxu0 %v2167
    %2670 = vmatpush1.bf16.msra.mxu0 %v2166
    %2671 = vmatprep.subr.bf16.mxu0 %v2171
    %2672 = vmatpush1.bf16.msra.mxu0 %v2170
    %2673 = vmatprep.subr.bf16.mxu0 %v2175
    %2674 = vmatpush1.bf16.msra.mxu0 %v2174
    %2675 = vmatprep.mubr.bf16.mxu0 %v1507
    %2676 = vmatmul.mubr.bf16.gmra.mrb[0].mxu0 %v1506
    %v2677 = vpop.f32.mrb[0].mxu0
    %v2678 = vadd.f32 %v2565, %v2677
    %v2679 = vpop.f32.mrb[0].mxu0
    %v2680 = vadd.f32 %v2567, %v2679
    %v2681 = vpop.f32.mrb[0].mxu0
    %v2682 = vadd.f32 %v2569, %v2681
    %v2683 = vpop.f32.mrb[0].mxu0
    %v2684 = vadd.f32 %v2571, %v2683
    %2685 = vmatprep.mubr.bf16.mxu0 %v1511
    %2686 = vmatmul.mubr.bf16.gmra.mrb[0].mxu0 %v1510
    %v2687 = vpop.f32.mrb[0].mxu0
    %v2688 = vadd.f32 %v2575, %v2687
    %v2689 = vpop.f32.mrb[0].mxu0
    %v2690 = vadd.f32 %v2577, %v2689
    %v2691 = vpop.f32.mrb[0].mxu0
    %v2692 = vadd.f32 %v2579, %v2691
    %v2693 = vpop.f32.mrb[0].mxu0
    %v2694 = vadd.f32 %v2581, %v2693
    %2695 = vmatprep.mubr.bf16.mxu0 %v1515
    %2696 = vmatmul.mubr.bf16.gmra.mrb[0].mxu0 %v1514
    %v2697 = vpop.f32.mrb[0].mxu0
    %v2698 = vadd.f32 %v2585, %v2697
    %v2699 = vpop.f32.mrb[0].mxu0
    %v2700 = vadd.f32 %v2587, %v2699
    %v2701 = vpop.f32.mrb[0].mxu0
    %v2702 = vadd.f32 %v2589, %v2701
    %v2703 = vpop.f32.mrb[0].mxu0
    %v2704 = vadd.f32 %v2591, %v2703
    %2705 = vmatprep.mubr.bf16.mxu0 %v1519
    %2706 = vmatmul.mubr.bf16.gmra.mrb[0].mxu0 %v1518
    %v2707 = vpop.f32.mrb[0].mxu0
    %v2708 = vadd.f32 %v2595, %v2707
    %v2709 = vpop.f32.mrb[0].mxu0
    %v2710 = vadd.f32 %v2597, %v2709
    %v2711 = vpop.f32.mrb[0].mxu0
    %v2712 = vadd.f32 %v2599, %v2711
    %v2713 = vpop.f32.mrb[0].mxu0
    %v2714 = vadd.f32 %v2601, %v2713
    %2715 = vmatprep.mubr.bf16.mxu0 %v1523
    %2716 = vmatmul.mubr.bf16.gmra.mrb[0].mxu0 %v1522
    %v2717 = vpop.f32.mrb[0].mxu0
    %v2718 = vadd.f32 %v2605, %v2717
    %v2719 = vpop.f32.mrb[0].mxu0
    %v2720 = vadd.f32 %v2607, %v2719
    %v2721 = vpop.f32.mrb[0].mxu0
    %v2722 = vadd.f32 %v2609, %v2721
    %v2723 = vpop.f32.mrb[0].mxu0
    %v2724 = vadd.f32 %v2611, %v2723
    %2725 = vmatprep.mubr.bf16.mxu0 %v1527
    %2726 = vmatmul.mubr.bf16.gmra.mrb[0].mxu0 %v1526
    %v2727 = vpop.f32.mrb[0].mxu0
    %v2728 = vadd.f32 %v2615, %v2727
    %v2729 = vpop.f32.mrb[0].mxu0
    %v2730 = vadd.f32 %v2617, %v2729
    %v2731 = vpop.f32.mrb[0].mxu0
    %v2732 = vadd.f32 %v2619, %v2731
    %v2733 = vpop.f32.mrb[0].mxu0
    %v2734 = vadd.f32 %v2621, %v2733
    %2735 = vmatprep.mubr.bf16.mxu0 %v1531
    %2736 = vmatmul.mubr.bf16.gmra.mrb[0].mxu0 %v1530
    %v2737 = vpop.f32.mrb[0].mxu0
    %v2738 = vadd.f32 %v2625, %v2737
    %v2739 = vpop.f32.mrb[0].mxu0
    %v2740 = vadd.f32 %v2627, %v2739
    %v2741 = vpop.f32.mrb[0].mxu0
    %v2742 = vadd.f32 %v2629, %v2741
    %v2743 = vpop.f32.mrb[0].mxu0
    %v2744 = vadd.f32 %v2631, %v2743
    %2745 = vmatprep.mubr.bf16.mxu0 %v1535
    %2746 = vmatmul.mubr.bf16.gmra.mrb[0].mxu0 %v1534
    %v2747 = vpop.f32.mrb[0].mxu0
    %v2748 = vadd.f32 %v2635, %v2747
    %v2749 = vpop.f32.mrb[0].mxu0
    %v2750 = vadd.f32 %v2637, %v2749
    %v2751 = vpop.f32.mrb[0].mxu0
    %v2752 = vadd.f32 %v2639, %v2751
    %v2753 = vpop.f32.mrb[0].mxu0
    %v2754 = vadd.f32 %v2641, %v2753
    %2755 = vdwg.mxu0
    %v2884 = vunpack.c.l.b16 %v872
    %v2885 = vunpack.c.h.b16 %v872
    %v2886 = vunpack.c.l.b16 %v873
    %v2887 = vunpack.c.h.b16 %v873
    %v2888 = vunpack.c.l.b16 %v874
    %v2889 = vunpack.c.h.b16 %v874
    %v2890 = vunpack.c.l.b16 %v875
    %v2891 = vunpack.c.h.b16 %v875
    %v2892 = vunpack.c.l.b16 %v876
    %v2893 = vunpack.c.h.b16 %v876
    %v2894 = vunpack.c.l.b16 %v877
    %v2895 = vunpack.c.h.b16 %v877
    %v2896 = vunpack.c.l.b16 %v878
    %v2897 = vunpack.c.h.b16 %v878
    %v2898 = vunpack.c.l.b16 %v879
    %v2899 = vunpack.c.h.b16 %v879
    %v2900 = vunpack.c.l.b16 %v880
    %v2901 = vunpack.c.h.b16 %v880
    %v2902 = vunpack.c.l.b16 %v881
    %v2903 = vunpack.c.h.b16 %v881
    %v2904 = vunpack.c.l.b16 %v882
    %v2905 = vunpack.c.h.b16 %v882
    %v2906 = vunpack.c.l.b16 %v883
    %v2907 = vunpack.c.h.b16 %v883
    %v2908 = vunpack.c.l.b16 %v884
    %v2909 = vunpack.c.h.b16 %v884
    %v2910 = vunpack.c.l.b16 %v885
    %v2911 = vunpack.c.h.b16 %v885
    %v2912 = vunpack.c.l.b16 %v886
    %v2913 = vunpack.c.h.b16 %v886
    %v2914 = vunpack.c.l.b16 %v887
    %v2915 = vunpack.c.h.b16 %v887
    %v2916 = vunpack.c.l.b16 %v888
    %v2917 = vunpack.c.h.b16 %v888
    %v2918 = vunpack.c.l.b16 %v889
    %v2919 = vunpack.c.h.b16 %v889
    %v2920 = vunpack.c.l.b16 %v890
    %v2921 = vunpack.c.h.b16 %v890
    %v2922 = vunpack.c.l.b16 %v891
    %v2923 = vunpack.c.h.b16 %v891
    %v2924 = vunpack.c.l.b16 %v892
    %v2925 = vunpack.c.h.b16 %v892
    %v2926 = vunpack.c.l.b16 %v893
    %v2927 = vunpack.c.h.b16 %v893
    %v2928 = vunpack.c.l.b16 %v894
    %v2929 = vunpack.c.h.b16 %v894
    %v2930 = vunpack.c.l.b16 %v895
    %v2931 = vunpack.c.h.b16 %v895
    %v2932 = vunpack.c.l.b16 %v896
    %v2933 = vunpack.c.h.b16 %v896
    %v2934 = vunpack.c.l.b16 %v897
    %v2935 = vunpack.c.h.b16 %v897
    %v2936 = vunpack.c.l.b16 %v898
    %v2937 = vunpack.c.h.b16 %v898
    %v2938 = vunpack.c.l.b16 %v899
    %v2939 = vunpack.c.h.b16 %v899
    %v2940 = vunpack.c.l.b16 %v900
    %v2941 = vunpack.c.h.b16 %v900
    %v2942 = vunpack.c.l.b16 %v901
    %v2943 = vunpack.c.h.b16 %v901
    %v2944 = vunpack.c.l.b16 %v902
    %v2945 = vunpack.c.h.b16 %v902
    %v2946 = vunpack.c.l.b16 %v903
    %v2947 = vunpack.c.h.b16 %v903
    %v2948 = vunpack.c.l.b16 %v904
    %v2949 = vunpack.c.h.b16 %v904
    %v2950 = vunpack.c.l.b16 %v905
    %v2951 = vunpack.c.h.b16 %v905
    %v2952 = vunpack.c.l.b16 %v906
    %v2953 = vunpack.c.h.b16 %v906
    %v2954 = vunpack.c.l.b16 %v907
    %v2955 = vunpack.c.h.b16 %v907
    %v2956 = vunpack.c.l.b16 %v908
    %v2957 = vunpack.c.h.b16 %v908
    %v2958 = vunpack.c.l.b16 %v909
    %v2959 = vunpack.c.h.b16 %v909
    %v2960 = vunpack.c.l.b16 %v910
    %v2961 = vunpack.c.h.b16 %v910
    %v2962 = vunpack.c.l.b16 %v911
    %v2963 = vunpack.c.h.b16 %v911
    %v2964 = vunpack.c.l.b16 %v912
    %v2965 = vunpack.c.h.b16 %v912
    %v2966 = vunpack.c.l.b16 %v913
    %v2967 = vunpack.c.h.b16 %v913
    %v2968 = vunpack.c.l.b16 %v914
    %v2969 = vunpack.c.h.b16 %v914
    %v2970 = vunpack.c.l.b16 %v915
    %v2971 = vunpack.c.h.b16 %v915
    %v2972 = vunpack.c.l.b16 %v916
    %v2973 = vunpack.c.h.b16 %v916
    %v2974 = vunpack.c.l.b16 %v917
    %v2975 = vunpack.c.h.b16 %v917
    %v2976 = vunpack.c.l.b16 %v918
    %v2977 = vunpack.c.h.b16 %v918
    %v2978 = vunpack.c.l.b16 %v919
    %v2979 = vunpack.c.h.b16 %v919
    %v2980 = vunpack.c.l.b16 %v920
    %v2981 = vunpack.c.h.b16 %v920
    %v2982 = vunpack.c.l.b16 %v921
    %v2983 = vunpack.c.h.b16 %v921
    %v2984 = vunpack.c.l.b16 %v922
    %v2985 = vunpack.c.h.b16 %v922
    %v2986 = vunpack.c.l.b16 %v923
    %v2987 = vunpack.c.h.b16 %v923
    %v2988 = vunpack.c.l.b16 %v924
    %v2989 = vunpack.c.h.b16 %v924
    %v2990 = vunpack.c.l.b16 %v925
    %v2991 = vunpack.c.h.b16 %v925
    %v2992 = vunpack.c.l.b16 %v926
    %v2993 = vunpack.c.h.b16 %v926
    %v2994 = vunpack.c.l.b16 %v927
    %v2995 = vunpack.c.h.b16 %v927
    %v2996 = vunpack.c.l.b16 %v928
    %v2997 = vunpack.c.h.b16 %v928
    %v2998 = vunpack.c.l.b16 %v929
    %v2999 = vunpack.c.h.b16 %v929
    %v3000 = vunpack.c.l.b16 %v930
    %v3001 = vunpack.c.h.b16 %v930
    %v3002 = vunpack.c.l.b16 %v931
    %v3003 = vunpack.c.h.b16 %v931
    %v3004 = vunpack.c.l.b16 %v932
    %v3005 = vunpack.c.h.b16 %v932
    %v3006 = vunpack.c.l.b16 %v933
    %v3007 = vunpack.c.h.b16 %v933
    %v3008 = vunpack.c.l.b16 %v934
    %v3009 = vunpack.c.h.b16 %v934
    %v3010 = vunpack.c.l.b16 %v935
    %v3011 = vunpack.c.h.b16 %v935
    %v3012 = vunpack.c.l.b16 %v936
    %v3013 = vunpack.c.h.b16 %v936
    %v3014 = vunpack.c.l.b16 %v937
    %v3015 = vunpack.c.h.b16 %v937
    %v3016 = vunpack.c.l.b16 %v938
    %v3017 = vunpack.c.h.b16 %v938
    %v3018 = vunpack.c.l.b16 %v939
    %v3019 = vunpack.c.h.b16 %v939
    %v3020 = vunpack.c.l.b16 %v940
    %v3021 = vunpack.c.h.b16 %v940
    %v3022 = vunpack.c.l.b16 %v941
    %v3023 = vunpack.c.h.b16 %v941
    %v3024 = vunpack.c.l.b16 %v942
    %v3025 = vunpack.c.h.b16 %v942
    %v3026 = vunpack.c.l.b16 %v943
    %v3027 = vunpack.c.h.b16 %v943
    %v3028 = vunpack.c.l.b16 %v944
    %v3029 = vunpack.c.h.b16 %v944
    %v3030 = vunpack.c.l.b16 %v945
    %v3031 = vunpack.c.h.b16 %v945
    %v3032 = vunpack.c.l.b16 %v946
    %v3033 = vunpack.c.h.b16 %v946
    %v3034 = vunpack.c.l.b16 %v947
    %v3035 = vunpack.c.h.b16 %v947
    %v3036 = vunpack.c.l.b16 %v948
    %v3037 = vunpack.c.h.b16 %v948
    %v3038 = vunpack.c.l.b16 %v949
    %v3039 = vunpack.c.h.b16 %v949
    %v3040 = vunpack.c.l.b16 %v950
    %v3041 = vunpack.c.h.b16 %v950
    %v3042 = vunpack.c.l.b16 %v951
    %v3043 = vunpack.c.h.b16 %v951
    %v3044 = vunpack.c.l.b16 %v952
    %v3045 = vunpack.c.h.b16 %v952
    %v3046 = vunpack.c.l.b16 %v953
    %v3047 = vunpack.c.h.b16 %v953
    %v3048 = vunpack.c.l.b16 %v954
    %v3049 = vunpack.c.h.b16 %v954
    %v3050 = vunpack.c.l.b16 %v955
    %v3051 = vunpack.c.h.b16 %v955
    %v3052 = vunpack.c.l.b16 %v956
    %v3053 = vunpack.c.h.b16 %v956
    %v3054 = vunpack.c.l.b16 %v957
    %v3055 = vunpack.c.h.b16 %v957
    %v3056 = vunpack.c.l.b16 %v958
    %v3057 = vunpack.c.h.b16 %v958
    %v3058 = vunpack.c.l.b16 %v959
    %v3059 = vunpack.c.h.b16 %v959
    %v3060 = vunpack.c.l.b16 %v960
    %v3061 = vunpack.c.h.b16 %v960
    %v3062 = vunpack.c.l.b16 %v961
    %v3063 = vunpack.c.h.b16 %v961
    %v3064 = vunpack.c.l.b16 %v962
    %v3065 = vunpack.c.h.b16 %v962
    %v3066 = vunpack.c.l.b16 %v963
    %v3067 = vunpack.c.h.b16 %v963
    %v3068 = vunpack.c.l.b16 %v964
    %v3069 = vunpack.c.h.b16 %v964
    %v3070 = vunpack.c.l.b16 %v965
    %v3071 = vunpack.c.h.b16 %v965
    %v3072 = vunpack.c.l.b16 %v966
    %v3073 = vunpack.c.h.b16 %v966
    %v3074 = vunpack.c.l.b16 %v967
    %v3075 = vunpack.c.h.b16 %v967
    %v3076 = vunpack.c.l.b16 %v968
    %v3077 = vunpack.c.h.b16 %v968
    %v3078 = vunpack.c.l.b16 %v969
    %v3079 = vunpack.c.h.b16 %v969
    %v3080 = vunpack.c.l.b16 %v970
    %v3081 = vunpack.c.h.b16 %v970
    %v3082 = vunpack.c.l.b16 %v971
    %v3083 = vunpack.c.h.b16 %v971
    %v3084 = vunpack.c.l.b16 %v972
    %v3085 = vunpack.c.h.b16 %v972
    %v3086 = vunpack.c.l.b16 %v973
    %v3087 = vunpack.c.h.b16 %v973
    %v3088 = vunpack.c.l.b16 %v974
    %v3089 = vunpack.c.h.b16 %v974
    %v3090 = vunpack.c.l.b16 %v975
    %v3091 = vunpack.c.h.b16 %v975
    %v3092 = vunpack.c.l.b16 %v976
    %v3093 = vunpack.c.h.b16 %v976
    %v3094 = vunpack.c.l.b16 %v977
    %v3095 = vunpack.c.h.b16 %v977
    %v3096 = vunpack.c.l.b16 %v978
    %v3097 = vunpack.c.h.b16 %v978
    %v3098 = vunpack.c.l.b16 %v979
    %v3099 = vunpack.c.h.b16 %v979
    %v3100 = vunpack.c.l.b16 %v980
    %v3101 = vunpack.c.h.b16 %v980
    %v3102 = vunpack.c.l.b16 %v981
    %v3103 = vunpack.c.h.b16 %v981
    %v3104 = vunpack.c.l.b16 %v982
    %v3105 = vunpack.c.h.b16 %v982
    %v3106 = vunpack.c.l.b16 %v983
    %v3107 = vunpack.c.h.b16 %v983
    %v3108 = vunpack.c.l.b16 %v984
    %v3109 = vunpack.c.h.b16 %v984
    %v3110 = vunpack.c.l.b16 %v985
    %v3111 = vunpack.c.h.b16 %v985
    %v3112 = vunpack.c.l.b16 %v986
    %v3113 = vunpack.c.h.b16 %v986
    %v3114 = vunpack.c.l.b16 %v987
    %v3115 = vunpack.c.h.b16 %v987
    %v3116 = vunpack.c.l.b16 %v988
    %v3117 = vunpack.c.h.b16 %v988
    %v3118 = vunpack.c.l.b16 %v989
    %v3119 = vunpack.c.h.b16 %v989
    %v3120 = vunpack.c.l.b16 %v990
    %v3121 = vunpack.c.h.b16 %v990
    %v3122 = vunpack.c.l.b16 %v991
    %v3123 = vunpack.c.h.b16 %v991
    %v3124 = vunpack.c.l.b16 %v992
    %v3125 = vunpack.c.h.b16 %v992
    %v3126 = vunpack.c.l.b16 %v993
    %v3127 = vunpack.c.h.b16 %v993
    %v3128 = vunpack.c.l.b16 %v994
    %v3129 = vunpack.c.h.b16 %v994
    %v3130 = vunpack.c.l.b16 %v995
    %v3131 = vunpack.c.h.b16 %v995
    %v3132 = vunpack.c.l.b16 %v996
    %v3133 = vunpack.c.h.b16 %v996
    %v3134 = vunpack.c.l.b16 %v997
    %v3135 = vunpack.c.h.b16 %v997
    %v3136 = vunpack.c.l.b16 %v998
    %v3137 = vunpack.c.h.b16 %v998
    %v3138 = vunpack.c.l.b16 %v999
    %v3139 = vunpack.c.h.b16 %v999
    %v3140 = vpack.c.b16 %v2888, %v2884
    %v3141 = vpack.c.b16 %v2889, %v2885
    %v3142 = vpack.c.b16 %v2890, %v2886
    %v3143 = vpack.c.b16 %v2891, %v2887
    %v3144 = vpack.c.b16 %v2896, %v2892
    %v3145 = vpack.c.b16 %v2897, %v2893
    %v3146 = vpack.c.b16 %v2898, %v2894
    %v3147 = vpack.c.b16 %v2899, %v2895
    %v3148 = vpack.c.b16 %v2904, %v2900
    %v3149 = vpack.c.b16 %v2905, %v2901
    %v3150 = vpack.c.b16 %v2906, %v2902
    %v3151 = vpack.c.b16 %v2907, %v2903
    %v3152 = vpack.c.b16 %v2912, %v2908
    %v3153 = vpack.c.b16 %v2913, %v2909
    %v3154 = vpack.c.b16 %v2914, %v2910
    %v3155 = vpack.c.b16 %v2915, %v2911
    %v3156 = vpack.c.b16 %v2920, %v2916
    %v3157 = vpack.c.b16 %v2921, %v2917
    %v3158 = vpack.c.b16 %v2922, %v2918
    %v3159 = vpack.c.b16 %v2923, %v2919
    %v3160 = vpack.c.b16 %v2928, %v2924
    %v3161 = vpack.c.b16 %v2929, %v2925
    %v3162 = vpack.c.b16 %v2930, %v2926
    %v3163 = vpack.c.b16 %v2931, %v2927
    %v3164 = vpack.c.b16 %v2936, %v2932
    %v3165 = vpack.c.b16 %v2937, %v2933
    %v3166 = vpack.c.b16 %v2938, %v2934
    %v3167 = vpack.c.b16 %v2939, %v2935
    %v3168 = vpack.c.b16 %v2944, %v2940
    %v3169 = vpack.c.b16 %v2945, %v2941
    %v3170 = vpack.c.b16 %v2946, %v2942
    %v3171 = vpack.c.b16 %v2947, %v2943
    %v3172 = vpack.c.b16 %v2952, %v2948
    %v3173 = vpack.c.b16 %v2953, %v2949
    %v3174 = vpack.c.b16 %v2954, %v2950
    %v3175 = vpack.c.b16 %v2955, %v2951
    %v3176 = vpack.c.b16 %v2960, %v2956
    %v3177 = vpack.c.b16 %v2961, %v2957
    %v3178 = vpack.c.b16 %v2962, %v2958
    %v3179 = vpack.c.b16 %v2963, %v2959
    %v3180 = vpack.c.b16 %v2968, %v2964
    %v3181 = vpack.c.b16 %v2969, %v2965
    %v3182 = vpack.c.b16 %v2970, %v2966
    %v3183 = vpack.c.b16 %v2971, %v2967
    %v3184 = vpack.c.b16 %v2976, %v2972
    %v3185 = vpack.c.b16 %v2977, %v2973
    %v3186 = vpack.c.b16 %v2978, %v2974
    %v3187 = vpack.c.b16 %v2979, %v2975
    %v3188 = vpack.c.b16 %v2984, %v2980
    %v3189 = vpack.c.b16 %v2985, %v2981
    %v3190 = vpack.c.b16 %v2986, %v2982
    %v3191 = vpack.c.b16 %v2987, %v2983
    %v3192 = vpack.c.b16 %v2992, %v2988
    %v3193 = vpack.c.b16 %v2993, %v2989
    %v3194 = vpack.c.b16 %v2994, %v2990
    %v3195 = vpack.c.b16 %v2995, %v2991
    %v3196 = vpack.c.b16 %v3000, %v2996
    %v3197 = vpack.c.b16 %v3001, %v2997
    %v3198 = vpack.c.b16 %v3002, %v2998
    %v3199 = vpack.c.b16 %v3003, %v2999
    %v3200 = vpack.c.b16 %v3008, %v3004
    %v3201 = vpack.c.b16 %v3009, %v3005
    %v3202 = vpack.c.b16 %v3010, %v3006
    %v3203 = vpack.c.b16 %v3011, %v3007
    %v3204 = vpack.c.b16 %v3016, %v3012
    %v3205 = vpack.c.b16 %v3017, %v3013
    %v3206 = vpack.c.b16 %v3018, %v3014
    %v3207 = vpack.c.b16 %v3019, %v3015
    %v3208 = vpack.c.b16 %v3024, %v3020
    %v3209 = vpack.c.b16 %v3025, %v3021
    %v3210 = vpack.c.b16 %v3026, %v3022
    %v3211 = vpack.c.b16 %v3027, %v3023
    %v3212 = vpack.c.b16 %v3032, %v3028
    %v3213 = vpack.c.b16 %v3033, %v3029
    %v3214 = vpack.c.b16 %v3034, %v3030
    %v3215 = vpack.c.b16 %v3035, %v3031
    %v3216 = vpack.c.b16 %v3040, %v3036
    %v3217 = vpack.c.b16 %v3041, %v3037
    %v3218 = vpack.c.b16 %v3042, %v3038
    %v3219 = vpack.c.b16 %v3043, %v3039
    %v3220 = vpack.c.b16 %v3048, %v3044
    %v3221 = vpack.c.b16 %v3049, %v3045
    %v3222 = vpack.c.b16 %v3050, %v3046
    %v3223 = vpack.c.b16 %v3051, %v3047
    %v3224 = vpack.c.b16 %v3056, %v3052
    %v3225 = vpack.c.b16 %v3057, %v3053
    %v3226 = vpack.c.b16 %v3058, %v3054
    %v3227 = vpack.c.b16 %v3059, %v3055
    %v3228 = vpack.c.b16 %v3064, %v3060
    %v3229 = vpack.c.b16 %v3065, %v3061
    %v3230 = vpack.c.b16 %v3066, %v3062
    %v3231 = vpack.c.b16 %v3067, %v3063
    %v3232 = vpack.c.b16 %v3072, %v3068
    %v3233 = vpack.c.b16 %v3073, %v3069
    %v3234 = vpack.c.b16 %v3074, %v3070
    %v3235 = vpack.c.b16 %v3075, %v3071
    %v3236 = vpack.c.b16 %v3080, %v3076
    %v3237 = vpack.c.b16 %v3081, %v3077
    %v3238 = vpack.c.b16 %v3082, %v3078
    %v3239 = vpack.c.b16 %v3083, %v3079
    %v3240 = vpack.c.b16 %v3088, %v3084
    %v3241 = vpack.c.b16 %v3089, %v3085
    %v3242 = vpack.c.b16 %v3090, %v3086
    %v3243 = vpack.c.b16 %v3091, %v3087
    %v3244 = vpack.c.b16 %v3096, %v3092
    %v3245 = vpack.c.b16 %v3097, %v3093
    %v3246 = vpack.c.b16 %v3098, %v3094
    %v3247 = vpack.c.b16 %v3099, %v3095
    %v3248 = vpack.c.b16 %v3104, %v3100
    %v3249 = vpack.c.b16 %v3105, %v3101
    %v3250 = vpack.c.b16 %v3106, %v3102
    %v3251 = vpack.c.b16 %v3107, %v3103
    %v3252 = vpack.c.b16 %v3112, %v3108
    %v3253 = vpack.c.b16 %v3113, %v3109
    %v3254 = vpack.c.b16 %v3114, %v3110
    %v3255 = vpack.c.b16 %v3115, %v3111
    %v3256 = vpack.c.b16 %v3120, %v3116
    %v3257 = vpack.c.b16 %v3121, %v3117
    %v3258 = vpack.c.b16 %v3122, %v3118
    %v3259 = vpack.c.b16 %v3123, %v3119
    %v3260 = vpack.c.b16 %v3128, %v3124
    %v3261 = vpack.c.b16 %v3129, %v3125
    %v3262 = vpack.c.b16 %v3130, %v3126
    %v3263 = vpack.c.b16 %v3131, %v3127
    %v3264 = vpack.c.b16 %v3136, %v3132
    %v3265 = vpack.c.b16 %v3137, %v3133
    %v3266 = vpack.c.b16 %v3138, %v3134
    %v3267 = vpack.c.b16 %v3139, %v3135
    %3396 = vmatprep.subr.bf16.mxu0 %v3141
    %3397 = vmatpush1.bf16.msra.mxu0 %v3140
    %3398 = vmatprep.subr.bf16.mxu0 %v3145
    %3399 = vmatpush1.bf16.msra.mxu0 %v3144
    %3400 = vmatprep.subr.bf16.mxu0 %v3149
    %3401 = vmatpush1.bf16.msra.mxu0 %v3148
    %3402 = vmatprep.subr.bf16.mxu0 %v3153
    %3403 = vmatpush1.bf16.msra.mxu0 %v3152
    %3404 = vmatprep.subr.bf16.mxu0 %v3157
    %3405 = vmatpush1.bf16.msra.mxu0 %v3156
    %3406 = vmatprep.subr.bf16.mxu0 %v3161
    %3407 = vmatpush1.bf16.msra.mxu0 %v3160
    %3408 = vmatprep.subr.bf16.mxu0 %v3165
    %3409 = vmatpush1.bf16.msra.mxu0 %v3164
    %3410 = vmatprep.subr.bf16.mxu0 %v3169
    %3411 = vmatpush1.bf16.msra.mxu0 %v3168
    %3412 = vmatprep.subr.bf16.mxu0 %v3173
    %3413 = vmatpush1.bf16.msra.mxu0 %v3172
    %3414 = vmatprep.subr.bf16.mxu0 %v3177
    %3415 = vmatpush1.bf16.msra.mxu0 %v3176
    %3416 = vmatprep.subr.bf16.mxu0 %v3181
    %3417 = vmatpush1.bf16.msra.mxu0 %v3180
    %3418 = vmatprep.subr.bf16.mxu0 %v3185
    %3419 = vmatpush1.bf16.msra.mxu0 %v3184
    %3420 = vmatprep.subr.bf16.mxu0 %v3189
    %3421 = vmatpush1.bf16.msra.mxu0 %v3188
    %3422 = vmatprep.subr.bf16.mxu0 %v3193
    %3423 = vmatpush1.bf16.msra.mxu0 %v3192
    %3424 = vmatprep.subr.bf16.mxu0 %v3197
    %3425 = vmatpush1.bf16.msra.mxu0 %v3196
    %3426 = vmatprep.subr.bf16.mxu0 %v3201
    %3427 = vmatpush1.bf16.msra.mxu0 %v3200
    %3428 = vmatprep.mubr.bf16.mxu0 %v841
    %3429 = vmatmul.mubr.bf16.gmra.mrb[0].mxu0 %v840
    %v3430 = vpop.f32.mrb[0].mxu0
    %v3431 = vadd.f32 %v2452, %v3430
    %v3432 = vpop.f32.mrb[0].mxu0
    %v3433 = vadd.f32 %v2454, %v3432
    %v3434 = vpop.f32.mrb[0].mxu0
    %v3435 = vadd.f32 %v2456, %v3434
    %v3436 = vpop.f32.mrb[0].mxu0
    %v3437 = vadd.f32 %v2458, %v3436
    %3438 = vmatprep.mubr.bf16.mxu0 %v845
    %3439 = vmatmul.mubr.bf16.gmra.mrb[0].mxu0 %v844
    %v3440 = vpop.f32.mrb[0].mxu0
    %v3441 = vadd.f32 %v2462, %v3440
    %v3442 = vpop.f32.mrb[0].mxu0
    %v3443 = vadd.f32 %v2464, %v3442
    %v3444 = vpop.f32.mrb[0].mxu0
    %v3445 = vadd.f32 %v2466, %v3444
    %v3446 = vpop.f32.mrb[0].mxu0
    %v3447 = vadd.f32 %v2468, %v3446
    %3448 = vmatprep.mubr.bf16.mxu0 %v849
    %3449 = vmatmul.mubr.bf16.gmra.mrb[0].mxu0 %v848
    %v3450 = vpop.f32.mrb[0].mxu0
    %v3451 = vadd.f32 %v2472, %v3450
    %v3452 = vpop.f32.mrb[0].mxu0
    %v3453 = vadd.f32 %v2474, %v3452
    %v3454 = vpop.f32.mrb[0].mxu0
    %v3455 = vadd.f32 %v2476, %v3454
    %v3456 = vpop.f32.mrb[0].mxu0
    %v3457 = vadd.f32 %v2478, %v3456
    %3458 = vmatprep.mubr.bf16.mxu0 %v853
    %3459 = vmatmul.mubr.bf16.gmra.mrb[0].mxu0 %v852
    %v3460 = vpop.f32.mrb[0].mxu0
    %v3461 = vadd.f32 %v2482, %v3460
    %v3462 = vpop.f32.mrb[0].mxu0
    %v3463 = vadd.f32 %v2484, %v3462
    %v3464 = vpop.f32.mrb[0].mxu0
    %v3465 = vadd.f32 %v2486, %v3464
    %v3466 = vpop.f32.mrb[0].mxu0
    %v3467 = vadd.f32 %v2488, %v3466
    %3468 = vmatprep.mubr.bf16.mxu0 %v857
    %3469 = vmatmul.mubr.bf16.gmra.mrb[0].mxu0 %v856
    %v3470 = vpop.f32.mrb[0].mxu0
    %v3471 = vadd.f32 %v2492, %v3470
    %v3472 = vpop.f32.mrb[0].mxu0
    %v3473 = vadd.f32 %v2494, %v3472
    %v3474 = vpop.f32.mrb[0].mxu0
    %v3475 = vadd.f32 %v2496, %v3474
    %v3476 = vpop.f32.mrb[0].mxu0
    %v3477 = vadd.f32 %v2498, %v3476
    %3478 = vmatprep.mubr.bf16.mxu0 %v861
    %3479 = vmatmul.mubr.bf16.gmra.mrb[0].mxu0 %v860
    %v3480 = vpop.f32.mrb[0].mxu0
    %v3481 = vadd.f32 %v2502, %v3480
    %v3482 = vpop.f32.mrb[0].mxu0
    %v3483 = vadd.f32 %v2504, %v3482
    %v3484 = vpop.f32.mrb[0].mxu0
    %v3485 = vadd.f32 %v2506, %v3484
    %v3486 = vpop.f32.mrb[0].mxu0
    %v3487 = vadd.f32 %v2508, %v3486
    %3488 = vmatprep.mubr.bf16.mxu0 %v865
    %3489 = vmatmul.mubr.bf16.gmra.mrb[0].mxu0 %v864
    %v3490 = vpop.f32.mrb[0].mxu0
    %v3491 = vadd.f32 %v2512, %v3490
    %v3492 = vpop.f32.mrb[0].mxu0
    %v3493 = vadd.f32 %v2514, %v3492
    %v3494 = vpop.f32.mrb[0].mxu0
    %v3495 = vadd.f32 %v2516, %v3494
    %v3496 = vpop.f32.mrb[0].mxu0
    %v3497 = vadd.f32 %v2518, %v3496
    %3498 = vmatprep.mubr.bf16.mxu0 %v869
    %3499 = vmatmul.mubr.bf16.gmra.mrb[0].mxu0 %v868
    %v3500 = vpop.f32.mrb[0].mxu0
    %v3501 = vadd.f32 %v2522, %v3500
    %v3502 = vpop.f32.mrb[0].mxu0
    %v3503 = vadd.f32 %v2524, %v3502
    %v3504 = vpop.f32.mrb[0].mxu0
    %v3505 = vadd.f32 %v2526, %v3504
    %v3506 = vpop.f32.mrb[0].mxu0
    %v3507 = vadd.f32 %v2528, %v3506
    %3508 = vdwg.mxu0
    %3509 = vmatprep.subr.bf16.mxu0 %v3205
    %3510 = vmatpush1.bf16.msra.mxu0 %v3204
    %3511 = vmatprep.subr.bf16.mxu0 %v3209
    %3512 = vmatpush1.bf16.msra.mxu0 %v3208
    %3513 = vmatprep.subr.bf16.mxu0 %v3213
    %3514 = vmatpush1.bf16.msra.mxu0 %v3212
    %3515 = vmatprep.subr.bf16.mxu0 %v3217
    %3516 = vmatpush1.bf16.msra.mxu0 %v3216
    %3517 = vmatprep.subr.bf16.mxu0 %v3221
    %3518 = vmatpush1.bf16.msra.mxu0 %v3220
    %3519 = vmatprep.subr.bf16.mxu0 %v3225
    %3520 = vmatpush1.bf16.msra.mxu0 %v3224
    %3521 = vmatprep.subr.bf16.mxu0 %v3229
    %3522 = vmatpush1.bf16.msra.mxu0 %v3228
    %3523 = vmatprep.subr.bf16.mxu0 %v3233
    %3524 = vmatpush1.bf16.msra.mxu0 %v3232
    %3525 = vmatprep.subr.bf16.mxu0 %v3237
    %3526 = vmatpush1.bf16.msra.mxu0 %v3236
    %3527 = vmatprep.subr.bf16.mxu0 %v3241
    %3528 = vmatpush1.bf16.msra.mxu0 %v3240
    %3529 = vmatprep.subr.bf16.mxu0 %v3245
    %3530 = vmatpush1.bf16.msra.mxu0 %v3244
    %3531 = vmatprep.subr.bf16.mxu0 %v3249
    %3532 = vmatpush1.bf16.msra.mxu0 %v3248
    %3533 = vmatprep.subr.bf16.mxu0 %v3253
    %3534 = vmatpush1.bf16.msra.mxu0 %v3252
    %3535 = vmatprep.subr.bf16.mxu0 %v3257
    %3536 = vmatpush1.bf16.msra.mxu0 %v3256
    %3537 = vmatprep.subr.bf16.mxu0 %v3261
    %3538 = vmatpush1.bf16.msra.mxu0 %v3260
    %3539 = vmatprep.subr.bf16.mxu0 %v3265
    %3540 = vmatpush1.bf16.msra.mxu0 %v3264
    %3541 = vmatprep.mubr.bf16.mxu0 %v843
    %3542 = vmatmul.mubr.bf16.gmra.mrb[0].mxu0 %v842
    %v3543 = vpop.f32.mrb[0].mxu0
    %v3544 = vadd.f32 %v3431, %v3543
    %v3545 = vpop.f32.mrb[0].mxu0
    %v3546 = vadd.f32 %v3433, %v3545
    %v3547 = vpop.f32.mrb[0].mxu0
    %v3548 = vadd.f32 %v3435, %v3547
    %v3549 = vpop.f32.mrb[0].mxu0
    %v3550 = vadd.f32 %v3437, %v3549
    %3551 = vmatprep.mubr.bf16.mxu0 %v847
    %3552 = vmatmul.mubr.bf16.gmra.mrb[0].mxu0 %v846
    %v3553 = vpop.f32.mrb[0].mxu0
    %v3554 = vadd.f32 %v3441, %v3553
    %v3555 = vpop.f32.mrb[0].mxu0
    %v3556 = vadd.f32 %v3443, %v3555
    %v3557 = vpop.f32.mrb[0].mxu0
    %v3558 = vadd.f32 %v3445, %v3557
    %v3559 = vpop.f32.mrb[0].mxu0
    %v3560 = vadd.f32 %v3447, %v3559
    %3561 = vmatprep.mubr.bf16.mxu0 %v851
    %3562 = vmatmul.mubr.bf16.gmra.mrb[0].mxu0 %v850
    %v3563 = vpop.f32.mrb[0].mxu0
    %v3564 = vadd.f32 %v3451, %v3563
    %v3565 = vpop.f32.mrb[0].mxu0
    %v3566 = vadd.f32 %v3453, %v3565
    %v3567 = vpop.f32.mrb[0].mxu0
    %v3568 = vadd.f32 %v3455, %v3567
    %v3569 = vpop.f32.mrb[0].mxu0
    %v3570 = vadd.f32 %v3457, %v3569
    %3571 = vmatprep.mubr.bf16.mxu0 %v855
    %3572 = vmatmul.mubr.bf16.gmra.mrb[0].mxu0 %v854
    %v3573 = vpop.f32.mrb[0].mxu0
    %v3574 = vadd.f32 %v3461, %v3573
    %v3575 = vpop.f32.mrb[0].mxu0
    %v3576 = vadd.f32 %v3463, %v3575
    %v3577 = vpop.f32.mrb[0].mxu0
    %v3578 = vadd.f32 %v3465, %v3577
    %v3579 = vpop.f32.mrb[0].mxu0
    %v3580 = vadd.f32 %v3467, %v3579
    %3581 = vmatprep.mubr.bf16.mxu0 %v859
    %3582 = vmatmul.mubr.bf16.gmra.mrb[0].mxu0 %v858
    %v3583 = vpop.f32.mrb[0].mxu0
    %v3584 = vadd.f32 %v3471, %v3583
    %v3585 = vpop.f32.mrb[0].mxu0
    %v3586 = vadd.f32 %v3473, %v3585
    %v3587 = vpop.f32.mrb[0].mxu0
    %v3588 = vadd.f32 %v3475, %v3587
    %v3589 = vpop.f32.mrb[0].mxu0
    %v3590 = vadd.f32 %v3477, %v3589
    %3591 = vmatprep.mubr.bf16.mxu0 %v863
    %3592 = vmatmul.mubr.bf16.gmra.mrb[0].mxu0 %v862
    %v3593 = vpop.f32.mrb[0].mxu0
    %v3594 = vadd.f32 %v3481, %v3593
    %v3595 = vpop.f32.mrb[0].mxu0
    %v3596 = vadd.f32 %v3483, %v3595
    %v3597 = vpop.f32.mrb[0].mxu0
    %v3598 = vadd.f32 %v3485, %v3597
    %v3599 = vpop.f32.mrb[0].mxu0
    %v3600 = vadd.f32 %v3487, %v3599
    %3601 = vmatprep.mubr.bf16.mxu0 %v867
    %3602 = vmatmul.mubr.bf16.gmra.mrb[0].mxu0 %v866
    %v3603 = vpop.f32.mrb[0].mxu0
    %v3604 = vadd.f32 %v3491, %v3603
    %v3605 = vpop.f32.mrb[0].mxu0
    %v3606 = vadd.f32 %v3493, %v3605
    %v3607 = vpop.f32.mrb[0].mxu0
    %v3608 = vadd.f32 %v3495, %v3607
    %v3609 = vpop.f32.mrb[0].mxu0
    %v3610 = vadd.f32 %v3497, %v3609
    %3611 = vmatprep.mubr.bf16.mxu0 %v871
    %3612 = vmatmul.mubr.bf16.gmra.mrb[0].mxu0 %v870
    %v3613 = vpop.f32.mrb[0].mxu0
    %v3614 = vadd.f32 %v3501, %v3613
    %v3615 = vpop.f32.mrb[0].mxu0
    %v3616 = vadd.f32 %v3503, %v3615
    %v3617 = vpop.f32.mrb[0].mxu0
    %v3618 = vadd.f32 %v3505, %v3617
    %v3619 = vpop.f32.mrb[0].mxu0
    %v3620 = vadd.f32 %v3507, %v3619
    %3621 = vdwg.mxu0
    %3622 = vmatprep.subr.bf16.mxu0 %v3143
    %3623 = vmatpush1.bf16.msra.mxu0 %v3142
    %3624 = vmatprep.subr.bf16.mxu0 %v3147
    %3625 = vmatpush1.bf16.msra.mxu0 %v3146
    %3626 = vmatprep.subr.bf16.mxu0 %v3151
    %3627 = vmatpush1.bf16.msra.mxu0 %v3150
    %3628 = vmatprep.subr.bf16.mxu0 %v3155
    %3629 = vmatpush1.bf16.msra.mxu0 %v3154
    %3630 = vmatprep.subr.bf16.mxu0 %v3159
    %3631 = vmatpush1.bf16.msra.mxu0 %v3158
    %3632 = vmatprep.subr.bf16.mxu0 %v3163
    %3633 = vmatpush1.bf16.msra.mxu0 %v3162
    %3634 = vmatprep.subr.bf16.mxu0 %v3167
    %3635 = vmatpush1.bf16.msra.mxu0 %v3166
    %3636 = vmatprep.subr.bf16.mxu0 %v3171
    %3637 = vmatpush1.bf16.msra.mxu0 %v3170
    %3638 = vmatprep.subr.bf16.mxu0 %v3175
    %3639 = vmatpush1.bf16.msra.mxu0 %v3174
    %3640 = vmatprep.subr.bf16.mxu0 %v3179
    %3641 = vmatpush1.bf16.msra.mxu0 %v3178
    %3642 = vmatprep.subr.bf16.mxu0 %v3183
    %3643 = vmatpush1.bf16.msra.mxu0 %v3182
    %3644 = vmatprep.subr.bf16.mxu0 %v3187
    %3645 = vmatpush1.bf16.msra.mxu0 %v3186
    %3646 = vmatprep.subr.bf16.mxu0 %v3191
    %3647 = vmatpush1.bf16.msra.mxu0 %v3190
    %3648 = vmatprep.subr.bf16.mxu0 %v3195
    %3649 = vmatpush1.bf16.msra.mxu0 %v3194
    %3650 = vmatprep.subr.bf16.mxu0 %v3199
    %3651 = vmatpush1.bf16.msra.mxu0 %v3198
    %3652 = vmatprep.subr.bf16.mxu0 %v3203
    %3653 = vmatpush1.bf16.msra.mxu0 %v3202
    %3654 = vmatprep.mubr.bf16.mxu0 %v841
    %3655 = vmatmul.mubr.bf16.gmra.mrb[0].mxu0 %v840
    %v3656 = vpop.f32.mrb[0].mxu0
    %v3657 = vadd.f32 %v2678, %v3656
    %v3658 = vpop.f32.mrb[0].mxu0
    %v3659 = vadd.f32 %v2680, %v3658
    %v3660 = vpop.f32.mrb[0].mxu0
    %v3661 = vadd.f32 %v2682, %v3660
    %v3662 = vpop.f32.mrb[0].mxu0
    %v3663 = vadd.f32 %v2684, %v3662
    %3664 = vmatprep.mubr.bf16.mxu0 %v845
    %3665 = vmatmul.mubr.bf16.gmra.mrb[0].mxu0 %v844
    %v3666 = vpop.f32.mrb[0].mxu0
    %v3667 = vadd.f32 %v2688, %v3666
    %v3668 = vpop.f32.mrb[0].mxu0
    %v3669 = vadd.f32 %v2690, %v3668
    %v3670 = vpop.f32.mrb[0].mxu0
    %v3671 = vadd.f32 %v2692, %v3670
    %v3672 = vpop.f32.mrb[0].mxu0
    %v3673 = vadd.f32 %v2694, %v3672
    %3674 = vmatprep.mubr.bf16.mxu0 %v849
    %3675 = vmatmul.mubr.bf16.gmra.mrb[0].mxu0 %v848
    %v3676 = vpop.f32.mrb[0].mxu0
    %v3677 = vadd.f32 %v2698, %v3676
    %v3678 = vpop.f32.mrb[0].mxu0
    %v3679 = vadd.f32 %v2700, %v3678
    %v3680 = vpop.f32.mrb[0].mxu0
    %v3681 = vadd.f32 %v2702, %v3680
    %v3682 = vpop.f32.mrb[0].mxu0
    %v3683 = vadd.f32 %v2704, %v3682
    %3684 = vmatprep.mubr.bf16.mxu0 %v853
    %3685 = vmatmul.mubr.bf16.gmra.mrb[0].mxu0 %v852
    %v3686 = vpop.f32.mrb[0].mxu0
    %v3687 = vadd.f32 %v2708, %v3686
    %v3688 = vpop.f32.mrb[0].mxu0
    %v3689 = vadd.f32 %v2710, %v3688
    %v3690 = vpop.f32.mrb[0].mxu0
    %v3691 = vadd.f32 %v2712, %v3690
    %v3692 = vpop.f32.mrb[0].mxu0
    %v3693 = vadd.f32 %v2714, %v3692
    %3694 = vmatprep.mubr.bf16.mxu0 %v857
    %3695 = vmatmul.mubr.bf16.gmra.mrb[0].mxu0 %v856
    %v3696 = vpop.f32.mrb[0].mxu0
    %v3697 = vadd.f32 %v2718, %v3696
    %v3698 = vpop.f32.mrb[0].mxu0
    %v3699 = vadd.f32 %v2720, %v3698
    %v3700 = vpop.f32.mrb[0].mxu0
    %v3701 = vadd.f32 %v2722, %v3700
    %v3702 = vpop.f32.mrb[0].mxu0
    %v3703 = vadd.f32 %v2724, %v3702
    %3704 = vmatprep.mubr.bf16.mxu0 %v861
    %3705 = vmatmul.mubr.bf16.gmra.mrb[0].mxu0 %v860
    %v3706 = vpop.f32.mrb[0].mxu0
    %v3707 = vadd.f32 %v2728, %v3706
    %v3708 = vpop.f32.mrb[0].mxu0
    %v3709 = vadd.f32 %v2730, %v3708
    %v3710 = vpop.f32.mrb[0].mxu0
    %v3711 = vadd.f32 %v2732, %v3710
    %v3712 = vpop.f32.mrb[0].mxu0
    %v3713 = vadd.f32 %v2734, %v3712
    %3714 = vmatprep.mubr.bf16.mxu0 %v865
    %3715 = vmatmul.mubr.bf16.gmra.mrb[0].mxu0 %v864
    %v3716 = vpop.f32.mrb[0].mxu0
    %v3717 = vadd.f32 %v2738, %v3716
    %v3718 = vpop.f32.mrb[0].mxu0
    %v3719 = vadd.f32 %v2740, %v3718
    %v3720 = vpop.f32.mrb[0].mxu0
    %v3721 = vadd.f32 %v2742, %v3720
    %v3722 = vpop.f32.mrb[0].mxu0
    %v3723 = vadd.f32 %v2744, %v3722
    %3724 = vmatprep.mubr.bf16.mxu0 %v869
    %3725 = vmatmul.mubr.bf16.gmra.mrb[0].mxu0 %v868
    %v3726 = vpop.f32.mrb[0].mxu0
    %v3727 = vadd.f32 %v2748, %v3726
    %v3728 = vpop.f32.mrb[0].mxu0
    %v3729 = vadd.f32 %v2750, %v3728
    %v3730 = vpop.f32.mrb[0].mxu0
    %v3731 = vadd.f32 %v2752, %v3730
    %v3732 = vpop.f32.mrb[0].mxu0
    %v3733 = vadd.f32 %v2754, %v3732
    %3734 = vdwg.mxu0
    %3735 = vmatprep.subr.bf16.mxu0 %v3207
    %3736 = vmatpush1.bf16.msra.mxu0 %v3206
    %3737 = vmatprep.subr.bf16.mxu0 %v3211
    %3738 = vmatpush1.bf16.msra.mxu0 %v3210
    %3739 = vmatprep.subr.bf16.mxu0 %v3215
    %3740 = vmatpush1.bf16.msra.mxu0 %v3214
    %3741 = vmatprep.subr.bf16.mxu0 %v3219
    %3742 = vmatpush1.bf16.msra.mxu0 %v3218
    %3743 = vmatprep.subr.bf16.mxu0 %v3223
    %3744 = vmatpush1.bf16.msra.mxu0 %v3222
    %3745 = vmatprep.subr.bf16.mxu0 %v3227
    %3746 = vmatpush1.bf16.msra.mxu0 %v3226
    %3747 = vmatprep.subr.bf16.mxu0 %v3231
    %3748 = vmatpush1.bf16.msra.mxu0 %v3230
    %3749 = vmatprep.subr.bf16.mxu0 %v3235
    %3750 = vmatpush1.bf16.msra.mxu0 %v3234
    %3751 = vmatprep.subr.bf16.mxu0 %v3239
    %3752 = vmatpush1.bf16.msra.mxu0 %v3238
    %3753 = vmatprep.subr.bf16.mxu0 %v3243
    %3754 = vmatpush1.bf16.msra.mxu0 %v3242
    %3755 = vmatprep.subr.bf16.mxu0 %v3247
    %3756 = vmatpush1.bf16.msra.mxu0 %v3246
    %3757 = vmatprep.subr.bf16.mxu0 %v3251
    %3758 = vmatpush1.bf16.msra.mxu0 %v3250
    %3759 = vmatprep.subr.bf16.mxu0 %v3255
    %3760 = vmatpush1.bf16.msra.mxu0 %v3254
    %3761 = vmatprep.subr.bf16.mxu0 %v3259
    %3762 = vmatpush1.bf16.msra.mxu0 %v3258
    %3763 = vmatprep.subr.bf16.mxu0 %v3263
    %3764 = vmatpush1.bf16.msra.mxu0 %v3262
    %3765 = vmatprep.subr.bf16.mxu0 %v3267
    %3766 = vmatpush1.bf16.msra.mxu0 %v3266
    %3767 = vmatprep.mubr.bf16.mxu0 %v843
    %3768 = vmatmul.mubr.bf16.gmra.mrb[0].mxu0 %v842
    %v3769 = vpop.f32.mrb[0].mxu0
    %v3770 = vadd.f32 %v3657, %v3769
    %v3771 = vpop.f32.mrb[0].mxu0
    %v3772 = vadd.f32 %v3659, %v3771
    %v3773 = vpop.f32.mrb[0].mxu0
    %v3774 = vadd.f32 %v3661, %v3773
    %v3775 = vpop.f32.mrb[0].mxu0
    %v3776 = vadd.f32 %v3663, %v3775
    %3777 = vmatprep.mubr.bf16.mxu0 %v847
    %3778 = vmatmul.mubr.bf16.gmra.mrb[0].mxu0 %v846
    %v3779 = vpop.f32.mrb[0].mxu0
    %v3780 = vadd.f32 %v3667, %v3779
    %v3781 = vpop.f32.mrb[0].mxu0
    %v3782 = vadd.f32 %v3669, %v3781
    %v3783 = vpop.f32.mrb[0].mxu0
    %v3784 = vadd.f32 %v3671, %v3783
    %v3785 = vpop.f32.mrb[0].mxu0
    %v3786 = vadd.f32 %v3673, %v3785
    %3787 = vmatprep.mubr.bf16.mxu0 %v851
    %3788 = vmatmul.mubr.bf16.gmra.mrb[0].mxu0 %v850
    %v3789 = vpop.f32.mrb[0].mxu0
    %v3790 = vadd.f32 %v3677, %v3789
    %v3791 = vpop.f32.mrb[0].mxu0
    %v3792 = vadd.f32 %v3679, %v3791
    %v3793 = vpop.f32.mrb[0].mxu0
    %v3794 = vadd.f32 %v3681, %v3793
    %v3795 = vpop.f32.mrb[0].mxu0
    %v3796 = vadd.f32 %v3683, %v3795
    %3797 = vmatprep.mubr.bf16.mxu0 %v855
    %3798 = vmatmul.mubr.bf16.gmra.mrb[0].mxu0 %v854
    %v3799 = vpop.f32.mrb[0].mxu0
    %v3800 = vadd.f32 %v3687, %v3799
    %v3801 = vpop.f32.mrb[0].mxu0
    %v3802 = vadd.f32 %v3689, %v3801
    %v3803 = vpop.f32.mrb[0].mxu0
    %v3804 = vadd.f32 %v3691, %v3803
    %v3805 = vpop.f32.mrb[0].mxu0
    %v3806 = vadd.f32 %v3693, %v3805
    %3807 = vmatprep.mubr.bf16.mxu0 %v859
    %3808 = vmatmul.mubr.bf16.gmra.mrb[0].mxu0 %v858
    %v3809 = vpop.f32.mrb[0].mxu0
    %v3810 = vadd.f32 %v3697, %v3809
    %v3811 = vpop.f32.mrb[0].mxu0
    %v3812 = vadd.f32 %v3699, %v3811
    %v3813 = vpop.f32.mrb[0].mxu0
    %v3814 = vadd.f32 %v3701, %v3813
    %v3815 = vpop.f32.mrb[0].mxu0
    %v3816 = vadd.f32 %v3703, %v3815
    %3817 = vmatprep.mubr.bf16.mxu0 %v863
    %3818 = vmatmul.mubr.bf16.gmra.mrb[0].mxu0 %v862
    %v3819 = vpop.f32.mrb[0].mxu0
    %v3820 = vadd.f32 %v3707, %v3819
    %v3821 = vpop.f32.mrb[0].mxu0
    %v3822 = vadd.f32 %v3709, %v3821
    %v3823 = vpop.f32.mrb[0].mxu0
    %v3824 = vadd.f32 %v3711, %v3823
    %v3825 = vpop.f32.mrb[0].mxu0
    %v3826 = vadd.f32 %v3713, %v3825
    %3827 = vmatprep.mubr.bf16.mxu0 %v867
    %3828 = vmatmul.mubr.bf16.gmra.mrb[0].mxu0 %v866
    %v3829 = vpop.f32.mrb[0].mxu0
    %v3830 = vadd.f32 %v3717, %v3829
    %v3831 = vpop.f32.mrb[0].mxu0
    %v3832 = vadd.f32 %v3719, %v3831
    %v3833 = vpop.f32.mrb[0].mxu0
    %v3834 = vadd.f32 %v3721, %v3833
    %v3835 = vpop.f32.mrb[0].mxu0
    %v3836 = vadd.f32 %v3723, %v3835
    %3837 = vmatprep.mubr.bf16.mxu0 %v871
    %3838 = vmatmul.mubr.bf16.gmra.mrb[0].mxu0 %v870
    %v3839 = vpop.f32.mrb[0].mxu0
    %v3840 = vadd.f32 %v3727, %v3839
    %v3841 = vpop.f32.mrb[0].mxu0
    %v3842 = vadd.f32 %v3729, %v3841
    %v3843 = vpop.f32.mrb[0].mxu0
    %v3844 = vadd.f32 %v3731, %v3843
    %v3845 = vpop.f32.mrb[0].mxu0
    %v3846 = vadd.f32 %v3733, %v3845
    %3847 = vdwg.mxu0
    %v3848 = vld [vmem:[#allocation7 + $0x20] sm:$0xff]
    %v3849 = vld [vmem:[#allocation7 + $0x28] sm:$0xff]
    %v3850 = vld [vmem:[#allocation7 + $0x30] sm:$0xf]
    %v3851 = vld [vmem:[#allocation7 + $0x54] sm:$0xff]
    %v3852 = vld [vmem:[#allocation7 + $0x5c] sm:$0xff]
    %v3853 = vld [vmem:[#allocation7 + $0x64] sm:$0xf]
    %v3854 = vld [vmem:[#allocation7 + $0x88] sm:$0xff]
    %v3855 = vld [vmem:[#allocation7 + $0x90] sm:$0xff]
    %v3856 = vld [vmem:[#allocation7 + $0x98] sm:$0xf]
    %v3857 = vld [vmem:[#allocation7 + $0xbc] sm:$0xff]
    %v3858 = vld [vmem:[#allocation7 + $0xc4] sm:$0xff]
    %v3859 = vld [vmem:[#allocation7 + $0xcc] sm:$0xf]
    %v3860 = vld [vmem:[#allocation7 + $0xf0] sm:$0xff]
    %v3861 = vld [vmem:[#allocation7 + $0xf8] sm:$0xff]
    %v3862 = vld [vmem:[#allocation7 + $0x100] sm:$0xf]
    %v3863 = vld [vmem:[#allocation7 + $0x124] sm:$0xff]
    %v3864 = vld [vmem:[#allocation7 + $0x12c] sm:$0xff]
    %v3865 = vld [vmem:[#allocation7 + $0x134] sm:$0xf]
    %v3866 = vld [vmem:[#allocation7 + $0x158] sm:$0xff]
    %v3867 = vld [vmem:[#allocation7 + $0x160] sm:$0xff]
    %v3868 = vld [vmem:[#allocation7 + $0x168] sm:$0xf]
    %v3869 = vld [vmem:[#allocation7 + $0x18c] sm:$0xff]
    %v3870 = vld [vmem:[#allocation7 + $0x194] sm:$0xff]
    %v3871 = vld [vmem:[#allocation7 + $0x19c] sm:$0xf]
    %v3872 = vld [vmem:[#allocation7 + $0x1c0] sm:$0xff]
    %v3873 = vld [vmem:[#allocation7 + $0x1c8] sm:$0xff]
    %v3874 = vld [vmem:[#allocation7 + $0x1d0] sm:$0xf]
    %v3875 = vld [vmem:[#allocation7 + $0x1f4] sm:$0xff]
    %v3876 = vld [vmem:[#allocation7 + $0x1fc] sm:$0xff]
    %v3877 = vld [vmem:[#allocation7 + $0x204] sm:$0xf]
    %v3878 = vld [vmem:[#allocation7 + $0x228] sm:$0xff]
    %v3879 = vld [vmem:[#allocation7 + $0x230] sm:$0xff]
    %v3880 = vld [vmem:[#allocation7 + $0x238] sm:$0xf]
    %v3881 = vld [vmem:[#allocation7 + $0x25c] sm:$0xff]
    %v3882 = vld [vmem:[#allocation7 + $0x264] sm:$0xff]
    %v3883 = vld [vmem:[#allocation7 + $0x26c] sm:$0xf]
    %v3884 = vld [vmem:[#allocation7 + $0x290] sm:$0xff]
    %v3885 = vld [vmem:[#allocation7 + $0x298] sm:$0xff]
    %v3886 = vld [vmem:[#allocation7 + $0x2a0] sm:$0xf]
    %v3887 = vld [vmem:[#allocation7 + $0x2c4] sm:$0xff]
    %v3888 = vld [vmem:[#allocation7 + $0x2cc] sm:$0xff]
    %v3889 = vld [vmem:[#allocation7 + $0x2d4] sm:$0xf]
    %v3890 = vld [vmem:[#allocation7 + $0x2f8] sm:$0xff]
    %v3891 = vld [vmem:[#allocation7 + $0x300] sm:$0xff]
    %v3892 = vld [vmem:[#allocation7 + $0x308] sm:$0xf]
    %v3893 = vld [vmem:[#allocation7 + $0x32c] sm:$0xff]
    %v3894 = vld [vmem:[#allocation7 + $0x334] sm:$0xff]
    %v3895 = vld [vmem:[#allocation7 + $0x33c] sm:$0xf]
    %v3896 = vld [vmem:[#allocation8 + $0x8] sm:$0x1f]
    %v3898 = vlaneseq
    %v3899 = vshrl.u32 %v3898, 7
    %v3900 = vsub.s32 0, %v3899
    %v3901 = vrot.slane %v3896, %v3900
    %v3902 = vlaneseq
    %v3903 = vshrl.u32 %v3902, 7
    %v3904 = vsub.s32 1, %v3903
    %v3905 = vrot.slane %v3896, %v3904
    %v3906 = vlaneseq
    %v3907 = vshrl.u32 %v3906, 7
    %v3908 = vsub.s32 2, %v3907
    %v3909 = vrot.slane %v3896, %v3908
    %v3910 = vlaneseq
    %v3911 = vshrl.u32 %v3910, 7
    %v3912 = vsub.s32 3, %v3911
    %v3913 = vrot.slane %v3896, %v3912
    %v3914 = vlaneseq
    %v3915 = vshrl.u32 %v3914, 7
    %v3916 = vsub.s32 4, %v3915
    %v3917 = vrot.slane %v3896, %v3916
    %v3971 = vunpack.c.l.b16 %v3848
    %v3972 = vunpack.c.h.b16 %v3848
    %v3973 = vunpack.c.l.b16 %v3849
    %v3974 = vunpack.c.h.b16 %v3849
    %v3975 = vunpack.c.l.b16 %v3850
    %v3976 = vunpack.c.l.b16 %v3851
    %v3977 = vunpack.c.h.b16 %v3851
    %v3978 = vunpack.c.l.b16 %v3852
    %v3979 = vunpack.c.h.b16 %v3852
    %v3980 = vunpack.c.l.b16 %v3853
    %v3981 = vunpack.c.l.b16 %v3854
    %v3982 = vunpack.c.h.b16 %v3854
    %v3983 = vunpack.c.l.b16 %v3855
    %v3984 = vunpack.c.h.b16 %v3855
    %v3985 = vunpack.c.l.b16 %v3856
    %v3986 = vunpack.c.l.b16 %v3857
    %v3987 = vunpack.c.h.b16 %v3857
    %v3988 = vunpack.c.l.b16 %v3858
    %v3989 = vunpack.c.h.b16 %v3858
    %v3990 = vunpack.c.l.b16 %v3859
    %v3991 = vunpack.c.l.b16 %v3860
    %v3992 = vunpack.c.h.b16 %v3860
    %v3993 = vunpack.c.l.b16 %v3861
    %v3994 = vunpack.c.h.b16 %v3861
    %v3995 = vunpack.c.l.b16 %v3862
    %v3996 = vunpack.c.l.b16 %v3863
    %v3997 = vunpack.c.h.b16 %v3863
    %v3998 = vunpack.c.l.b16 %v3864
    %v3999 = vunpack.c.h.b16 %v3864
    %v4000 = vunpack.c.l.b16 %v3865
    %v4001 = vunpack.c.l.b16 %v3866
    %v4002 = vunpack.c.h.b16 %v3866
    %v4003 = vunpack.c.l.b16 %v3867
    %v4004 = vunpack.c.h.b16 %v3867
    %v4005 = vunpack.c.l.b16 %v3868
    %v4006 = vunpack.c.l.b16 %v3869
    %v4007 = vunpack.c.h.b16 %v3869
    %v4008 = vunpack.c.l.b16 %v3870
    %v4009 = vunpack.c.h.b16 %v3870
    %v4010 = vunpack.c.l.b16 %v3871
    %v4011 = vunpack.c.l.b16 %v3872
    %v4012 = vunpack.c.h.b16 %v3872
    %v4013 = vunpack.c.l.b16 %v3873
    %v4014 = vunpack.c.h.b16 %v3873
    %v4015 = vunpack.c.l.b16 %v3874
    %v4016 = vunpack.c.l.b16 %v3875
    %v4017 = vunpack.c.h.b16 %v3875
    %v4018 = vunpack.c.l.b16 %v3876
    %v4019 = vunpack.c.h.b16 %v3876
    %v4020 = vunpack.c.l.b16 %v3877
    %v4021 = vunpack.c.l.b16 %v3878
    %v4022 = vunpack.c.h.b16 %v3878
    %v4023 = vunpack.c.l.b16 %v3879
    %v4024 = vunpack.c.h.b16 %v3879
    %v4025 = vunpack.c.l.b16 %v3880
    %v4026 = vunpack.c.l.b16 %v3881
    %v4027 = vunpack.c.h.b16 %v3881
    %v4028 = vunpack.c.l.b16 %v3882
    %v4029 = vunpack.c.h.b16 %v3882
    %v4030 = vunpack.c.l.b16 %v3883
    %v4031 = vunpack.c.l.b16 %v3884
    %v4032 = vunpack.c.h.b16 %v3884
    %v4033 = vunpack.c.l.b16 %v3885
    %v4034 = vunpack.c.h.b16 %v3885
    %v4035 = vunpack.c.l.b16 %v3886
    %v4036 = vunpack.c.l.b16 %v3887
    %v4037 = vunpack.c.h.b16 %v3887
    %v4038 = vunpack.c.l.b16 %v3888
    %v4039 = vunpack.c.h.b16 %v3888
    %v4040 = vunpack.c.l.b16 %v3889
    %v4041 = vunpack.c.l.b16 %v3890
    %v4042 = vunpack.c.h.b16 %v3890
    %v4043 = vunpack.c.l.b16 %v3891
    %v4044 = vunpack.c.h.b16 %v3891
    %v4045 = vunpack.c.l.b16 %v3892
    %v4046 = vunpack.c.l.b16 %v3893
    %v4047 = vunpack.c.h.b16 %v3893
    %v4048 = vunpack.c.l.b16 %v3894
    %v4049 = vunpack.c.h.b16 %v3894
    %v4050 = vunpack.c.l.b16 %v3895
    %v4051 = vpack.c.b16 %v3976, %v3971
    %v4052 = vpack.c.b16 %v3977, %v3972
    %v4053 = vpack.c.b16 %v3978, %v3973
    %v4054 = vpack.c.b16 %v3979, %v3974
    %v4055 = vpack.c.b16 %v3980, %v3975
    %v4056 = vpack.c.b16 %v3986, %v3981
    %v4057 = vpack.c.b16 %v3987, %v3982
    %v4058 = vpack.c.b16 %v3988, %v3983
    %v4059 = vpack.c.b16 %v3989, %v3984
    %v4060 = vpack.c.b16 %v3990, %v3985
    %v4061 = vpack.c.b16 %v3996, %v3991
    %v4062 = vpack.c.b16 %v3997, %v3992
    %v4063 = vpack.c.b16 %v3998, %v3993
    %v4064 = vpack.c.b16 %v3999, %v3994
    %v4065 = vpack.c.b16 %v4000, %v3995
    %v4066 = vpack.c.b16 %v4006, %v4001
    %v4067 = vpack.c.b16 %v4007, %v4002
    %v4068 = vpack.c.b16 %v4008, %v4003
    %v4069 = vpack.c.b16 %v4009, %v4004
    %v4070 = vpack.c.b16 %v4010, %v4005
    %v4071 = vpack.c.b16 %v4016, %v4011
    %v4072 = vpack.c.b16 %v4017, %v4012
    %v4073 = vpack.c.b16 %v4018, %v4013
    %v4074 = vpack.c.b16 %v4019, %v4014
    %v4075 = vpack.c.b16 %v4020, %v4015
    %v4076 = vpack.c.b16 %v4026, %v4021
    %v4077 = vpack.c.b16 %v4027, %v4022
    %v4078 = vpack.c.b16 %v4028, %v4023
    %v4079 = vpack.c.b16 %v4029, %v4024
    %v4080 = vpack.c.b16 %v4030, %v4025
    %v4081 = vpack.c.b16 %v4036, %v4031
    %v4082 = vpack.c.b16 %v4037, %v4032
    %v4083 = vpack.c.b16 %v4038, %v4033
    %v4084 = vpack.c.b16 %v4039, %v4034
    %v4085 = vpack.c.b16 %v4040, %v4035
    %v4086 = vpack.c.b16 %v4046, %v4041
    %v4087 = vpack.c.b16 %v4047, %v4042
    %v4088 = vpack.c.b16 %v4048, %v4043
    %v4089 = vpack.c.b16 %v4049, %v4044
    %v4090 = vpack.c.b16 %v4050, %v4045
    %4131 = vmatprep.subr.bf16.mxu0 %v4052
    %4132 = vmatpush1.bf16.msra.mxu0 %v4051
    %4133 = vmatprep.subr.bf16.mxu0 %v4057
    %4134 = vmatpush1.bf16.msra.mxu0 %v4056
    %4135 = vmatprep.subr.bf16.mxu0 %v4062
    %4136 = vmatpush1.bf16.msra.mxu0 %v4061
    %4137 = vmatprep.subr.bf16.mxu0 %v4067
    %4138 = vmatpush1.bf16.msra.mxu0 %v4066
    %4139 = vmatprep.subr.bf16.mxu0 %v4072
    %4140 = vmatpush1.bf16.msra.mxu0 %v4071
    %4141 = vmatprep.subr.bf16.mxu0 %v4077
    %4142 = vmatpush1.bf16.msra.mxu0 %v4076
    %4143 = vmatprep.subr.bf16.mxu0 %v4082
    %4144 = vmatpush1.bf16.msra.mxu0 %v4081
    %4145 = vmatprep.subr.bf16.mxu0 %v4087
    %4146 = vmatpush1.bf16.msra.mxu0 %v4086
    %4147 = vmatprep.subr.bf16.mxu0 0
    %4148 = vmatpush1.bf16.msra.mxu0 0
    %4149 = vmatprep.subr.bf16.mxu0 0
    %4150 = vmatpush1.bf16.msra.mxu0 0
    %4151 = vmatprep.subr.bf16.mxu0 0
    %4152 = vmatpush1.bf16.msra.mxu0 0
    %4153 = vmatprep.subr.bf16.mxu0 0
    %4154 = vmatpush1.bf16.msra.mxu0 0
    %4155 = vmatprep.subr.bf16.mxu0 0
    %4156 = vmatpush1.bf16.msra.mxu0 0
    %4157 = vmatprep.subr.bf16.mxu0 0
    %4158 = vmatpush1.bf16.msra.mxu0 0
    %4159 = vmatprep.subr.bf16.mxu0 0
    %4160 = vmatpush1.bf16.msra.mxu0 0
    %4161 = vmatprep.subr.bf16.mxu0 0
    %4162 = vmatpush1.bf16.msra.mxu0 0
    %4163 = vmatprep.mubr.bf16.mxu0 0
    %4164 = vmatmul.mubr.bf16.gmra.mrb[0].mxu0 %v328
    %v4165 = vpop.f32.mrb[0].mxu0
    %v4166 = vadd.f32 %v3901, %v4165
    %v4167 = vpop.f32.mrb[0].mxu0
    %v4168 = vadd.f32 %v3905, %v4167
    %v4169 = vpop.f32.mrb[0].mxu0
    %v4170 = vadd.f32 %v3901, %v4169
    %v4171 = vpop.f32.mrb[0].mxu0
    %v4172 = vadd.f32 %v3905, %v4171
    %4173 = vmatprep.mubr.bf16.mxu0 0
    %4174 = vmatmul.mubr.bf16.gmra.mrb[0].mxu0 %v329
    %v4175 = vpop.f32.mrb[0].mxu0
    %v4176 = vadd.f32 %v3901, %v4175
    %v4177 = vpop.f32.mrb[0].mxu0
    %v4178 = vadd.f32 %v3905, %v4177
    %v4179 = vpop.f32.mrb[0].mxu0
    %v4180 = vadd.f32 %v3901, %v4179
    %v4181 = vpop.f32.mrb[0].mxu0
    %v4182 = vadd.f32 %v3905, %v4181
    %4183 = vmatprep.mubr.bf16.mxu0 0
    %4184 = vmatmul.mubr.bf16.gmra.mrb[0].mxu0 %v330
    %v4185 = vpop.f32.mrb[0].mxu0
    %v4186 = vadd.f32 %v3901, %v4185
    %v4187 = vpop.f32.mrb[0].mxu0
    %v4188 = vadd.f32 %v3905, %v4187
    %v4189 = vpop.f32.mrb[0].mxu0
    %v4190 = vadd.f32 %v3901, %v4189
    %v4191 = vpop.f32.mrb[0].mxu0
    %v4192 = vadd.f32 %v3905, %v4191
    %4193 = vmatprep.mubr.bf16.mxu0 0
    %4194 = vmatmul.mubr.bf16.gmra.mrb[0].mxu0 %v331
    %v4195 = vpop.f32.mrb[0].mxu0
    %v4196 = vadd.f32 %v3901, %v4195
    %v4197 = vpop.f32.mrb[0].mxu0
    %v4198 = vadd.f32 %v3905, %v4197
    %v4199 = vpop.f32.mrb[0].mxu0
    %v4200 = vadd.f32 %v3901, %v4199
    %v4201 = vpop.f32.mrb[0].mxu0
    %v4202 = vadd.f32 %v3905, %v4201
    %4203 = vmatprep.mubr.bf16.mxu0 0
    %4204 = vmatmul.mubr.bf16.gmra.mrb[0].mxu0 %v332
    %v4205 = vpop.f32.mrb[0].mxu0
    %v4206 = vadd.f32 %v3901, %v4205
    %v4207 = vpop.f32.mrb[0].mxu0
    %v4208 = vadd.f32 %v3905, %v4207
    %v4209 = vpop.f32.mrb[0].mxu0
    %v4210 = vadd.f32 %v3901, %v4209
    %v4211 = vpop.f32.mrb[0].mxu0
    %v4212 = vadd.f32 %v3905, %v4211
    %4213 = vmatprep.mubr.bf16.mxu0 0
    %4214 = vmatmul.mubr.bf16.gmra.mrb[0].mxu0 %v333
    %v4215 = vpop.f32.mrb[0].mxu0
    %v4216 = vadd.f32 %v3901, %v4215
    %v4217 = vpop.f32.mrb[0].mxu0
    %v4218 = vadd.f32 %v3905, %v4217
    %v4219 = vpop.f32.mrb[0].mxu0
    %v4220 = vadd.f32 %v3901, %v4219
    %v4221 = vpop.f32.mrb[0].mxu0
    %v4222 = vadd.f32 %v3905, %v4221
    %4223 = vmatprep.mubr.bf16.mxu0 0
    %4224 = vmatmul.mubr.bf16.gmra.mrb[0].mxu0 %v334
    %v4225 = vpop.f32.mrb[0].mxu0
    %v4226 = vadd.f32 %v3901, %v4225
    %v4227 = vpop.f32.mrb[0].mxu0
    %v4228 = vadd.f32 %v3905, %v4227
    %v4229 = vpop.f32.mrb[0].mxu0
    %v4230 = vadd.f32 %v3901, %v4229
    %v4231 = vpop.f32.mrb[0].mxu0
    %v4232 = vadd.f32 %v3905, %v4231
    %4233 = vmatprep.mubr.bf16.mxu0 0
    %4234 = vmatmul.mubr.bf16.gmra.mrb[0].mxu0 %v335
    %v4235 = vpop.f32.mrb[0].mxu0
    %v4236 = vadd.f32 %v3901, %v4235
    %v4237 = vpop.f32.mrb[0].mxu0
    %v4238 = vadd.f32 %v3905, %v4237
    %v4239 = vpop.f32.mrb[0].mxu0
    %v4240 = vadd.f32 %v3901, %v4239
    %v4241 = vpop.f32.mrb[0].mxu0
    %v4242 = vadd.f32 %v3905, %v4241
    %4243 = vdwg.mxu0
    %4244 = vmatprep.subr.bf16.mxu0 %v4054
    %4245 = vmatpush1.bf16.msra.mxu0 %v4053
    %4246 = vmatprep.subr.bf16.mxu0 %v4059
    %4247 = vmatpush1.bf16.msra.mxu0 %v4058
    %4248 = vmatprep.subr.bf16.mxu0 %v4064
    %4249 = vmatpush1.bf16.msra.mxu0 %v4063
    %4250 = vmatprep.subr.bf16.mxu0 %v4069
    %4251 = vmatpush1.bf16.msra.mxu0 %v4068
    %4252 = vmatprep.subr.bf16.mxu0 %v4074
    %4253 = vmatpush1.bf16.msra.mxu0 %v4073
    %4254 = vmatprep.subr.bf16.mxu0 %v4079
    %4255 = vmatpush1.bf16.msra.mxu0 %v4078
    %4256 = vmatprep.subr.bf16.mxu0 %v4084
    %4257 = vmatpush1.bf16.msra.mxu0 %v4083
    %4258 = vmatprep.subr.bf16.mxu0 %v4089
    %4259 = vmatpush1.bf16.msra.mxu0 %v4088
    %4260 = vmatprep.subr.bf16.mxu0 0
    %4261 = vmatpush1.bf16.msra.mxu0 0
    %4262 = vmatprep.subr.bf16.mxu0 0
    %4263 = vmatpush1.bf16.msra.mxu0 0
    %4264 = vmatprep.subr.bf16.mxu0 0
    %4265 = vmatpush1.bf16.msra.mxu0 0
    %4266 = vmatprep.subr.bf16.mxu0 0
    %4267 = vmatpush1.bf16.msra.mxu0 0
    %4268 = vmatprep.subr.bf16.mxu0 0
    %4269 = vmatpush1.bf16.msra.mxu0 0
    %4270 = vmatprep.subr.bf16.mxu0 0
    %4271 = vmatpush1.bf16.msra.mxu0 0
    %4272 = vmatprep.subr.bf16.mxu0 0
    %4273 = vmatpush1.bf16.msra.mxu0 0
    %4274 = vmatprep.subr.bf16.mxu0 0
    %4275 = vmatpush1.bf16.msra.mxu0 0
    %4276 = vmatprep.mubr.bf16.mxu0 0
    %4277 = vmatmul.mubr.bf16.gmra.mrb[0].mxu0 %v328
    %v4278 = vpop.f32.mrb[0].mxu0
    %v4279 = vadd.f32 %v3909, %v4278
    %v4280 = vpop.f32.mrb[0].mxu0
    %v4281 = vadd.f32 %v3913, %v4280
    %v4282 = vpop.f32.mrb[0].mxu0
    %v4283 = vadd.f32 %v3909, %v4282
    %v4284 = vpop.f32.mrb[0].mxu0
    %v4285 = vadd.f32 %v3913, %v4284
    %4286 = vmatprep.mubr.bf16.mxu0 0
    %4287 = vmatmul.mubr.bf16.gmra.mrb[0].mxu0 %v329
    %v4288 = vpop.f32.mrb[0].mxu0
    %v4289 = vadd.f32 %v3909, %v4288
    %v4290 = vpop.f32.mrb[0].mxu0
    %v4291 = vadd.f32 %v3913, %v4290
    %v4292 = vpop.f32.mrb[0].mxu0
    %v4293 = vadd.f32 %v3909, %v4292
    %v4294 = vpop.f32.mrb[0].mxu0
    %v4295 = vadd.f32 %v3913, %v4294
    %4296 = vmatprep.mubr.bf16.mxu0 0
    %4297 = vmatmul.mubr.bf16.gmra.mrb[0].mxu0 %v330
    %v4298 = vpop.f32.mrb[0].mxu0
    %v4299 = vadd.f32 %v3909, %v4298
    %v4300 = vpop.f32.mrb[0].mxu0
    %v4301 = vadd.f32 %v3913, %v4300
    %v4302 = vpop.f32.mrb[0].mxu0
    %v4303 = vadd.f32 %v3909, %v4302
    %v4304 = vpop.f32.mrb[0].mxu0
    %v4305 = vadd.f32 %v3913, %v4304
    %4306 = vmatprep.mubr.bf16.mxu0 0
    %4307 = vmatmul.mubr.bf16.gmra.mrb[0].mxu0 %v331
    %v4308 = vpop.f32.mrb[0].mxu0
    %v4309 = vadd.f32 %v3909, %v4308
    %v4310 = vpop.f32.mrb[0].mxu0
    %v4311 = vadd.f32 %v3913, %v4310
    %v4312 = vpop.f32.mrb[0].mxu0
    %v4313 = vadd.f32 %v3909, %v4312
    %v4314 = vpop.f32.mrb[0].mxu0
    %v4315 = vadd.f32 %v3913, %v4314
    %4316 = vmatprep.mubr.bf16.mxu0 0
    %4317 = vmatmul.mubr.bf16.gmra.mrb[0].mxu0 %v332
    %v4318 = vpop.f32.mrb[0].mxu0
    %v4319 = vadd.f32 %v3909, %v4318
    %v4320 = vpop.f32.mrb[0].mxu0
    %v4321 = vadd.f32 %v3913, %v4320
    %v4322 = vpop.f32.mrb[0].mxu0
    %v4323 = vadd.f32 %v3909, %v4322
    %v4324 = vpop.f32.mrb[0].mxu0
    %v4325 = vadd.f32 %v3913, %v4324
    %4326 = vmatprep.mubr.bf16.mxu0 0
    %4327 = vmatmul.mubr.bf16.gmra.mrb[0].mxu0 %v333
    %v4328 = vpop.f32.mrb[0].mxu0
    %v4329 = vadd.f32 %v3909, %v4328
    %v4330 = vpop.f32.mrb[0].mxu0
    %v4331 = vadd.f32 %v3913, %v4330
    %v4332 = vpop.f32.mrb[0].mxu0
    %v4333 = vadd.f32 %v3909, %v4332
    %v4334 = vpop.f32.mrb[0].mxu0
    %v4335 = vadd.f32 %v3913, %v4334
    %4336 = vmatprep.mubr.bf16.mxu0 0
    %4337 = vmatmul.mubr.bf16.gmra.mrb[0].mxu0 %v334
    %v4338 = vpop.f32.mrb[0].mxu0
    %v4339 = vadd.f32 %v3909, %v4338
    %v4340 = vpop.f32.mrb[0].mxu0
    %v4341 = vadd.f32 %v3913, %v4340
    %v4342 = vpop.f32.mrb[0].mxu0
    %v4343 = vadd.f32 %v3909, %v4342
    %v4344 = vpop.f32.mrb[0].mxu0
    %v4345 = vadd.f32 %v3913, %v4344
    %4346 = vmatprep.mubr.bf16.mxu0 0
    %4347 = vmatmul.mubr.bf16.gmra.mrb[0].mxu0 %v335
    %v4348 = vpop.f32.mrb[0].mxu0
    %v4349 = vadd.f32 %v3909, %v4348
    %v4350 = vpop.f32.mrb[0].mxu0
    %v4351 = vadd.f32 %v3913, %v4350
    %v4352 = vpop.f32.mrb[0].mxu0
    %v4353 = vadd.f32 %v3909, %v4352
    %v4354 = vpop.f32.mrb[0].mxu0
    %v4355 = vadd.f32 %v3913, %v4354
    %4356 = vdwg.mxu0
    %4357 = vmatprep.subr.bf16.mxu0 0
    %4358 = vmatpush1.bf16.msra.mxu0 %v4055
    %4359 = vmatprep.subr.bf16.mxu0 0
    %4360 = vmatpush1.bf16.msra.mxu0 %v4060
    %4361 = vmatprep.subr.bf16.mxu0 0
    %4362 = vmatpush1.bf16.msra.mxu0 %v4065
    %4363 = vmatprep.subr.bf16.mxu0 0
    %4364 = vmatpush1.bf16.msra.mxu0 %v4070
    %4365 = vmatprep.subr.bf16.mxu0 0
    %4366 = vmatpush1.bf16.msra.mxu0 %v4075
    %4367 = vmatprep.subr.bf16.mxu0 0
    %4368 = vmatpush1.bf16.msra.mxu0 %v4080
    %4369 = vmatprep.subr.bf16.mxu0 0
    %4370 = vmatpush1.bf16.msra.mxu0 %v4085
    %4371 = vmatprep.subr.bf16.mxu0 0
    %4372 = vmatpush1.bf16.msra.mxu0 %v4090
    %4373 = vmatprep.subr.bf16.mxu0 0
    %4374 = vmatpush1.bf16.msra.mxu0 0
    %4375 = vmatprep.subr.bf16.mxu0 0
    %4376 = vmatpush1.bf16.msra.mxu0 0
    %4377 = vmatprep.subr.bf16.mxu0 0
    %4378 = vmatpush1.bf16.msra.mxu0 0
    %4379 = vmatprep.subr.bf16.mxu0 0
    %4380 = vmatpush1.bf16.msra.mxu0 0
    %4381 = vmatprep.subr.bf16.mxu0 0
    %4382 = vmatpush1.bf16.msra.mxu0 0
    %4383 = vmatprep.subr.bf16.mxu0 0
    %4384 = vmatpush1.bf16.msra.mxu0 0
    %4385 = vmatprep.subr.bf16.mxu0 0
    %4386 = vmatpush1.bf16.msra.mxu0 0
    %4387 = vmatprep.subr.bf16.mxu0 0
    %4388 = vmatpush1.bf16.msra.mxu0 0
    %4389 = vmatprep.mubr.bf16.mxu0 0
    %4390 = vmatmul.mubr.bf16.gmra.mrb[0].mxu0 %v328
    %v4391 = vpop.f32.mrb[0].mxu0
    %v4392 = vadd.f32 %v3917, %v4391
    %v4393 = vpop.f32.mrb[0].mxu0
    %v4394 = vpop.f32.mrb[0].mxu0
    %v4395 = vadd.f32 %v3917, %v4394
    %v4396 = vpop.f32.mrb[0].mxu0
    %4397 = vmatprep.mubr.bf16.mxu0 0
    %4398 = vmatmul.mubr.bf16.gmra.mrb[0].mxu0 %v329
    %v4399 = vpop.f32.mrb[0].mxu0
    %v4400 = vadd.f32 %v3917, %v4399
    %v4401 = vpop.f32.mrb[0].mxu0
    %v4402 = vpop.f32.mrb[0].mxu0
    %v4403 = vadd.f32 %v3917, %v4402
    %v4404 = vpop.f32.mrb[0].mxu0
    %4405 = vmatprep.mubr.bf16.mxu0 0
    %4406 = vmatmul.mubr.bf16.gmra.mrb[0].mxu0 %v330
    %v4407 = vpop.f32.mrb[0].mxu0
    %v4408 = vadd.f32 %v3917, %v4407
    %v4409 = vpop.f32.mrb[0].mxu0
    %v4410 = vpop.f32.mrb[0].mxu0
    %v4411 = vadd.f32 %v3917, %v4410
    %v4412 = vpop.f32.mrb[0].mxu0
    %4413 = vmatprep.mubr.bf16.mxu0 0
    %4414 = vmatmul.mubr.bf16.gmra.mrb[0].mxu0 %v331
    %v4415 = vpop.f32.mrb[0].mxu0
    %v4416 = vadd.f32 %v3917, %v4415
    %v4417 = vpop.f32.mrb[0].mxu0
    %v4418 = vpop.f32.mrb[0].mxu0
    %v4419 = vadd.f32 %v3917, %v4418
    %v4420 = vpop.f32.mrb[0].mxu0
    %4421 = vmatprep.mubr.bf16.mxu0 0
    %4422 = vmatmul.mubr.bf16.gmra.mrb[0].mxu0 %v332
    %v4423 = vpop.f32.mrb[0].mxu0
    %v4424 = vadd.f32 %v3917, %v4423
    %v4425 = vpop.f32.mrb[0].mxu0
    %v4426 = vpop.f32.mrb[0].mxu0
    %v4427 = vadd.f32 %v3917, %v4426
    %v4428 = vpop.f32.mrb[0].mxu0
    %4429 = vmatprep.mubr.bf16.mxu0 0
    %4430 = vmatmul.mubr.bf16.gmra.mrb[0].mxu0 %v333
    %v4431 = vpop.f32.mrb[0].mxu0
    %v4432 = vadd.f32 %v3917, %v4431
    %v4433 = vpop.f32.mrb[0].mxu0
    %v4434 = vpop.f32.mrb[0].mxu0
    %v4435 = vadd.f32 %v3917, %v4434
    %v4436 = vpop.f32.mrb[0].mxu0
    %4437 = vmatprep.mubr.bf16.mxu0 0
    %4438 = vmatmul.mubr.bf16.gmra.mrb[0].mxu0 %v334
    %v4439 = vpop.f32.mrb[0].mxu0
    %v4440 = vadd.f32 %v3917, %v4439
    %v4441 = vpop.f32.mrb[0].mxu0
    %v4442 = vpop.f32.mrb[0].mxu0
    %v4443 = vadd.f32 %v3917, %v4442
    %v4444 = vpop.f32.mrb[0].mxu0
    %4445 = vmatprep.mubr.bf16.mxu0 0
    %4446 = vmatmul.mubr.bf16.gmra.mrb[0].mxu0 %v335
    %v4447 = vpop.f32.mrb[0].mxu0
    %v4448 = vadd.f32 %v3917, %v4447
    %v4449 = vpop.f32.mrb[0].mxu0
    %v4450 = vpop.f32.mrb[0].mxu0
    %v4451 = vadd.f32 %v3917, %v4450
    %v4452 = vpop.f32.mrb[0].mxu0
    %4453 = vdwg.mxu0
    %v4454 = vmax.f32 %v4166, 0.0
    %v4455 = vmax.f32 %v4168, 0.0
    %v4456 = vmax.f32 %v4279, 0.0
    %v4457 = vmax.f32 %v4281, 0.0
    %v4458 = vmax.f32 %v4392, 0.0
    %v4459 = vmax.f32 %v4170, 0.0
    %v4460 = vmax.f32 %v4172, 0.0
    %v4461 = vmax.f32 %v4283, 0.0
    %v4462 = vmax.f32 %v4285, 0.0
    %v4463 = vmax.f32 %v4395, 0.0
    %v4464 = vmax.f32 %v4176, 0.0
    %v4465 = vmax.f32 %v4178, 0.0
    %v4466 = vmax.f32 %v4289, 0.0
    %v4467 = vmax.f32 %v4291, 0.0
    %v4468 = vmax.f32 %v4400, 0.0
    %v4469 = vmax.f32 %v4180, 0.0
    %v4470 = vmax.f32 %v4182, 0.0
    %v4471 = vmax.f32 %v4293, 0.0
    %v4472 = vmax.f32 %v4295, 0.0
    %v4473 = vmax.f32 %v4403, 0.0
    %v4474 = vmax.f32 %v4186, 0.0
    %v4475 = vmax.f32 %v4188, 0.0
    %v4476 = vmax.f32 %v4299, 0.0
    %v4477 = vmax.f32 %v4301, 0.0
    %v4478 = vmax.f32 %v4408, 0.0
    %v4479 = vmax.f32 %v4190, 0.0
    %v4480 = vmax.f32 %v4192, 0.0
    %v4481 = vmax.f32 %v4303, 0.0
    %v4482 = vmax.f32 %v4305, 0.0
    %v4483 = vmax.f32 %v4411, 0.0
    %v4484 = vmax.f32 %v4196, 0.0
    %v4485 = vmax.f32 %v4198, 0.0
    %v4486 = vmax.f32 %v4309, 0.0
    %v4487 = vmax.f32 %v4311, 0.0
    %v4488 = vmax.f32 %v4416, 0.0
    %v4489 = vmax.f32 %v4200, 0.0
    %v4490 = vmax.f32 %v4202, 0.0
    %v4491 = vmax.f32 %v4313, 0.0
    %v4492 = vmax.f32 %v4315, 0.0
    %v4493 = vmax.f32 %v4419, 0.0
    %v4494 = vmax.f32 %v4206, 0.0
    %v4495 = vmax.f32 %v4208, 0.0
    %v4496 = vmax.f32 %v4319, 0.0
    %v4497 = vmax.f32 %v4321, 0.0
    %v4498 = vmax.f32 %v4424, 0.0
    %v4499 = vmax.f32 %v4210, 0.0
    %v4500 = vmax.f32 %v4212, 0.0
    %v4501 = vmax.f32 %v4323, 0.0
    %v4502 = vmax.f32 %v4325, 0.0
    %v4503 = vmax.f32 %v4427, 0.0
    %v4504 = vmax.f32 %v4216, 0.0
    %v4505 = vmax.f32 %v4218, 0.0
    %v4506 = vmax.f32 %v4329, 0.0
    %v4507 = vmax.f32 %v4331, 0.0
    %v4508 = vmax.f32 %v4432, 0.0
    %v4509 = vmax.f32 %v4220, 0.0
    %v4510 = vmax.f32 %v4222, 0.0
    %v4511 = vmax.f32 %v4333, 0.0
    %v4512 = vmax.f32 %v4335, 0.0
    %v4513 = vmax.f32 %v4435, 0.0
    %v4514 = vmax.f32 %v4226, 0.0
    %v4515 = vmax.f32 %v4228, 0.0
    %v4516 = vmax.f32 %v4339, 0.0
    %v4517 = vmax.f32 %v4341, 0.0
    %v4518 = vmax.f32 %v4440, 0.0
    %v4519 = vmax.f32 %v4230, 0.0
    %v4520 = vmax.f32 %v4232, 0.0
    %v4521 = vmax.f32 %v4343, 0.0
    %v4522 = vmax.f32 %v4345, 0.0
    %v4523 = vmax.f32 %v4443, 0.0
    %v4524 = vmax.f32 %v4236, 0.0
    %v4525 = vmax.f32 %v4238, 0.0
    %v4526 = vmax.f32 %v4349, 0.0
    %v4527 = vmax.f32 %v4351, 0.0
    %v4528 = vmax.f32 %v4448, 0.0
    %v4529 = vmax.f32 %v4240, 0.0
    %v4530 = vmax.f32 %v4242, 0.0
    %v4531 = vmax.f32 %v4353, 0.0
    %v4532 = vmax.f32 %v4355, 0.0
    %v4533 = vmax.f32 %v4451, 0.0
    %v4534 = vpack.c.bf16 %v4459, %v4454
    %v4535 = vpack.c.bf16 %v4460, %v4455
    %v4536 = vpack.c.bf16 %v4461, %v4456
    %v4537 = vpack.c.bf16 %v4462, %v4457
    %v4538 = vpack.c.bf16 %v4463, %v4458
    %v4539 = vpack.c.bf16 %v4469, %v4464
    %v4540 = vpack.c.bf16 %v4470, %v4465
    %v4541 = vpack.c.bf16 %v4471, %v4466
    %v4542 = vpack.c.bf16 %v4472, %v4467
    %v4543 = vpack.c.bf16 %v4473, %v4468
    %v4544 = vpack.c.bf16 %v4479, %v4474
    %v4545 = vpack.c.bf16 %v4480, %v4475
    %v4546 = vpack.c.bf16 %v4481, %v4476
    %v4547 = vpack.c.bf16 %v4482, %v4477
    %v4548 = vpack.c.bf16 %v4483, %v4478
    %v4549 = vpack.c.bf16 %v4489, %v4484
    %v4550 = vpack.c.bf16 %v4490, %v4485
    %v4551 = vpack.c.bf16 %v4491, %v4486
    %v4552 = vpack.c.bf16 %v4492, %v4487
    %v4553 = vpack.c.bf16 %v4493, %v4488
    %v4554 = vpack.c.bf16 %v4499, %v4494
    %v4555 = vpack.c.bf16 %v4500, %v4495
    %v4556 = vpack.c.bf16 %v4501, %v4496
    %v4557 = vpack.c.bf16 %v4502, %v4497
    %v4558 = vpack.c.bf16 %v4503, %v4498
    %v4559 = vpack.c.bf16 %v4509, %v4504
    %v4560 = vpack.c.bf16 %v4510, %v4505
    %v4561 = vpack.c.bf16 %v4511, %v4506
    %v4562 = vpack.c.bf16 %v4512, %v4507
    %v4563 = vpack.c.bf16 %v4513, %v4508
    %v4564 = vpack.c.bf16 %v4519, %v4514
    %v4565 = vpack.c.bf16 %v4520, %v4515
    %v4566 = vpack.c.bf16 %v4521, %v4516
    %v4567 = vpack.c.bf16 %v4522, %v4517
    %v4568 = vpack.c.bf16 %v4523, %v4518
    %v4569 = vpack.c.bf16 %v4529, %v4524
    %v4570 = vpack.c.bf16 %v4530, %v4525
    %v4571 = vpack.c.bf16 %v4531, %v4526
    %v4572 = vpack.c.bf16 %v4532, %v4527
    %v4573 = vpack.c.bf16 %v4533, %v4528
    %v4574 = vld [vmem:[#allocation10 + $0x800] sm:$0xff]
    %v4575 = vld [vmem:[#allocation10 + $0x808] sm:$0xff]
    %v4576 = vld [vmem:[#allocation10 + $0x810] sm:$0xff]
    %v4577 = vld [vmem:[#allocation10 + $0x818] sm:$0xff]
    %v4578 = vld [vmem:[#allocation10 + $0x820] sm:$0xff]
    %v4579 = vld [vmem:[#allocation10 + $0x828] sm:$0xff]
    %v4580 = vld [vmem:[#allocation10 + $0x830] sm:$0xff]
    %v4581 = vld [vmem:[#allocation10 + $0x838] sm:$0xff]
    %v4582 = vld [vmem:[#allocation10 + $0x840] sm:$0xff]
    %v4583 = vld [vmem:[#allocation10 + $0x848] sm:$0xff]
    %v4584 = vld [vmem:[#allocation10 + $0x850] sm:$0xff]
    %v4585 = vld [vmem:[#allocation10 + $0x858] sm:$0xff]
    %v4586 = vld [vmem:[#allocation10 + $0x860] sm:$0xff]
    %v4587 = vld [vmem:[#allocation10 + $0x868] sm:$0xff]
    %v4588 = vld [vmem:[#allocation10 + $0x870] sm:$0xff]
    %v4589 = vld [vmem:[#allocation10 + $0x878] sm:$0xff]
    %v4590 = vld [vmem:[#allocation10 + $0x880] sm:$0xff]
    %v4591 = vld [vmem:[#allocation10 + $0x888] sm:$0xff]
    %v4592 = vld [vmem:[#allocation10 + $0x890] sm:$0xff]
    %v4593 = vld [vmem:[#allocation10 + $0x898] sm:$0xff]
    %v4594 = vld [vmem:[#allocation10 + $0x8a0] sm:$0xff]
    %v4595 = vld [vmem:[#allocation10 + $0x8a8] sm:$0xff]
    %v4596 = vld [vmem:[#allocation10 + $0x8b0] sm:$0xff]
    %v4597 = vld [vmem:[#allocation10 + $0x8b8] sm:$0xff]
    %v4598 = vld [vmem:[#allocation10 + $0x8c0] sm:$0xff]
    %v4599 = vld [vmem:[#allocation10 + $0x8c8] sm:$0xff]
    %v4600 = vld [vmem:[#allocation10 + $0x8d0] sm:$0xff]
    %v4601 = vld [vmem:[#allocation10 + $0x8d8] sm:$0xff]
    %v4602 = vld [vmem:[#allocation10 + $0x8e0] sm:$0xff]
    %v4603 = vld [vmem:[#allocation10 + $0x8e8] sm:$0xff]
    %v4604 = vld [vmem:[#allocation10 + $0x8f0] sm:$0xff]
    %v4605 = vld [vmem:[#allocation10 + $0x8f8] sm:$0xff]
    %v4606 = vld [vmem:[#allocation10 + $0x900] sm:$0xff]
    %v4607 = vld [vmem:[#allocation10 + $0x908] sm:$0xff]
    %v4608 = vld [vmem:[#allocation10 + $0x910] sm:$0xff]
    %v4609 = vld [vmem:[#allocation10 + $0x918] sm:$0xff]
    %v4610 = vld [vmem:[#allocation10 + $0x920] sm:$0xff]
    %v4611 = vld [vmem:[#allocation10 + $0x928] sm:$0xff]
    %v4612 = vld [vmem:[#allocation10 + $0x930] sm:$0xff]
    %v4613 = vld [vmem:[#allocation10 + $0x938] sm:$0xff]
    %v4614 = vld [vmem:[#allocation10 + $0x940] sm:$0xff]
    %v4615 = vld [vmem:[#allocation10 + $0x948] sm:$0xff]
    %v4616 = vld [vmem:[#allocation10 + $0x950] sm:$0xff]
    %v4617 = vld [vmem:[#allocation10 + $0x958] sm:$0xff]
    %v4618 = vld [vmem:[#allocation10 + $0x960] sm:$0xff]
    %v4619 = vld [vmem:[#allocation10 + $0x968] sm:$0xff]
    %v4620 = vld [vmem:[#allocation10 + $0x970] sm:$0xff]
    %v4621 = vld [vmem:[#allocation10 + $0x978] sm:$0xff]
    %v4622 = vld [vmem:[#allocation10 + $0x980] sm:$0xff]
    %v4623 = vld [vmem:[#allocation10 + $0x988] sm:$0xff]
    %v4624 = vld [vmem:[#allocation10 + $0x990] sm:$0xff]
    %v4625 = vld [vmem:[#allocation10 + $0x998] sm:$0xff]
    %v4626 = vld [vmem:[#allocation10 + $0x9a0] sm:$0xff]
    %v4627 = vld [vmem:[#allocation10 + $0x9a8] sm:$0xff]
    %v4628 = vld [vmem:[#allocation10 + $0x9b0] sm:$0xff]
    %v4629 = vld [vmem:[#allocation10 + $0x9b8] sm:$0xff]
    %v4630 = vld [vmem:[#allocation10 + $0x9c0] sm:$0xff]
    %v4631 = vld [vmem:[#allocation10 + $0x9c8] sm:$0xff]
    %v4632 = vld [vmem:[#allocation10 + $0x9d0] sm:$0xff]
    %v4633 = vld [vmem:[#allocation10 + $0x9d8] sm:$0xff]
    %v4634 = vld [vmem:[#allocation10 + $0x9e0] sm:$0xff]
    %v4635 = vld [vmem:[#allocation10 + $0x9e8] sm:$0xff]
    %v4636 = vld [vmem:[#allocation10 + $0x9f0] sm:$0xff]
    %v4637 = vld [vmem:[#allocation10 + $0x9f8] sm:$0xff]
    %v4638 = vld [vmem:[#allocation10 + $0xa00] sm:$0xff]
    %v4639 = vld [vmem:[#allocation10 + $0xa08] sm:$0xff]
    %v4640 = vld [vmem:[#allocation10 + $0xa10] sm:$0xff]
    %v4641 = vld [vmem:[#allocation10 + $0xa18] sm:$0xff]
    %v4642 = vld [vmem:[#allocation10 + $0xa20] sm:$0xff]
    %v4643 = vld [vmem:[#allocation10 + $0xa28] sm:$0xff]
    %v4644 = vld [vmem:[#allocation10 + $0xa30] sm:$0xff]
    %v4645 = vld [vmem:[#allocation10 + $0xa38] sm:$0xff]
    %v4646 = vld [vmem:[#allocation10 + $0xa40] sm:$0xff]
    %v4647 = vld [vmem:[#allocation10 + $0xa48] sm:$0xff]
    %v4648 = vld [vmem:[#allocation10 + $0xa50] sm:$0xff]
    %v4649 = vld [vmem:[#allocation10 + $0xa58] sm:$0xff]
    %v4650 = vld [vmem:[#allocation10 + $0xa60] sm:$0xff]
    %v4651 = vld [vmem:[#allocation10 + $0xa68] sm:$0xff]
    %v4652 = vld [vmem:[#allocation10 + $0xa70] sm:$0xff]
    %v4653 = vld [vmem:[#allocation10 + $0xa78] sm:$0xff]
    %v4654 = vld [vmem:[#allocation10 + $0xa80] sm:$0xff]
    %v4655 = vld [vmem:[#allocation10 + $0xa88] sm:$0xff]
    %v4656 = vld [vmem:[#allocation10 + $0xa90] sm:$0xff]
    %v4657 = vld [vmem:[#allocation10 + $0xa98] sm:$0xff]
    %v4658 = vld [vmem:[#allocation10 + $0xaa0] sm:$0xff]
    %v4659 = vld [vmem:[#allocation10 + $0xaa8] sm:$0xff]
    %v4660 = vld [vmem:[#allocation10 + $0xab0] sm:$0xff]
    %v4661 = vld [vmem:[#allocation10 + $0xab8] sm:$0xff]
    %v4662 = vld [vmem:[#allocation10 + $0xac0] sm:$0xff]
    %v4663 = vld [vmem:[#allocation10 + $0xac8] sm:$0xff]
    %v4664 = vld [vmem:[#allocation10 + $0xad0] sm:$0xff]
    %v4665 = vld [vmem:[#allocation10 + $0xad8] sm:$0xff]
    %v4666 = vld [vmem:[#allocation10 + $0xae0] sm:$0xff]
    %v4667 = vld [vmem:[#allocation10 + $0xae8] sm:$0xff]
    %v4668 = vld [vmem:[#allocation10 + $0xaf0] sm:$0xff]
    %v4669 = vld [vmem:[#allocation10 + $0xaf8] sm:$0xff]
    %v4670 = vld [vmem:[#allocation10 + $0xb00] sm:$0xff]
    %v4671 = vld [vmem:[#allocation10 + $0xb08] sm:$0xff]
    %v4672 = vld [vmem:[#allocation10 + $0xb10] sm:$0xff]
    %v4673 = vld [vmem:[#allocation10 + $0xb18] sm:$0xff]
    %v4674 = vld [vmem:[#allocation10 + $0xb20] sm:$0xff]
    %v4675 = vld [vmem:[#allocation10 + $0xb28] sm:$0xff]
    %v4676 = vld [vmem:[#allocation10 + $0xb30] sm:$0xff]
    %v4677 = vld [vmem:[#allocation10 + $0xb38] sm:$0xff]
    %v4678 = vld [vmem:[#allocation10 + $0xb40] sm:$0xff]
    %v4679 = vld [vmem:[#allocation10 + $0xb48] sm:$0xff]
    %v4680 = vld [vmem:[#allocation10 + $0xb50] sm:$0xff]
    %v4681 = vld [vmem:[#allocation10 + $0xb58] sm:$0xff]
    %v4682 = vld [vmem:[#allocation10 + $0xb60] sm:$0xff]
    %v4683 = vld [vmem:[#allocation10 + $0xb68] sm:$0xff]
    %v4684 = vld [vmem:[#allocation10 + $0xb70] sm:$0xff]
    %v4685 = vld [vmem:[#allocation10 + $0xb78] sm:$0xff]
    %v4686 = vld [vmem:[#allocation10 + $0xb80] sm:$0xff]
    %v4687 = vld [vmem:[#allocation10 + $0xb88] sm:$0xff]
    %v4688 = vld [vmem:[#allocation10 + $0xb90] sm:$0xff]
    %v4689 = vld [vmem:[#allocation10 + $0xb98] sm:$0xff]
    %v4690 = vld [vmem:[#allocation10 + $0xba0] sm:$0xff]
    %v4691 = vld [vmem:[#allocation10 + $0xba8] sm:$0xff]
    %v4692 = vld [vmem:[#allocation10 + $0xbb0] sm:$0xff]
    %v4693 = vld [vmem:[#allocation10 + $0xbb8] sm:$0xff]
    %v4694 = vld [vmem:[#allocation10 + $0xbc0] sm:$0xff]
    %v4695 = vld [vmem:[#allocation10 + $0xbc8] sm:$0xff]
    %v4696 = vld [vmem:[#allocation10 + $0xbd0] sm:$0xff]
    %v4697 = vld [vmem:[#allocation10 + $0xbd8] sm:$0xff]
    %v4698 = vld [vmem:[#allocation10 + $0xbe0] sm:$0xff]
    %v4699 = vld [vmem:[#allocation10 + $0xbe8] sm:$0xff]
    %v4700 = vld [vmem:[#allocation10 + $0xbf0] sm:$0xff]
    %v4701 = vld [vmem:[#allocation10 + $0xbf8] sm:$0xff]
    %v4702 = vld [vmem:[#allocation10 + $0xc00] sm:$0xff]
    %v4703 = vld [vmem:[#allocation10 + $0xc08] sm:$0xff]
    %v4704 = vld [vmem:[#allocation10 + $0xc10] sm:$0xff]
    %v4705 = vld [vmem:[#allocation10 + $0xc18] sm:$0xff]
    %v4706 = vld [vmem:[#allocation10 + $0xc20] sm:$0xff]
    %v4707 = vld [vmem:[#allocation10 + $0xc28] sm:$0xff]
    %v4708 = vld [vmem:[#allocation10 + $0xc30] sm:$0xff]
    %v4709 = vld [vmem:[#allocation10 + $0xc38] sm:$0xff]
    %v4710 = vld [vmem:[#allocation10 + $0xc40] sm:$0xff]
    %v4711 = vld [vmem:[#allocation10 + $0xc48] sm:$0xff]
    %v4712 = vld [vmem:[#allocation10 + $0xc50] sm:$0xff]
    %v4713 = vld [vmem:[#allocation10 + $0xc58] sm:$0xff]
    %v4714 = vld [vmem:[#allocation10 + $0xc60] sm:$0xff]
    %v4715 = vld [vmem:[#allocation10 + $0xc68] sm:$0xff]
    %v4716 = vld [vmem:[#allocation10 + $0xc70] sm:$0xff]
    %v4717 = vld [vmem:[#allocation10 + $0xc78] sm:$0xff]
    %v4718 = vld [vmem:[#allocation10 + $0xc80] sm:$0xff]
    %v4719 = vld [vmem:[#allocation10 + $0xc88] sm:$0xff]
    %v4720 = vld [vmem:[#allocation10 + $0xc90] sm:$0xff]
    %v4721 = vld [vmem:[#allocation10 + $0xc98] sm:$0xff]
    %v4722 = vld [vmem:[#allocation10 + $0xca0] sm:$0xff]
    %v4723 = vld [vmem:[#allocation10 + $0xca8] sm:$0xff]
    %v4724 = vld [vmem:[#allocation10 + $0xcb0] sm:$0xff]
    %v4725 = vld [vmem:[#allocation10 + $0xcb8] sm:$0xff]
    %v4726 = vld [vmem:[#allocation10 + $0xcc0] sm:$0xff]
    %v4727 = vld [vmem:[#allocation10 + $0xcc8] sm:$0xff]
    %v4728 = vld [vmem:[#allocation10 + $0xcd0] sm:$0xff]
    %v4729 = vld [vmem:[#allocation10 + $0xcd8] sm:$0xff]
    %v4730 = vld [vmem:[#allocation10 + $0xce0] sm:$0xff]
    %v4731 = vld [vmem:[#allocation10 + $0xce8] sm:$0xff]
    %v4732 = vld [vmem:[#allocation10 + $0xcf0] sm:$0xff]
    %v4733 = vld [vmem:[#allocation10 + $0xcf8] sm:$0xff]
    %v4894 = vunpack.c.l.b16 %v4574
    %v4895 = vunpack.c.h.b16 %v4574
    %v4896 = vunpack.c.l.b16 %v4575
    %v4897 = vunpack.c.h.b16 %v4575
    %v4898 = vunpack.c.l.b16 %v4576
    %v4899 = vunpack.c.h.b16 %v4576
    %v4900 = vunpack.c.l.b16 %v4577
    %v4901 = vunpack.c.h.b16 %v4577
    %v4902 = vunpack.c.l.b16 %v4578
    %v4903 = vunpack.c.h.b16 %v4578
    %v4904 = vunpack.c.l.b16 %v4579
    %v4905 = vunpack.c.h.b16 %v4579
    %v4906 = vunpack.c.l.b16 %v4580
    %v4907 = vunpack.c.h.b16 %v4580
    %v4908 = vunpack.c.l.b16 %v4581
    %v4909 = vunpack.c.h.b16 %v4581
    %v4910 = vunpack.c.l.b16 %v4582
    %v4911 = vunpack.c.h.b16 %v4582
    %v4912 = vunpack.c.l.b16 %v4583
    %v4913 = vunpack.c.h.b16 %v4583
    %v4914 = vunpack.c.l.b16 %v4584
    %v4915 = vunpack.c.h.b16 %v4584
    %v4916 = vunpack.c.l.b16 %v4585
    %v4917 = vunpack.c.h.b16 %v4585
    %v4918 = vunpack.c.l.b16 %v4586
    %v4919 = vunpack.c.h.b16 %v4586
    %v4920 = vunpack.c.l.b16 %v4587
    %v4921 = vunpack.c.h.b16 %v4587
    %v4922 = vunpack.c.l.b16 %v4588
    %v4923 = vunpack.c.h.b16 %v4588
    %v4924 = vunpack.c.l.b16 %v4589
    %v4925 = vunpack.c.h.b16 %v4589
    %v4926 = vunpack.c.l.b16 %v4590
    %v4927 = vunpack.c.h.b16 %v4590
    %v4928 = vunpack.c.l.b16 %v4591
    %v4929 = vunpack.c.h.b16 %v4591
    %v4930 = vunpack.c.l.b16 %v4592
    %v4931 = vunpack.c.h.b16 %v4592
    %v4932 = vunpack.c.l.b16 %v4593
    %v4933 = vunpack.c.h.b16 %v4593
    %v4934 = vunpack.c.l.b16 %v4594
    %v4935 = vunpack.c.h.b16 %v4594
    %v4936 = vunpack.c.l.b16 %v4595
    %v4937 = vunpack.c.h.b16 %v4595
    %v4938 = vunpack.c.l.b16 %v4596
    %v4939 = vunpack.c.h.b16 %v4596
    %v4940 = vunpack.c.l.b16 %v4597
    %v4941 = vunpack.c.h.b16 %v4597
    %v4942 = vunpack.c.l.b16 %v4598
    %v4943 = vunpack.c.h.b16 %v4598
    %v4944 = vunpack.c.l.b16 %v4599
    %v4945 = vunpack.c.h.b16 %v4599
    %v4946 = vunpack.c.l.b16 %v4600
    %v4947 = vunpack.c.h.b16 %v4600
    %v4948 = vunpack.c.l.b16 %v4601
    %v4949 = vunpack.c.h.b16 %v4601
    %v4950 = vunpack.c.l.b16 %v4602
    %v4951 = vunpack.c.h.b16 %v4602
    %v4952 = vunpack.c.l.b16 %v4603
    %v4953 = vunpack.c.h.b16 %v4603
    %v4954 = vunpack.c.l.b16 %v4604
    %v4955 = vunpack.c.h.b16 %v4604
    %v4956 = vunpack.c.l.b16 %v4605
    %v4957 = vunpack.c.h.b16 %v4605
    %v4958 = vunpack.c.l.b16 %v4606
    %v4959 = vunpack.c.h.b16 %v4606
    %v4960 = vunpack.c.l.b16 %v4607
    %v4961 = vunpack.c.h.b16 %v4607
    %v4962 = vunpack.c.l.b16 %v4608
    %v4963 = vunpack.c.h.b16 %v4608
    %v4964 = vunpack.c.l.b16 %v4609
    %v4965 = vunpack.c.h.b16 %v4609
    %v4966 = vunpack.c.l.b16 %v4610
    %v4967 = vunpack.c.h.b16 %v4610
    %v4968 = vunpack.c.l.b16 %v4611
    %v4969 = vunpack.c.h.b16 %v4611
    %v4970 = vunpack.c.l.b16 %v4612
    %v4971 = vunpack.c.h.b16 %v4612
    %v4972 = vunpack.c.l.b16 %v4613
    %v4973 = vunpack.c.h.b16 %v4613
    %v4974 = vunpack.c.l.b16 %v4614
    %v4975 = vunpack.c.h.b16 %v4614
    %v4976 = vunpack.c.l.b16 %v4615
    %v4977 = vunpack.c.h.b16 %v4615
    %v4978 = vunpack.c.l.b16 %v4616
    %v4979 = vunpack.c.h.b16 %v4616
    %v4980 = vunpack.c.l.b16 %v4617
    %v4981 = vunpack.c.h.b16 %v4617
    %v4982 = vunpack.c.l.b16 %v4618
    %v4983 = vunpack.c.h.b16 %v4618
    %v4984 = vunpack.c.l.b16 %v4619
    %v4985 = vunpack.c.h.b16 %v4619
    %v4986 = vunpack.c.l.b16 %v4620
    %v4987 = vunpack.c.h.b16 %v4620
    %v4988 = vunpack.c.l.b16 %v4621
    %v4989 = vunpack.c.h.b16 %v4621
    %v4990 = vunpack.c.l.b16 %v4622
    %v4991 = vunpack.c.h.b16 %v4622
    %v4992 = vunpack.c.l.b16 %v4623
    %v4993 = vunpack.c.h.b16 %v4623
    %v4994 = vunpack.c.l.b16 %v4624
    %v4995 = vunpack.c.h.b16 %v4624
    %v4996 = vunpack.c.l.b16 %v4625
    %v4997 = vunpack.c.h.b16 %v4625
    %v4998 = vunpack.c.l.b16 %v4626
    %v4999 = vunpack.c.h.b16 %v4626
    %v5000 = vunpack.c.l.b16 %v4627
    %v5001 = vunpack.c.h.b16 %v4627
    %v5002 = vunpack.c.l.b16 %v4628
    %v5003 = vunpack.c.h.b16 %v4628
    %v5004 = vunpack.c.l.b16 %v4629
    %v5005 = vunpack.c.h.b16 %v4629
    %v5006 = vunpack.c.l.b16 %v4630
    %v5007 = vunpack.c.h.b16 %v4630
    %v5008 = vunpack.c.l.b16 %v4631
    %v5009 = vunpack.c.h.b16 %v4631
    %v5010 = vunpack.c.l.b16 %v4632
    %v5011 = vunpack.c.h.b16 %v4632
    %v5012 = vunpack.c.l.b16 %v4633
    %v5013 = vunpack.c.h.b16 %v4633
    %v5014 = vunpack.c.l.b16 %v4634
    %v5015 = vunpack.c.h.b16 %v4634
    %v5016 = vunpack.c.l.b16 %v4635
    %v5017 = vunpack.c.h.b16 %v4635
    %v5018 = vunpack.c.l.b16 %v4636
    %v5019 = vunpack.c.h.b16 %v4636
    %v5020 = vunpack.c.l.b16 %v4637
    %v5021 = vunpack.c.h.b16 %v4637
    %v5022 = vunpack.c.l.b16 %v4638
    %v5023 = vunpack.c.h.b16 %v4638
    %v5024 = vunpack.c.l.b16 %v4639
    %v5025 = vunpack.c.h.b16 %v4639
    %v5026 = vunpack.c.l.b16 %v4640
    %v5027 = vunpack.c.h.b16 %v4640
    %v5028 = vunpack.c.l.b16 %v4641
    %v5029 = vunpack.c.h.b16 %v4641
    %v5030 = vunpack.c.l.b16 %v4642
    %v5031 = vunpack.c.h.b16 %v4642
    %v5032 = vunpack.c.l.b16 %v4643
    %v5033 = vunpack.c.h.b16 %v4643
    %v5034 = vunpack.c.l.b16 %v4644
    %v5035 = vunpack.c.h.b16 %v4644
    %v5036 = vunpack.c.l.b16 %v4645
    %v5037 = vunpack.c.h.b16 %v4645
    %v5038 = vunpack.c.l.b16 %v4646
    %v5039 = vunpack.c.h.b16 %v4646
    %v5040 = vunpack.c.l.b16 %v4647
    %v5041 = vunpack.c.h.b16 %v4647
    %v5042 = vunpack.c.l.b16 %v4648
    %v5043 = vunpack.c.h.b16 %v4648
    %v5044 = vunpack.c.l.b16 %v4649
    %v5045 = vunpack.c.h.b16 %v4649
    %v5046 = vunpack.c.l.b16 %v4650
    %v5047 = vunpack.c.h.b16 %v4650
    %v5048 = vunpack.c.l.b16 %v4651
    %v5049 = vunpack.c.h.b16 %v4651
    %v5050 = vunpack.c.l.b16 %v4652
    %v5051 = vunpack.c.h.b16 %v4652
    %v5052 = vunpack.c.l.b16 %v4653
    %v5053 = vunpack.c.h.b16 %v4653
    %v5054 = vunpack.c.l.b16 %v4654
    %v5055 = vunpack.c.h.b16 %v4654
    %v5056 = vunpack.c.l.b16 %v4655
    %v5057 = vunpack.c.h.b16 %v4655
    %v5058 = vunpack.c.l.b16 %v4656
    %v5059 = vunpack.c.h.b16 %v4656
    %v5060 = vunpack.c.l.b16 %v4657
    %v5061 = vunpack.c.h.b16 %v4657
    %v5062 = vunpack.c.l.b16 %v4658
    %v5063 = vunpack.c.h.b16 %v4658
    %v5064 = vunpack.c.l.b16 %v4659
    %v5065 = vunpack.c.h.b16 %v4659
    %v5066 = vunpack.c.l.b16 %v4660
    %v5067 = vunpack.c.h.b16 %v4660
    %v5068 = vunpack.c.l.b16 %v4661
    %v5069 = vunpack.c.h.b16 %v4661
    %v5070 = vunpack.c.l.b16 %v4662
    %v5071 = vunpack.c.h.b16 %v4662
    %v5072 = vunpack.c.l.b16 %v4663
    %v5073 = vunpack.c.h.b16 %v4663
    %v5074 = vunpack.c.l.b16 %v4664
    %v5075 = vunpack.c.h.b16 %v4664
    %v5076 = vunpack.c.l.b16 %v4665
    %v5077 = vunpack.c.h.b16 %v4665
    %v5078 = vunpack.c.l.b16 %v4666
    %v5079 = vunpack.c.h.b16 %v4666
    %v5080 = vunpack.c.l.b16 %v4667
    %v5081 = vunpack.c.h.b16 %v4667
    %v5082 = vunpack.c.l.b16 %v4668
    %v5083 = vunpack.c.h.b16 %v4668
    %v5084 = vunpack.c.l.b16 %v4669
    %v5085 = vunpack.c.h.b16 %v4669
    %v5086 = vunpack.c.l.b16 %v4670
    %v5087 = vunpack.c.h.b16 %v4670
    %v5088 = vunpack.c.l.b16 %v4671
    %v5089 = vunpack.c.h.b16 %v4671
    %v5090 = vunpack.c.l.b16 %v4672
    %v5091 = vunpack.c.h.b16 %v4672
    %v5092 = vunpack.c.l.b16 %v4673
    %v5093 = vunpack.c.h.b16 %v4673
    %v5094 = vunpack.c.l.b16 %v4674
    %v5095 = vunpack.c.h.b16 %v4674
    %v5096 = vunpack.c.l.b16 %v4675
    %v5097 = vunpack.c.h.b16 %v4675
    %v5098 = vunpack.c.l.b16 %v4676
    %v5099 = vunpack.c.h.b16 %v4676
    %v5100 = vunpack.c.l.b16 %v4677
    %v5101 = vunpack.c.h.b16 %v4677
    %v5102 = vunpack.c.l.b16 %v4678
    %v5103 = vunpack.c.h.b16 %v4678
    %v5104 = vunpack.c.l.b16 %v4679
    %v5105 = vunpack.c.h.b16 %v4679
    %v5106 = vunpack.c.l.b16 %v4680
    %v5107 = vunpack.c.h.b16 %v4680
    %v5108 = vunpack.c.l.b16 %v4681
    %v5109 = vunpack.c.h.b16 %v4681
    %v5110 = vunpack.c.l.b16 %v4682
    %v5111 = vunpack.c.h.b16 %v4682
    %v5112 = vunpack.c.l.b16 %v4683
    %v5113 = vunpack.c.h.b16 %v4683
    %v5114 = vunpack.c.l.b16 %v4684
    %v5115 = vunpack.c.h.b16 %v4684
    %v5116 = vunpack.c.l.b16 %v4685
    %v5117 = vunpack.c.h.b16 %v4685
    %v5118 = vunpack.c.l.b16 %v4686
    %v5119 = vunpack.c.h.b16 %v4686
    %v5120 = vunpack.c.l.b16 %v4687
    %v5121 = vunpack.c.h.b16 %v4687
    %v5122 = vunpack.c.l.b16 %v4688
    %v5123 = vunpack.c.h.b16 %v4688
    %v5124 = vunpack.c.l.b16 %v4689
    %v5125 = vunpack.c.h.b16 %v4689
    %v5126 = vunpack.c.l.b16 %v4690
    %v5127 = vunpack.c.h.b16 %v4690
    %v5128 = vunpack.c.l.b16 %v4691
    %v5129 = vunpack.c.h.b16 %v4691
    %v5130 = vunpack.c.l.b16 %v4692
    %v5131 = vunpack.c.h.b16 %v4692
    %v5132 = vunpack.c.l.b16 %v4693
    %v5133 = vunpack.c.h.b16 %v4693
    %v5134 = vunpack.c.l.b16 %v4694
    %v5135 = vunpack.c.h.b16 %v4694
    %v5136 = vunpack.c.l.b16 %v4695
    %v5137 = vunpack.c.h.b16 %v4695
    %v5138 = vunpack.c.l.b16 %v4696
    %v5139 = vunpack.c.h.b16 %v4696
    %v5140 = vunpack.c.l.b16 %v4697
    %v5141 = vunpack.c.h.b16 %v4697
    %v5142 = vunpack.c.l.b16 %v4698
    %v5143 = vunpack.c.h.b16 %v4698
    %v5144 = vunpack.c.l.b16 %v4699
    %v5145 = vunpack.c.h.b16 %v4699
    %v5146 = vunpack.c.l.b16 %v4700
    %v5147 = vunpack.c.h.b16 %v4700
    %v5148 = vunpack.c.l.b16 %v4701
    %v5149 = vunpack.c.h.b16 %v4701
    %v5150 = vunpack.c.l.b16 %v4702
    %v5151 = vunpack.c.h.b16 %v4702
    %v5152 = vunpack.c.l.b16 %v4703
    %v5153 = vunpack.c.h.b16 %v4703
    %v5154 = vunpack.c.l.b16 %v4704
    %v5155 = vunpack.c.h.b16 %v4704
    %v5156 = vunpack.c.l.b16 %v4705
    %v5157 = vunpack.c.h.b16 %v4705
    %v5158 = vunpack.c.l.b16 %v4706
    %v5159 = vunpack.c.h.b16 %v4706
    %v5160 = vunpack.c.l.b16 %v4707
    %v5161 = vunpack.c.h.b16 %v4707
    %v5162 = vunpack.c.l.b16 %v4708
    %v5163 = vunpack.c.h.b16 %v4708
    %v5164 = vunpack.c.l.b16 %v4709
    %v5165 = vunpack.c.h.b16 %v4709
    %v5166 = vunpack.c.l.b16 %v4710
    %v5167 = vunpack.c.h.b16 %v4710
    %v5168 = vunpack.c.l.b16 %v4711
    %v5169 = vunpack.c.h.b16 %v4711
    %v5170 = vunpack.c.l.b16 %v4712
    %v5171 = vunpack.c.h.b16 %v4712
    %v5172 = vunpack.c.l.b16 %v4713
    %v5173 = vunpack.c.h.b16 %v4713
    %v5174 = vunpack.c.l.b16 %v4714
    %v5175 = vunpack.c.h.b16 %v4714
    %v5176 = vunpack.c.l.b16 %v4715
    %v5177 = vunpack.c.h.b16 %v4715
    %v5178 = vunpack.c.l.b16 %v4716
    %v5179 = vunpack.c.h.b16 %v4716
    %v5180 = vunpack.c.l.b16 %v4717
    %v5181 = vunpack.c.h.b16 %v4717
    %v5182 = vunpack.c.l.b16 %v4718
    %v5183 = vunpack.c.h.b16 %v4718
    %v5184 = vunpack.c.l.b16 %v4719
    %v5185 = vunpack.c.h.b16 %v4719
    %v5186 = vunpack.c.l.b16 %v4720
    %v5187 = vunpack.c.h.b16 %v4720
    %v5188 = vunpack.c.l.b16 %v4721
    %v5189 = vunpack.c.h.b16 %v4721
    %v5190 = vunpack.c.l.b16 %v4722
    %v5191 = vunpack.c.h.b16 %v4722
    %v5192 = vunpack.c.l.b16 %v4723
    %v5193 = vunpack.c.h.b16 %v4723
    %v5194 = vunpack.c.l.b16 %v4724
    %v5195 = vunpack.c.h.b16 %v4724
    %v5196 = vunpack.c.l.b16 %v4725
    %v5197 = vunpack.c.h.b16 %v4725
    %v5198 = vunpack.c.l.b16 %v4726
    %v5199 = vunpack.c.h.b16 %v4726
    %v5200 = vunpack.c.l.b16 %v4727
    %v5201 = vunpack.c.h.b16 %v4727
    %v5202 = vunpack.c.l.b16 %v4728
    %v5203 = vunpack.c.h.b16 %v4728
    %v5204 = vunpack.c.l.b16 %v4729
    %v5205 = vunpack.c.h.b16 %v4729
    %v5206 = vunpack.c.l.b16 %v4730
    %v5207 = vunpack.c.h.b16 %v4730
    %v5208 = vunpack.c.l.b16 %v4731
    %v5209 = vunpack.c.h.b16 %v4731
    %v5210 = vunpack.c.l.b16 %v4732
    %v5211 = vunpack.c.h.b16 %v4732
    %v5212 = vunpack.c.l.b16 %v4733
    %v5213 = vunpack.c.h.b16 %v4733
    %v5214 = vpack.c.b16 %v4898, %v4894
    %v5215 = vpack.c.b16 %v4899, %v4895
    %v5216 = vpack.c.b16 %v4900, %v4896
    %v5217 = vpack.c.b16 %v4901, %v4897
    %v5218 = vpack.c.b16 %v4906, %v4902
    %v5219 = vpack.c.b16 %v4907, %v4903
    %v5220 = vpack.c.b16 %v4908, %v4904
    %v5221 = vpack.c.b16 %v4909, %v4905
    %v5222 = vpack.c.b16 %v4914, %v4910
    %v5223 = vpack.c.b16 %v4915, %v4911
    %v5224 = vpack.c.b16 %v4916, %v4912
    %v5225 = vpack.c.b16 %v4917, %v4913
    %v5226 = vpack.c.b16 %v4922, %v4918
    %v5227 = vpack.c.b16 %v4923, %v4919
    %v5228 = vpack.c.b16 %v4924, %v4920
    %v5229 = vpack.c.b16 %v4925, %v4921
    %v5230 = vpack.c.b16 %v4930, %v4926
    %v5231 = vpack.c.b16 %v4931, %v4927
    %v5232 = vpack.c.b16 %v4932, %v4928
    %v5233 = vpack.c.b16 %v4933, %v4929
    %v5234 = vpack.c.b16 %v4938, %v4934
    %v5235 = vpack.c.b16 %v4939, %v4935
    %v5236 = vpack.c.b16 %v4940, %v4936
    %v5237 = vpack.c.b16 %v4941, %v4937
    %v5238 = vpack.c.b16 %v4946, %v4942
    %v5239 = vpack.c.b16 %v4947, %v4943
    %v5240 = vpack.c.b16 %v4948, %v4944
    %v5241 = vpack.c.b16 %v4949, %v4945
    %v5242 = vpack.c.b16 %v4954, %v4950
    %v5243 = vpack.c.b16 %v4955, %v4951
    %v5244 = vpack.c.b16 %v4956, %v4952
    %v5245 = vpack.c.b16 %v4957, %v4953
    %v5246 = vpack.c.b16 %v4962, %v4958
    %v5247 = vpack.c.b16 %v4963, %v4959
    %v5248 = vpack.c.b16 %v4964, %v4960
    %v5249 = vpack.c.b16 %v4965, %v4961
    %v5250 = vpack.c.b16 %v4970, %v4966
    %v5251 = vpack.c.b16 %v4971, %v4967
    %v5252 = vpack.c.b16 %v4972, %v4968
    %v5253 = vpack.c.b16 %v4973, %v4969
    %v5254 = vpack.c.b16 %v4978, %v4974
    %v5255 = vpack.c.b16 %v4979, %v4975
    %v5256 = vpack.c.b16 %v4980, %v4976
    %v5257 = vpack.c.b16 %v4981, %v4977
    %v5258 = vpack.c.b16 %v4986, %v4982
    %v5259 = vpack.c.b16 %v4987, %v4983
    %v5260 = vpack.c.b16 %v4988, %v4984
    %v5261 = vpack.c.b16 %v4989, %v4985
    %v5262 = vpack.c.b16 %v4994, %v4990
    %v5263 = vpack.c.b16 %v4995, %v4991
    %v5264 = vpack.c.b16 %v4996, %v4992
    %v5265 = vpack.c.b16 %v4997, %v4993
    %v5266 = vpack.c.b16 %v5002, %v4998
    %v5267 = vpack.c.b16 %v5003, %v4999
    %v5268 = vpack.c.b16 %v5004, %v5000
    %v5269 = vpack.c.b16 %v5005, %v5001
    %v5270 = vpack.c.b16 %v5010, %v5006
    %v5271 = vpack.c.b16 %v5011, %v5007
    %v5272 = vpack.c.b16 %v5012, %v5008
    %v5273 = vpack.c.b16 %v5013, %v5009
    %v5274 = vpack.c.b16 %v5018, %v5014
    %v5275 = vpack.c.b16 %v5019, %v5015
    %v5276 = vpack.c.b16 %v5020, %v5016
    %v5277 = vpack.c.b16 %v5021, %v5017
    %v5278 = vpack.c.b16 %v5026, %v5022
    %v5279 = vpack.c.b16 %v5027, %v5023
    %v5280 = vpack.c.b16 %v5028, %v5024
    %v5281 = vpack.c.b16 %v5029, %v5025
    %v5282 = vpack.c.b16 %v5034, %v5030
    %v5283 = vpack.c.b16 %v5035, %v5031
    %v5284 = vpack.c.b16 %v5036, %v5032
    %v5285 = vpack.c.b16 %v5037, %v5033
    %v5286 = vpack.c.b16 %v5042, %v5038
    %v5287 = vpack.c.b16 %v5043, %v5039
    %v5288 = vpack.c.b16 %v5044, %v5040
    %v5289 = vpack.c.b16 %v5045, %v5041
    %v5290 = vpack.c.b16 %v5050, %v5046
    %v5291 = vpack.c.b16 %v5051, %v5047
    %v5292 = vpack.c.b16 %v5052, %v5048
    %v5293 = vpack.c.b16 %v5053, %v5049
    %v5294 = vpack.c.b16 %v5058, %v5054
    %v5295 = vpack.c.b16 %v5059, %v5055
    %v5296 = vpack.c.b16 %v5060, %v5056
    %v5297 = vpack.c.b16 %v5061, %v5057
    %v5298 = vpack.c.b16 %v5066, %v5062
    %v5299 = vpack.c.b16 %v5067, %v5063
    %v5300 = vpack.c.b16 %v5068, %v5064
    %v5301 = vpack.c.b16 %v5069, %v5065
    %v5302 = vpack.c.b16 %v5074, %v5070
    %v5303 = vpack.c.b16 %v5075, %v5071
    %v5304 = vpack.c.b16 %v5076, %v5072
    %v5305 = vpack.c.b16 %v5077, %v5073
    %v5306 = vpack.c.b16 %v5082, %v5078
    %v5307 = vpack.c.b16 %v5083, %v5079
    %v5308 = vpack.c.b16 %v5084, %v5080
    %v5309 = vpack.c.b16 %v5085, %v5081
    %v5310 = vpack.c.b16 %v5090, %v5086
    %v5311 = vpack.c.b16 %v5091, %v5087
    %v5312 = vpack.c.b16 %v5092, %v5088
    %v5313 = vpack.c.b16 %v5093, %v5089
    %v5314 = vpack.c.b16 %v5098, %v5094
    %v5315 = vpack.c.b16 %v5099, %v5095
    %v5316 = vpack.c.b16 %v5100, %v5096
    %v5317 = vpack.c.b16 %v5101, %v5097
    %v5318 = vpack.c.b16 %v5106, %v5102
    %v5319 = vpack.c.b16 %v5107, %v5103
    %v5320 = vpack.c.b16 %v5108, %v5104
    %v5321 = vpack.c.b16 %v5109, %v5105
    %v5322 = vpack.c.b16 %v5114, %v5110
    %v5323 = vpack.c.b16 %v5115, %v5111
    %v5324 = vpack.c.b16 %v5116, %v5112
    %v5325 = vpack.c.b16 %v5117, %v5113
    %v5326 = vpack.c.b16 %v5122, %v5118
    %v5327 = vpack.c.b16 %v5123, %v5119
    %v5328 = vpack.c.b16 %v5124, %v5120
    %v5329 = vpack.c.b16 %v5125, %v5121
    %v5330 = vpack.c.b16 %v5130, %v5126
    %v5331 = vpack.c.b16 %v5131, %v5127
    %v5332 = vpack.c.b16 %v5132, %v5128
    %v5333 = vpack.c.b16 %v5133, %v5129
    %v5334 = vpack.c.b16 %v5138, %v5134
    %v5335 = vpack.c.b16 %v5139, %v5135
    %v5336 = vpack.c.b16 %v5140, %v5136
    %v5337 = vpack.c.b16 %v5141, %v5137
    %v5338 = vpack.c.b16 %v5146, %v5142
    %v5339 = vpack.c.b16 %v5147, %v5143
    %v5340 = vpack.c.b16 %v5148, %v5144
    %v5341 = vpack.c.b16 %v5149, %v5145
    %v5342 = vpack.c.b16 %v5154, %v5150
    %v5343 = vpack.c.b16 %v5155, %v5151
    %v5344 = vpack.c.b16 %v5156, %v5152
    %v5345 = vpack.c.b16 %v5157, %v5153
    %v5346 = vpack.c.b16 %v5162, %v5158
    %v5347 = vpack.c.b16 %v5163, %v5159
    %v5348 = vpack.c.b16 %v5164, %v5160
    %v5349 = vpack.c.b16 %v5165, %v5161
    %v5350 = vpack.c.b16 %v5170, %v5166
    %v5351 = vpack.c.b16 %v5171, %v5167
    %v5352 = vpack.c.b16 %v5172, %v5168
    %v5353 = vpack.c.b16 %v5173, %v5169
    %v5354 = vpack.c.b16 %v5178, %v5174
    %v5355 = vpack.c.b16 %v5179, %v5175
    %v5356 = vpack.c.b16 %v5180, %v5176
    %v5357 = vpack.c.b16 %v5181, %v5177
    %v5358 = vpack.c.b16 %v5186, %v5182
    %v5359 = vpack.c.b16 %v5187, %v5183
    %v5360 = vpack.c.b16 %v5188, %v5184
    %v5361 = vpack.c.b16 %v5189, %v5185
    %v5362 = vpack.c.b16 %v5194, %v5190
    %v5363 = vpack.c.b16 %v5195, %v5191
    %v5364 = vpack.c.b16 %v5196, %v5192
    %v5365 = vpack.c.b16 %v5197, %v5193
    %v5366 = vpack.c.b16 %v5202, %v5198
    %v5367 = vpack.c.b16 %v5203, %v5199
    %v5368 = vpack.c.b16 %v5204, %v5200
    %v5369 = vpack.c.b16 %v5205, %v5201
    %v5370 = vpack.c.b16 %v5210, %v5206
    %v5371 = vpack.c.b16 %v5211, %v5207
    %v5372 = vpack.c.b16 %v5212, %v5208
    %v5373 = vpack.c.b16 %v5213, %v5209
    %5534 = vmatprep.subr.bf16.mxu0 %v5215
    %5535 = vmatpush1.bf16.msra.mxu0 %v5214
    %5536 = vmatprep.subr.bf16.mxu0 %v5219
    %5537 = vmatpush1.bf16.msra.mxu0 %v5218
    %5538 = vmatprep.subr.bf16.mxu0 %v5223
    %5539 = vmatpush1.bf16.msra.mxu0 %v5222
    %5540 = vmatprep.subr.bf16.mxu0 %v5227
    %5541 = vmatpush1.bf16.msra.mxu0 %v5226
    %5542 = vmatprep.subr.bf16.mxu0 %v5231
    %5543 = vmatpush1.bf16.msra.mxu0 %v5230
    %5544 = vmatprep.subr.bf16.mxu0 %v5235
    %5545 = vmatpush1.bf16.msra.mxu0 %v5234
    %5546 = vmatprep.subr.bf16.mxu0 %v5239
    %5547 = vmatpush1.bf16.msra.mxu0 %v5238
    %5548 = vmatprep.subr.bf16.mxu0 %v5243
    %5549 = vmatpush1.bf16.msra.mxu0 %v5242
    %5550 = vmatprep.subr.bf16.mxu0 %v5247
    %5551 = vmatpush1.bf16.msra.mxu0 %v5246
    %5552 = vmatprep.subr.bf16.mxu0 %v5251
    %5553 = vmatpush1.bf16.msra.mxu0 %v5250
    %5554 = vmatprep.subr.bf16.mxu0 %v5255
    %5555 = vmatpush1.bf16.msra.mxu0 %v5254
    %5556 = vmatprep.subr.bf16.mxu0 %v5259
    %5557 = vmatpush1.bf16.msra.mxu0 %v5258
    %5558 = vmatprep.subr.bf16.mxu0 %v5263
    %5559 = vmatpush1.bf16.msra.mxu0 %v5262
    %5560 = vmatprep.subr.bf16.mxu0 %v5267
    %5561 = vmatpush1.bf16.msra.mxu0 %v5266
    %5562 = vmatprep.subr.bf16.mxu0 %v5271
    %5563 = vmatpush1.bf16.msra.mxu0 %v5270
    %5564 = vmatprep.subr.bf16.mxu0 %v5275
    %5565 = vmatpush1.bf16.msra.mxu0 %v5274
    %5566 = vmatprep.mubr.bf16.mxu0 %v4535
    %5567 = vmatmul.mubr.bf16.gmra.mrb[0].mxu0 %v4534
    %v5568 = vpop.f32.mrb[0].mxu0
    %v5569 = vadd.f32 0.0, %v5568
    %v5570 = vpop.f32.mrb[0].mxu0
    %v5571 = vadd.f32 0.0, %v5570
    %v5572 = vpop.f32.mrb[0].mxu0
    %v5573 = vadd.f32 0.0, %v5572
    %v5574 = vpop.f32.mrb[0].mxu0
    %v5575 = vadd.f32 0.0, %v5574
    %5576 = vmatprep.mubr.bf16.mxu0 %v4540
    %5577 = vmatmul.mubr.bf16.gmra.mrb[0].mxu0 %v4539
    %v5578 = vpop.f32.mrb[0].mxu0
    %v5579 = vadd.f32 0.0, %v5578
    %v5580 = vpop.f32.mrb[0].mxu0
    %v5581 = vadd.f32 0.0, %v5580
    %v5582 = vpop.f32.mrb[0].mxu0
    %v5583 = vadd.f32 0.0, %v5582
    %v5584 = vpop.f32.mrb[0].mxu0
    %v5585 = vadd.f32 0.0, %v5584
    %5586 = vmatprep.mubr.bf16.mxu0 %v4545
    %5587 = vmatmul.mubr.bf16.gmra.mrb[0].mxu0 %v4544
    %v5588 = vpop.f32.mrb[0].mxu0
    %v5589 = vadd.f32 0.0, %v5588
    %v5590 = vpop.f32.mrb[0].mxu0
    %v5591 = vadd.f32 0.0, %v5590
    %v5592 = vpop.f32.mrb[0].mxu0
    %v5593 = vadd.f32 0.0, %v5592
    %v5594 = vpop.f32.mrb[0].mxu0
    %v5595 = vadd.f32 0.0, %v5594
    %5596 = vmatprep.mubr.bf16.mxu0 %v4550
    %5597 = vmatmul.mubr.bf16.gmra.mrb[0].mxu0 %v4549
    %v5598 = vpop.f32.mrb[0].mxu0
    %v5599 = vadd.f32 0.0, %v5598
    %v5600 = vpop.f32.mrb[0].mxu0
    %v5601 = vadd.f32 0.0, %v5600
    %v5602 = vpop.f32.mrb[0].mxu0
    %v5603 = vadd.f32 0.0, %v5602
    %v5604 = vpop.f32.mrb[0].mxu0
    %v5605 = vadd.f32 0.0, %v5604
    %5606 = vmatprep.mubr.bf16.mxu0 %v4555
    %5607 = vmatmul.mubr.bf16.gmra.mrb[0].mxu0 %v4554
    %v5608 = vpop.f32.mrb[0].mxu0
    %v5609 = vadd.f32 0.0, %v5608
    %v5610 = vpop.f32.mrb[0].mxu0
    %v5611 = vadd.f32 0.0, %v5610
    %v5612 = vpop.f32.mrb[0].mxu0
    %v5613 = vadd.f32 0.0, %v5612
    %v5614 = vpop.f32.mrb[0].mxu0
    %v5615 = vadd.f32 0.0, %v5614
    %5616 = vmatprep.mubr.bf16.mxu0 %v4560
    %5617 = vmatmul.mubr.bf16.gmra.mrb[0].mxu0 %v4559
    %v5618 = vpop.f32.mrb[0].mxu0
    %v5619 = vadd.f32 0.0, %v5618
    %v5620 = vpop.f32.mrb[0].mxu0
    %v5621 = vadd.f32 0.0, %v5620
    %v5622 = vpop.f32.mrb[0].mxu0
    %v5623 = vadd.f32 0.0, %v5622
    %v5624 = vpop.f32.mrb[0].mxu0
    %v5625 = vadd.f32 0.0, %v5624
    %5626 = vmatprep.mubr.bf16.mxu0 %v4565
    %5627 = vmatmul.mubr.bf16.gmra.mrb[0].mxu0 %v4564
    %v5628 = vpop.f32.mrb[0].mxu0
    %v5629 = vadd.f32 0.0, %v5628
    %v5630 = vpop.f32.mrb[0].mxu0
    %v5631 = vadd.f32 0.0, %v5630
    %v5632 = vpop.f32.mrb[0].mxu0
    %v5633 = vadd.f32 0.0, %v5632
    %v5634 = vpop.f32.mrb[0].mxu0
    %v5635 = vadd.f32 0.0, %v5634
    %5636 = vmatprep.mubr.bf16.mxu0 %v4570
    %5637 = vmatmul.mubr.bf16.gmra.mrb[0].mxu0 %v4569
    %v5638 = vpop.f32.mrb[0].mxu0
    %v5639 = vadd.f32 0.0, %v5638
    %v5640 = vpop.f32.mrb[0].mxu0
    %v5641 = vadd.f32 0.0, %v5640
    %v5642 = vpop.f32.mrb[0].mxu0
    %v5643 = vadd.f32 0.0, %v5642
    %v5644 = vpop.f32.mrb[0].mxu0
    %v5645 = vadd.f32 0.0, %v5644
    %5646 = vdwg.mxu0
    %5647 = vmatprep.subr.bf16.mxu0 %v5279
    %5648 = vmatpush1.bf16.msra.mxu0 %v5278
    %5649 = vmatprep.subr.bf16.mxu0 %v5283
    %5650 = vmatpush1.bf16.msra.mxu0 %v5282
    %5651 = vmatprep.subr.bf16.mxu0 %v5287
    %5652 = vmatpush1.bf16.msra.mxu0 %v5286
    %5653 = vmatprep.subr.bf16.mxu0 %v5291
    %5654 = vmatpush1.bf16.msra.mxu0 %v5290
    %5655 = vmatprep.subr.bf16.mxu0 %v5295
    %5656 = vmatpush1.bf16.msra.mxu0 %v5294
    %5657 = vmatprep.subr.bf16.mxu0 %v5299
    %5658 = vmatpush1.bf16.msra.mxu0 %v5298
    %5659 = vmatprep.subr.bf16.mxu0 %v5303
    %5660 = vmatpush1.bf16.msra.mxu0 %v5302
    %5661 = vmatprep.subr.bf16.mxu0 %v5307
    %5662 = vmatpush1.bf16.msra.mxu0 %v5306
    %5663 = vmatprep.subr.bf16.mxu0 %v5311
    %5664 = vmatpush1.bf16.msra.mxu0 %v5310
    %5665 = vmatprep.subr.bf16.mxu0 %v5315
    %5666 = vmatpush1.bf16.msra.mxu0 %v5314
    %5667 = vmatprep.subr.bf16.mxu0 %v5319
    %5668 = vmatpush1.bf16.msra.mxu0 %v5318
    %5669 = vmatprep.subr.bf16.mxu0 %v5323
    %5670 = vmatpush1.bf16.msra.mxu0 %v5322
    %5671 = vmatprep.subr.bf16.mxu0 %v5327
    %5672 = vmatpush1.bf16.msra.mxu0 %v5326
    %5673 = vmatprep.subr.bf16.mxu0 %v5331
    %5674 = vmatpush1.bf16.msra.mxu0 %v5330
    %5675 = vmatprep.subr.bf16.mxu0 %v5335
    %5676 = vmatpush1.bf16.msra.mxu0 %v5334
    %5677 = vmatprep.subr.bf16.mxu0 %v5339
    %5678 = vmatpush1.bf16.msra.mxu0 %v5338
    %5679 = vmatprep.mubr.bf16.mxu0 %v4537
    %5680 = vmatmul.mubr.bf16.gmra.mrb[0].mxu0 %v4536
    %v5681 = vpop.f32.mrb[0].mxu0
    %v5682 = vadd.f32 %v5569, %v5681
    %v5683 = vpop.f32.mrb[0].mxu0
    %v5684 = vadd.f32 %v5571, %v5683
    %v5685 = vpop.f32.mrb[0].mxu0
    %v5686 = vadd.f32 %v5573, %v5685
    %v5687 = vpop.f32.mrb[0].mxu0
    %v5688 = vadd.f32 %v5575, %v5687
    %5689 = vmatprep.mubr.bf16.mxu0 %v4542
    %5690 = vmatmul.mubr.bf16.gmra.mrb[0].mxu0 %v4541
    %v5691 = vpop.f32.mrb[0].mxu0
    %v5692 = vadd.f32 %v5579, %v5691
    %v5693 = vpop.f32.mrb[0].mxu0
    %v5694 = vadd.f32 %v5581, %v5693
    %v5695 = vpop.f32.mrb[0].mxu0
    %v5696 = vadd.f32 %v5583, %v5695
    %v5697 = vpop.f32.mrb[0].mxu0
    %v5698 = vadd.f32 %v5585, %v5697
    %5699 = vmatprep.mubr.bf16.mxu0 %v4547
    %5700 = vmatmul.mubr.bf16.gmra.mrb[0].mxu0 %v4546
    %v5701 = vpop.f32.mrb[0].mxu0
    %v5702 = vadd.f32 %v5589, %v5701
    %v5703 = vpop.f32.mrb[0].mxu0
    %v5704 = vadd.f32 %v5591, %v5703
    %v5705 = vpop.f32.mrb[0].mxu0
    %v5706 = vadd.f32 %v5593, %v5705
    %v5707 = vpop.f32.mrb[0].mxu0
    %v5708 = vadd.f32 %v5595, %v5707
    %5709 = vmatprep.mubr.bf16.mxu0 %v4552
    %5710 = vmatmul.mubr.bf16.gmra.mrb[0].mxu0 %v4551
    %v5711 = vpop.f32.mrb[0].mxu0
    %v5712 = vadd.f32 %v5599, %v5711
    %v5713 = vpop.f32.mrb[0].mxu0
    %v5714 = vadd.f32 %v5601, %v5713
    %v5715 = vpop.f32.mrb[0].mxu0
    %v5716 = vadd.f32 %v5603, %v5715
    %v5717 = vpop.f32.mrb[0].mxu0
    %v5718 = vadd.f32 %v5605, %v5717
    %5719 = vmatprep.mubr.bf16.mxu0 %v4557
    %5720 = vmatmul.mubr.bf16.gmra.mrb[0].mxu0 %v4556
    %v5721 = vpop.f32.mrb[0].mxu0
    %v5722 = vadd.f32 %v5609, %v5721
    %v5723 = vpop.f32.mrb[0].mxu0
    %v5724 = vadd.f32 %v5611, %v5723
    %v5725 = vpop.f32.mrb[0].mxu0
    %v5726 = vadd.f32 %v5613, %v5725
    %v5727 = vpop.f32.mrb[0].mxu0
    %v5728 = vadd.f32 %v5615, %v5727
    %5729 = vmatprep.mubr.bf16.mxu0 %v4562
    %5730 = vmatmul.mubr.bf16.gmra.mrb[0].mxu0 %v4561
    %v5731 = vpop.f32.mrb[0].mxu0
    %v5732 = vadd.f32 %v5619, %v5731
    %v5733 = vpop.f32.mrb[0].mxu0
    %v5734 = vadd.f32 %v5621, %v5733
    %v5735 = vpop.f32.mrb[0].mxu0
    %v5736 = vadd.f32 %v5623, %v5735
    %v5737 = vpop.f32.mrb[0].mxu0
    %v5738 = vadd.f32 %v5625, %v5737
    %5739 = vmatprep.mubr.bf16.mxu0 %v4567
    %5740 = vmatmul.mubr.bf16.gmra.mrb[0].mxu0 %v4566
    %v5741 = vpop.f32.mrb[0].mxu0
    %v5742 = vadd.f32 %v5629, %v5741
    %v5743 = vpop.f32.mrb[0].mxu0
    %v5744 = vadd.f32 %v5631, %v5743
    %v5745 = vpop.f32.mrb[0].mxu0
    %v5746 = vadd.f32 %v5633, %v5745
    %v5747 = vpop.f32.mrb[0].mxu0
    %v5748 = vadd.f32 %v5635, %v5747
    %5749 = vmatprep.mubr.bf16.mxu0 %v4572
    %5750 = vmatmul.mubr.bf16.gmra.mrb[0].mxu0 %v4571
    %v5751 = vpop.f32.mrb[0].mxu0
    %v5752 = vadd.f32 %v5639, %v5751
    %v5753 = vpop.f32.mrb[0].mxu0
    %v5754 = vadd.f32 %v5641, %v5753
    %v5755 = vpop.f32.mrb[0].mxu0
    %v5756 = vadd.f32 %v5643, %v5755
    %v5757 = vpop.f32.mrb[0].mxu0
    %v5758 = vadd.f32 %v5645, %v5757
    %5759 = vdwg.mxu0
    %5760 = vmatprep.subr.bf16.mxu0 %v5343
    %5761 = vmatpush1.bf16.msra.mxu0 %v5342
    %5762 = vmatprep.subr.bf16.mxu0 %v5347
    %5763 = vmatpush1.bf16.msra.mxu0 %v5346
    %5764 = vmatprep.subr.bf16.mxu0 %v5351
    %5765 = vmatpush1.bf16.msra.mxu0 %v5350
    %5766 = vmatprep.subr.bf16.mxu0 %v5355
    %5767 = vmatpush1.bf16.msra.mxu0 %v5354
    %5768 = vmatprep.subr.bf16.mxu0 %v5359
    %5769 = vmatpush1.bf16.msra.mxu0 %v5358
    %5770 = vmatprep.subr.bf16.mxu0 %v5363
    %5771 = vmatpush1.bf16.msra.mxu0 %v5362
    %5772 = vmatprep.subr.bf16.mxu0 %v5367
    %5773 = vmatpush1.bf16.msra.mxu0 %v5366
    %5774 = vmatprep.subr.bf16.mxu0 %v5371
    %5775 = vmatpush1.bf16.msra.mxu0 %v5370
    %5776 = vmatprep.subr.bf16.mxu0 0
    %5777 = vmatpush1.bf16.msra.mxu0 0
    %5778 = vmatprep.subr.bf16.mxu0 0
    %5779 = vmatpush1.bf16.msra.mxu0 0
    %5780 = vmatprep.subr.bf16.mxu0 0
    %5781 = vmatpush1.bf16.msra.mxu0 0
    %5782 = vmatprep.subr.bf16.mxu0 0
    %5783 = vmatpush1.bf16.msra.mxu0 0
    %5784 = vmatprep.subr.bf16.mxu0 0
    %5785 = vmatpush1.bf16.msra.mxu0 0
    %5786 = vmatprep.subr.bf16.mxu0 0
    %5787 = vmatpush1.bf16.msra.mxu0 0
    %5788 = vmatprep.subr.bf16.mxu0 0
    %5789 = vmatpush1.bf16.msra.mxu0 0
    %5790 = vmatprep.subr.bf16.mxu0 0
    %5791 = vmatpush1.bf16.msra.mxu0 0
    %5792 = vmatprep.mubr.bf16.mxu0 0
    %5793 = vmatmul.mubr.bf16.gmra.mrb[0].mxu0 %v4538
    %v5794 = vpop.f32.mrb[0].mxu0
    %v5795 = vadd.f32 %v5682, %v5794
    %v5796 = vpop.f32.mrb[0].mxu0
    %v5797 = vadd.f32 %v5684, %v5796
    %v5798 = vpop.f32.mrb[0].mxu0
    %v5799 = vadd.f32 %v5686, %v5798
    %v5800 = vpop.f32.mrb[0].mxu0
    %v5801 = vadd.f32 %v5688, %v5800
    %5802 = vmatprep.mubr.bf16.mxu0 0
    %5803 = vmatmul.mubr.bf16.gmra.mrb[0].mxu0 %v4543
    %v5804 = vpop.f32.mrb[0].mxu0
    %v5805 = vadd.f32 %v5692, %v5804
    %v5806 = vpop.f32.mrb[0].mxu0
    %v5807 = vadd.f32 %v5694, %v5806
    %v5808 = vpop.f32.mrb[0].mxu0
    %v5809 = vadd.f32 %v5696, %v5808
    %v5810 = vpop.f32.mrb[0].mxu0
    %v5811 = vadd.f32 %v5698, %v5810
    %5812 = vmatprep.mubr.bf16.mxu0 0
    %5813 = vmatmul.mubr.bf16.gmra.mrb[0].mxu0 %v4548
    %v5814 = vpop.f32.mrb[0].mxu0
    %v5815 = vadd.f32 %v5702, %v5814
    %v5816 = vpop.f32.mrb[0].mxu0
    %v5817 = vadd.f32 %v5704, %v5816
    %v5818 = vpop.f32.mrb[0].mxu0
    %v5819 = vadd.f32 %v5706, %v5818
    %v5820 = vpop.f32.mrb[0].mxu0
    %v5821 = vadd.f32 %v5708, %v5820
    %5822 = vmatprep.mubr.bf16.mxu0 0
    %5823 = vmatmul.mubr.bf16.gmra.mrb[0].mxu0 %v4553
    %v5824 = vpop.f32.mrb[0].mxu0
    %v5825 = vadd.f32 %v5712, %v5824
    %v5826 = vpop.f32.mrb[0].mxu0
    %v5827 = vadd.f32 %v5714, %v5826
    %v5828 = vpop.f32.mrb[0].mxu0
    %v5829 = vadd.f32 %v5716, %v5828
    %v5830 = vpop.f32.mrb[0].mxu0
    %v5831 = vadd.f32 %v5718, %v5830
    %5832 = vmatprep.mubr.bf16.mxu0 0
    %5833 = vmatmul.mubr.bf16.gmra.mrb[0].mxu0 %v4558
    %v5834 = vpop.f32.mrb[0].mxu0
    %v5835 = vadd.f32 %v5722, %v5834
    %v5836 = vpop.f32.mrb[0].mxu0
    %v5837 = vadd.f32 %v5724, %v5836
    %v5838 = vpop.f32.mrb[0].mxu0
    %v5839 = vadd.f32 %v5726, %v5838
    %v5840 = vpop.f32.mrb[0].mxu0
    %v5841 = vadd.f32 %v5728, %v5840
    %5842 = vmatprep.mubr.bf16.mxu0 0
    %5843 = vmatmul.mubr.bf16.gmra.mrb[0].mxu0 %v4563
    %v5844 = vpop.f32.mrb[0].mxu0
    %v5845 = vadd.f32 %v5732, %v5844
    %v5846 = vpop.f32.mrb[0].mxu0
    %v5847 = vadd.f32 %v5734, %v5846
    %v5848 = vpop.f32.mrb[0].mxu0
    %v5849 = vadd.f32 %v5736, %v5848
    %v5850 = vpop.f32.mrb[0].mxu0
    %v5851 = vadd.f32 %v5738, %v5850
    %5852 = vmatprep.mubr.bf16.mxu0 0
    %5853 = vmatmul.mubr.bf16.gmra.mrb[0].mxu0 %v4568
    %v5854 = vpop.f32.mrb[0].mxu0
    %v5855 = vadd.f32 %v5742, %v5854
    %v5856 = vpop.f32.mrb[0].mxu0
    %v5857 = vadd.f32 %v5744, %v5856
    %v5858 = vpop.f32.mrb[0].mxu0
    %v5859 = vadd.f32 %v5746, %v5858
    %v5860 = vpop.f32.mrb[0].mxu0
    %v5861 = vadd.f32 %v5748, %v5860
    %5862 = vmatprep.mubr.bf16.mxu0 0
    %5863 = vmatmul.mubr.bf16.gmra.mrb[0].mxu0 %v4573
    %v5864 = vpop.f32.mrb[0].mxu0
    %v5865 = vadd.f32 %v5752, %v5864
    %v5866 = vpop.f32.mrb[0].mxu0
    %v5867 = vadd.f32 %v5754, %v5866
    %v5868 = vpop.f32.mrb[0].mxu0
    %v5869 = vadd.f32 %v5756, %v5868
    %v5870 = vpop.f32.mrb[0].mxu0
    %v5871 = vadd.f32 %v5758, %v5870
    %5872 = vdwg.mxu0
    %5873 = vmatprep.subr.bf16.mxu0 %v5217
    %5874 = vmatpush1.bf16.msra.mxu0 %v5216
    %5875 = vmatprep.subr.bf16.mxu0 %v5221
    %5876 = vmatpush1.bf16.msra.mxu0 %v5220
    %5877 = vmatprep.subr.bf16.mxu0 %v5225
    %5878 = vmatpush1.bf16.msra.mxu0 %v5224
    %5879 = vmatprep.subr.bf16.mxu0 %v5229
    %5880 = vmatpush1.bf16.msra.mxu0 %v5228
    %5881 = vmatprep.subr.bf16.mxu0 %v5233
    %5882 = vmatpush1.bf16.msra.mxu0 %v5232
    %5883 = vmatprep.subr.bf16.mxu0 %v5237
    %5884 = vmatpush1.bf16.msra.mxu0 %v5236
    %5885 = vmatprep.subr.bf16.mxu0 %v5241
    %5886 = vmatpush1.bf16.msra.mxu0 %v5240
    %5887 = vmatprep.subr.bf16.mxu0 %v5245
    %5888 = vmatpush1.bf16.msra.mxu0 %v5244
    %5889 = vmatprep.subr.bf16.mxu0 %v5249
    %5890 = vmatpush1.bf16.msra.mxu0 %v5248
    %5891 = vmatprep.subr.bf16.mxu0 %v5253
    %5892 = vmatpush1.bf16.msra.mxu0 %v5252
    %5893 = vmatprep.subr.bf16.mxu0 %v5257
    %5894 = vmatpush1.bf16.msra.mxu0 %v5256
    %5895 = vmatprep.subr.bf16.mxu0 %v5261
    %5896 = vmatpush1.bf16.msra.mxu0 %v5260
    %5897 = vmatprep.subr.bf16.mxu0 %v5265
    %5898 = vmatpush1.bf16.msra.mxu0 %v5264
    %5899 = vmatprep.subr.bf16.mxu0 %v5269
    %5900 = vmatpush1.bf16.msra.mxu0 %v5268
    %5901 = vmatprep.subr.bf16.mxu0 %v5273
    %5902 = vmatpush1.bf16.msra.mxu0 %v5272
    %5903 = vmatprep.subr.bf16.mxu0 %v5277
    %5904 = vmatpush1.bf16.msra.mxu0 %v5276
    %5905 = vmatprep.mubr.bf16.mxu0 %v4535
    %5906 = vmatmul.mubr.bf16.gmra.mrb[0].mxu0 %v4534
    %v5907 = vpop.f32.mrb[0].mxu0
    %v5908 = vadd.f32 0.0, %v5907
    %v5909 = vpop.f32.mrb[0].mxu0
    %v5910 = vadd.f32 0.0, %v5909
    %v5911 = vpop.f32.mrb[0].mxu0
    %v5912 = vadd.f32 0.0, %v5911
    %v5913 = vpop.f32.mrb[0].mxu0
    %v5914 = vadd.f32 0.0, %v5913
    %5915 = vmatprep.mubr.bf16.mxu0 %v4540
    %5916 = vmatmul.mubr.bf16.gmra.mrb[0].mxu0 %v4539
    %v5917 = vpop.f32.mrb[0].mxu0
    %v5918 = vadd.f32 0.0, %v5917
    %v5919 = vpop.f32.mrb[0].mxu0
    %v5920 = vadd.f32 0.0, %v5919
    %v5921 = vpop.f32.mrb[0].mxu0
    %v5922 = vadd.f32 0.0, %v5921
    %v5923 = vpop.f32.mrb[0].mxu0
    %v5924 = vadd.f32 0.0, %v5923
    %5925 = vmatprep.mubr.bf16.mxu0 %v4545
    %5926 = vmatmul.mubr.bf16.gmra.mrb[0].mxu0 %v4544
    %v5927 = vpop.f32.mrb[0].mxu0
    %v5928 = vadd.f32 0.0, %v5927
    %v5929 = vpop.f32.mrb[0].mxu0
    %v5930 = vadd.f32 0.0, %v5929
    %v5931 = vpop.f32.mrb[0].mxu0
    %v5932 = vadd.f32 0.0, %v5931
    %v5933 = vpop.f32.mrb[0].mxu0
    %v5934 = vadd.f32 0.0, %v5933
    %5935 = vmatprep.mubr.bf16.mxu0 %v4550
    %5936 = vmatmul.mubr.bf16.gmra.mrb[0].mxu0 %v4549
    %v5937 = vpop.f32.mrb[0].mxu0
    %v5938 = vadd.f32 0.0, %v5937
    %v5939 = vpop.f32.mrb[0].mxu0
    %v5940 = vadd.f32 0.0, %v5939
    %v5941 = vpop.f32.mrb[0].mxu0
    %v5942 = vadd.f32 0.0, %v5941
    %v5943 = vpop.f32.mrb[0].mxu0
    %v5944 = vadd.f32 0.0, %v5943
    %5945 = vmatprep.mubr.bf16.mxu0 %v4555
    %5946 = vmatmul.mubr.bf16.gmra.mrb[0].mxu0 %v4554
    %v5947 = vpop.f32.mrb[0].mxu0
    %v5948 = vadd.f32 0.0, %v5947
    %v5949 = vpop.f32.mrb[0].mxu0
    %v5950 = vadd.f32 0.0, %v5949
    %v5951 = vpop.f32.mrb[0].mxu0
    %v5952 = vadd.f32 0.0, %v5951
    %v5953 = vpop.f32.mrb[0].mxu0
    %v5954 = vadd.f32 0.0, %v5953
    %5955 = vmatprep.mubr.bf16.mxu0 %v4560
    %5956 = vmatmul.mubr.bf16.gmra.mrb[0].mxu0 %v4559
    %v5957 = vpop.f32.mrb[0].mxu0
    %v5958 = vadd.f32 0.0, %v5957
    %v5959 = vpop.f32.mrb[0].mxu0
    %v5960 = vadd.f32 0.0, %v5959
    %v5961 = vpop.f32.mrb[0].mxu0
    %v5962 = vadd.f32 0.0, %v5961
    %v5963 = vpop.f32.mrb[0].mxu0
    %v5964 = vadd.f32 0.0, %v5963
    %5965 = vmatprep.mubr.bf16.mxu0 %v4565
    %5966 = vmatmul.mubr.bf16.gmra.mrb[0].mxu0 %v4564
    %v5967 = vpop.f32.mrb[0].mxu0
    %v5968 = vadd.f32 0.0, %v5967
    %v5969 = vpop.f32.mrb[0].mxu0
    %v5970 = vadd.f32 0.0, %v5969
    %v5971 = vpop.f32.mrb[0].mxu0
    %v5972 = vadd.f32 0.0, %v5971
    %v5973 = vpop.f32.mrb[0].mxu0
    %v5974 = vadd.f32 0.0, %v5973
    %5975 = vmatprep.mubr.bf16.mxu0 %v4570
    %5976 = vmatmul.mubr.bf16.gmra.mrb[0].mxu0 %v4569
    %v5977 = vpop.f32.mrb[0].mxu0
    %v5978 = vadd.f32 0.0, %v5977
    %v5979 = vpop.f32.mrb[0].mxu0
    %v5980 = vadd.f32 0.0, %v5979
    %v5981 = vpop.f32.mrb[0].mxu0
    %v5982 = vadd.f32 0.0, %v5981
    %v5983 = vpop.f32.mrb[0].mxu0
    %v5984 = vadd.f32 0.0, %v5983
    %5985 = vdwg.mxu0
    %5986 = vmatprep.subr.bf16.mxu0 %v5281
    %5987 = vmatpush1.bf16.msra.mxu0 %v5280
    %5988 = vmatprep.subr.bf16.mxu0 %v5285
    %5989 = vmatpush1.bf16.msra.mxu0 %v5284
    %5990 = vmatprep.subr.bf16.mxu0 %v5289
    %5991 = vmatpush1.bf16.msra.mxu0 %v5288
    %5992 = vmatprep.subr.bf16.mxu0 %v5293
    %5993 = vmatpush1.bf16.msra.mxu0 %v5292
    %5994 = vmatprep.subr.bf16.mxu0 %v5297
    %5995 = vmatpush1.bf16.msra.mxu0 %v5296
    %5996 = vmatprep.subr.bf16.mxu0 %v5301
    %5997 = vmatpush1.bf16.msra.mxu0 %v5300
    %5998 = vmatprep.subr.bf16.mxu0 %v5305
    %5999 = vmatpush1.bf16.msra.mxu0 %v5304
    %6000 = vmatprep.subr.bf16.mxu0 %v5309
    %6001 = vmatpush1.bf16.msra.mxu0 %v5308
    %6002 = vmatprep.subr.bf16.mxu0 %v5313
    %6003 = vmatpush1.bf16.msra.mxu0 %v5312
    %6004 = vmatprep.subr.bf16.mxu0 %v5317
    %6005 = vmatpush1.bf16.msra.mxu0 %v5316
    %6006 = vmatprep.subr.bf16.mxu0 %v5321
    %6007 = vmatpush1.bf16.msra.mxu0 %v5320
    %6008 = vmatprep.subr.bf16.mxu0 %v5325
    %6009 = vmatpush1.bf16.msra.mxu0 %v5324
    %6010 = vmatprep.subr.bf16.mxu0 %v5329
    %6011 = vmatpush1.bf16.msra.mxu0 %v5328
    %6012 = vmatprep.subr.bf16.mxu0 %v5333
    %6013 = vmatpush1.bf16.msra.mxu0 %v5332
    %6014 = vmatprep.subr.bf16.mxu0 %v5337
    %6015 = vmatpush1.bf16.msra.mxu0 %v5336
    %6016 = vmatprep.subr.bf16.mxu0 %v5341
    %6017 = vmatpush1.bf16.msra.mxu0 %v5340
    %6018 = vmatprep.mubr.bf16.mxu0 %v4537
    %6019 = vmatmul.mubr.bf16.gmra.mrb[0].mxu0 %v4536
    %v6020 = vpop.f32.mrb[0].mxu0
    %v6021 = vadd.f32 %v5908, %v6020
    %v6022 = vpop.f32.mrb[0].mxu0
    %v6023 = vadd.f32 %v5910, %v6022
    %v6024 = vpop.f32.mrb[0].mxu0
    %v6025 = vadd.f32 %v5912, %v6024
    %v6026 = vpop.f32.mrb[0].mxu0
    %v6027 = vadd.f32 %v5914, %v6026
    %6028 = vmatprep.mubr.bf16.mxu0 %v4542
    %6029 = vmatmul.mubr.bf16.gmra.mrb[0].mxu0 %v4541
    %v6030 = vpop.f32.mrb[0].mxu0
    %v6031 = vadd.f32 %v5918, %v6030
    %v6032 = vpop.f32.mrb[0].mxu0
    %v6033 = vadd.f32 %v5920, %v6032
    %v6034 = vpop.f32.mrb[0].mxu0
    %v6035 = vadd.f32 %v5922, %v6034
    %v6036 = vpop.f32.mrb[0].mxu0
    %v6037 = vadd.f32 %v5924, %v6036
    %6038 = vmatprep.mubr.bf16.mxu0 %v4547
    %6039 = vmatmul.mubr.bf16.gmra.mrb[0].mxu0 %v4546
    %v6040 = vpop.f32.mrb[0].mxu0
    %v6041 = vadd.f32 %v5928, %v6040
    %v6042 = vpop.f32.mrb[0].mxu0
    %v6043 = vadd.f32 %v5930, %v6042
    %v6044 = vpop.f32.mrb[0].mxu0
    %v6045 = vadd.f32 %v5932, %v6044
    %v6046 = vpop.f32.mrb[0].mxu0
    %v6047 = vadd.f32 %v5934, %v6046
    %6048 = vmatprep.mubr.bf16.mxu0 %v4552
    %6049 = vmatmul.mubr.bf16.gmra.mrb[0].mxu0 %v4551
    %v6050 = vpop.f32.mrb[0].mxu0
    %v6051 = vadd.f32 %v5938, %v6050
    %v6052 = vpop.f32.mrb[0].mxu0
    %v6053 = vadd.f32 %v5940, %v6052
    %v6054 = vpop.f32.mrb[0].mxu0
    %v6055 = vadd.f32 %v5942, %v6054
    %v6056 = vpop.f32.mrb[0].mxu0
    %v6057 = vadd.f32 %v5944, %v6056
    %6058 = vmatprep.mubr.bf16.mxu0 %v4557
    %6059 = vmatmul.mubr.bf16.gmra.mrb[0].mxu0 %v4556
    %v6060 = vpop.f32.mrb[0].mxu0
    %v6061 = vadd.f32 %v5948, %v6060
    %v6062 = vpop.f32.mrb[0].mxu0
    %v6063 = vadd.f32 %v5950, %v6062
    %v6064 = vpop.f32.mrb[0].mxu0
    %v6065 = vadd.f32 %v5952, %v6064
    %v6066 = vpop.f32.mrb[0].mxu0
    %v6067 = vadd.f32 %v5954, %v6066
    %6068 = vmatprep.mubr.bf16.mxu0 %v4562
    %6069 = vmatmul.mubr.bf16.gmra.mrb[0].mxu0 %v4561
    %v6070 = vpop.f32.mrb[0].mxu0
    %v6071 = vadd.f32 %v5958, %v6070
    %v6072 = vpop.f32.mrb[0].mxu0
    %v6073 = vadd.f32 %v5960, %v6072
    %v6074 = vpop.f32.mrb[0].mxu0
    %v6075 = vadd.f32 %v5962, %v6074
    %v6076 = vpop.f32.mrb[0].mxu0
    %v6077 = vadd.f32 %v5964, %v6076
    %6078 = vmatprep.mubr.bf16.mxu0 %v4567
    %6079 = vmatmul.mubr.bf16.gmra.mrb[0].mxu0 %v4566
    %v6080 = vpop.f32.mrb[0].mxu0
    %v6081 = vadd.f32 %v5968, %v6080
    %v6082 = vpop.f32.mrb[0].mxu0
    %v6083 = vadd.f32 %v5970, %v6082
    %v6084 = vpop.f32.mrb[0].mxu0
    %v6085 = vadd.f32 %v5972, %v6084
    %v6086 = vpop.f32.mrb[0].mxu0
    %v6087 = vadd.f32 %v5974, %v6086
    %6088 = vmatprep.mubr.bf16.mxu0 %v4572
    %6089 = vmatmul.mubr.bf16.gmra.mrb[0].mxu0 %v4571
    %v6090 = vpop.f32.mrb[0].mxu0
    %v6091 = vadd.f32 %v5978, %v6090
    %v6092 = vpop.f32.mrb[0].mxu0
    %v6093 = vadd.f32 %v5980, %v6092
    %v6094 = vpop.f32.mrb[0].mxu0
    %v6095 = vadd.f32 %v5982, %v6094
    %v6096 = vpop.f32.mrb[0].mxu0
    %v6097 = vadd.f32 %v5984, %v6096
    %6098 = vdwg.mxu0
    %6099 = vmatprep.subr.bf16.mxu0 %v5345
    %6100 = vmatpush1.bf16.msra.mxu0 %v5344
    %6101 = vmatprep.subr.bf16.mxu0 %v5349
    %6102 = vmatpush1.bf16.msra.mxu0 %v5348
    %6103 = vmatprep.subr.bf16.mxu0 %v5353
    %6104 = vmatpush1.bf16.msra.mxu0 %v5352
    %6105 = vmatprep.subr.bf16.mxu0 %v5357
    %6106 = vmatpush1.bf16.msra.mxu0 %v5356
    %6107 = vmatprep.subr.bf16.mxu0 %v5361
    %6108 = vmatpush1.bf16.msra.mxu0 %v5360
    %6109 = vmatprep.subr.bf16.mxu0 %v5365
    %6110 = vmatpush1.bf16.msra.mxu0 %v5364
    %6111 = vmatprep.subr.bf16.mxu0 %v5369
    %6112 = vmatpush1.bf16.msra.mxu0 %v5368
    %6113 = vmatprep.subr.bf16.mxu0 %v5373
    %6114 = vmatpush1.bf16.msra.mxu0 %v5372
    %6115 = vmatprep.subr.bf16.mxu0 0
    %6116 = vmatpush1.bf16.msra.mxu0 0
    %6117 = vmatprep.subr.bf16.mxu0 0
    %6118 = vmatpush1.bf16.msra.mxu0 0
    %6119 = vmatprep.subr.bf16.mxu0 0
    %6120 = vmatpush1.bf16.msra.mxu0 0
    %6121 = vmatprep.subr.bf16.mxu0 0
    %6122 = vmatpush1.bf16.msra.mxu0 0
    %6123 = vmatprep.subr.bf16.mxu0 0
    %6124 = vmatpush1.bf16.msra.mxu0 0
    %6125 = vmatprep.subr.bf16.mxu0 0
    %6126 = vmatpush1.bf16.msra.mxu0 0
    %6127 = vmatprep.subr.bf16.mxu0 0
    %6128 = vmatpush1.bf16.msra.mxu0 0
    %6129 = vmatprep.subr.bf16.mxu0 0
    %6130 = vmatpush1.bf16.msra.mxu0 0
    %6131 = vmatprep.mubr.bf16.mxu0 0
    %6132 = vmatmul.mubr.bf16.gmra.mrb[0].mxu0 %v4538
    %v6133 = vpop.f32.mrb[0].mxu0
    %v6134 = vadd.f32 %v6021, %v6133
    %v6135 = vpop.f32.mrb[0].mxu0
    %v6136 = vadd.f32 %v6023, %v6135
    %v6137 = vpop.f32.mrb[0].mxu0
    %v6138 = vadd.f32 %v6025, %v6137
    %v6139 = vpop.f32.mrb[0].mxu0
    %v6140 = vadd.f32 %v6027, %v6139
    %6141 = vmatprep.mubr.bf16.mxu0 0
    %6142 = vmatmul.mubr.bf16.gmra.mrb[0].mxu0 %v4543
    %v6143 = vpop.f32.mrb[0].mxu0
    %v6144 = vadd.f32 %v6031, %v6143
    %v6145 = vpop.f32.mrb[0].mxu0
    %v6146 = vadd.f32 %v6033, %v6145
    %v6147 = vpop.f32.mrb[0].mxu0
    %v6148 = vadd.f32 %v6035, %v6147
    %v6149 = vpop.f32.mrb[0].mxu0
    %v6150 = vadd.f32 %v6037, %v6149
    %6151 = vmatprep.mubr.bf16.mxu0 0
    %6152 = vmatmul.mubr.bf16.gmra.mrb[0].mxu0 %v4548
    %v6153 = vpop.f32.mrb[0].mxu0
    %v6154 = vadd.f32 %v6041, %v6153
    %v6155 = vpop.f32.mrb[0].mxu0
    %v6156 = vadd.f32 %v6043, %v6155
    %v6157 = vpop.f32.mrb[0].mxu0
    %v6158 = vadd.f32 %v6045, %v6157
    %v6159 = vpop.f32.mrb[0].mxu0
    %v6160 = vadd.f32 %v6047, %v6159
    %6161 = vmatprep.mubr.bf16.mxu0 0
    %6162 = vmatmul.mubr.bf16.gmra.mrb[0].mxu0 %v4553
    %v6163 = vpop.f32.mrb[0].mxu0
    %v6164 = vadd.f32 %v6051, %v6163
    %v6165 = vpop.f32.mrb[0].mxu0
    %v6166 = vadd.f32 %v6053, %v6165
    %v6167 = vpop.f32.mrb[0].mxu0
    %v6168 = vadd.f32 %v6055, %v6167
    %v6169 = vpop.f32.mrb[0].mxu0
    %v6170 = vadd.f32 %v6057, %v6169
    %6171 = vmatprep.mubr.bf16.mxu0 0
    %6172 = vmatmul.mubr.bf16.gmra.mrb[0].mxu0 %v4558
    %v6173 = vpop.f32.mrb[0].mxu0
    %v6174 = vadd.f32 %v6061, %v6173
    %v6175 = vpop.f32.mrb[0].mxu0
    %v6176 = vadd.f32 %v6063, %v6175
    %v6177 = vpop.f32.mrb[0].mxu0
    %v6178 = vadd.f32 %v6065, %v6177
    %v6179 = vpop.f32.mrb[0].mxu0
    %v6180 = vadd.f32 %v6067, %v6179
    %6181 = vmatprep.mubr.bf16.mxu0 0
    %6182 = vmatmul.mubr.bf16.gmra.mrb[0].mxu0 %v4563
    %v6183 = vpop.f32.mrb[0].mxu0
    %v6184 = vadd.f32 %v6071, %v6183
    %v6185 = vpop.f32.mrb[0].mxu0
    %v6186 = vadd.f32 %v6073, %v6185
    %v6187 = vpop.f32.mrb[0].mxu0
    %v6188 = vadd.f32 %v6075, %v6187
    %v6189 = vpop.f32.mrb[0].mxu0
    %v6190 = vadd.f32 %v6077, %v6189
    %6191 = vmatprep.mubr.bf16.mxu0 0
    %6192 = vmatmul.mubr.bf16.gmra.mrb[0].mxu0 %v4568
    %v6193 = vpop.f32.mrb[0].mxu0
    %v6194 = vadd.f32 %v6081, %v6193
    %v6195 = vpop.f32.mrb[0].mxu0
    %v6196 = vadd.f32 %v6083, %v6195
    %v6197 = vpop.f32.mrb[0].mxu0
    %v6198 = vadd.f32 %v6085, %v6197
    %v6199 = vpop.f32.mrb[0].mxu0
    %v6200 = vadd.f32 %v6087, %v6199
    %6201 = vmatprep.mubr.bf16.mxu0 0
    %6202 = vmatmul.mubr.bf16.gmra.mrb[0].mxu0 %v4573
    %v6203 = vpop.f32.mrb[0].mxu0
    %v6204 = vadd.f32 %v6091, %v6203
    %v6205 = vpop.f32.mrb[0].mxu0
    %v6206 = vadd.f32 %v6093, %v6205
    %v6207 = vpop.f32.mrb[0].mxu0
    %v6208 = vadd.f32 %v6095, %v6207
    %v6209 = vpop.f32.mrb[0].mxu0
    %v6210 = vadd.f32 %v6097, %v6209
    %6211 = vdwg.mxu0
    %v6212 = vadd.f32 %v3544, %v5795
    %v6213 = vadd.f32 %v3546, %v5797
    %v6214 = vadd.f32 %v3770, %v6134
    %v6215 = vadd.f32 %v3772, %v6136
    %v6216 = vadd.f32 %v3548, %v5799
    %v6217 = vadd.f32 %v3550, %v5801
    %v6218 = vadd.f32 %v3774, %v6138
    %v6219 = vadd.f32 %v3776, %v6140
    %v6220 = vadd.f32 %v3554, %v5805
    %v6221 = vadd.f32 %v3556, %v5807
    %v6222 = vadd.f32 %v3780, %v6144
    %v6223 = vadd.f32 %v3782, %v6146
    %v6224 = vadd.f32 %v3558, %v5809
    %v6225 = vadd.f32 %v3560, %v5811
    %v6226 = vadd.f32 %v3784, %v6148
    %v6227 = vadd.f32 %v3786, %v6150
    %v6228 = vadd.f32 %v3564, %v5815
    %v6229 = vadd.f32 %v3566, %v5817
    %v6230 = vadd.f32 %v3790, %v6154
    %v6231 = vadd.f32 %v3792, %v6156
    %v6232 = vadd.f32 %v3568, %v5819
    %v6233 = vadd.f32 %v3570, %v5821
    %v6234 = vadd.f32 %v3794, %v6158
    %v6235 = vadd.f32 %v3796, %v6160
    %v6236 = vadd.f32 %v3574, %v5825
    %v6237 = vadd.f32 %v3576, %v5827
    %v6238 = vadd.f32 %v3800, %v6164
    %v6239 = vadd.f32 %v3802, %v6166
    %v6240 = vadd.f32 %v3578, %v5829
    %v6241 = vadd.f32 %v3580, %v5831
    %v6242 = vadd.f32 %v3804, %v6168
    %v6243 = vadd.f32 %v3806, %v6170
    %v6244 = vadd.f32 %v3584, %v5835
    %v6245 = vadd.f32 %v3586, %v5837
    %v6246 = vadd.f32 %v3810, %v6174
    %v6247 = vadd.f32 %v3812, %v6176
    %v6248 = vadd.f32 %v3588, %v5839
    %v6249 = vadd.f32 %v3590, %v5841
    %v6250 = vadd.f32 %v3814, %v6178
    %v6251 = vadd.f32 %v3816, %v6180
    %v6252 = vadd.f32 %v3594, %v5845
    %v6253 = vadd.f32 %v3596, %v5847
    %v6254 = vadd.f32 %v3820, %v6184
    %v6255 = vadd.f32 %v3822, %v6186
    %v6256 = vadd.f32 %v3598, %v5849
    %v6257 = vadd.f32 %v3600, %v5851
    %v6258 = vadd.f32 %v3824, %v6188
    %v6259 = vadd.f32 %v3826, %v6190
    %v6260 = vadd.f32 %v3604, %v5855
    %v6261 = vadd.f32 %v3606, %v5857
    %v6262 = vadd.f32 %v3830, %v6194
    %v6263 = vadd.f32 %v3832, %v6196
    %v6264 = vadd.f32 %v3608, %v5859
    %v6265 = vadd.f32 %v3610, %v5861
    %v6266 = vadd.f32 %v3834, %v6198
    %v6267 = vadd.f32 %v3836, %v6200
    %v6268 = vadd.f32 %v3614, %v5865
    %v6269 = vadd.f32 %v3616, %v5867
    %v6270 = vadd.f32 %v3840, %v6204
    %v6271 = vadd.f32 %v3842, %v6206
    %v6272 = vadd.f32 %v3618, %v5869
    %v6273 = vadd.f32 %v3620, %v5871
    %v6274 = vadd.f32 %v3844, %v6208
    %v6275 = vadd.f32 %v3846, %v6210
    %v6276 = vpack.c.bf16 %v6216, %v6212
    %v6277 = vpack.c.bf16 %v6217, %v6213
    %v6278 = vpack.c.bf16 %v6218, %v6214
    %v6279 = vpack.c.bf16 %v6219, %v6215
    %v6280 = vpack.c.bf16 %v6224, %v6220
    %v6281 = vpack.c.bf16 %v6225, %v6221
    %v6282 = vpack.c.bf16 %v6226, %v6222
    %v6283 = vpack.c.bf16 %v6227, %v6223
    %v6284 = vpack.c.bf16 %v6232, %v6228
    %v6285 = vpack.c.bf16 %v6233, %v6229
    %v6286 = vpack.c.bf16 %v6234, %v6230
    %v6287 = vpack.c.bf16 %v6235, %v6231
    %v6288 = vpack.c.bf16 %v6240, %v6236
    %v6289 = vpack.c.bf16 %v6241, %v6237
    %v6290 = vpack.c.bf16 %v6242, %v6238
    %v6291 = vpack.c.bf16 %v6243, %v6239
    %v6292 = vpack.c.bf16 %v6248, %v6244
    %v6293 = vpack.c.bf16 %v6249, %v6245
    %v6294 = vpack.c.bf16 %v6250, %v6246
    %v6295 = vpack.c.bf16 %v6251, %v6247
    %v6296 = vpack.c.bf16 %v6256, %v6252
    %v6297 = vpack.c.bf16 %v6257, %v6253
    %v6298 = vpack.c.bf16 %v6258, %v6254
    %v6299 = vpack.c.bf16 %v6259, %v6255
    %v6300 = vpack.c.bf16 %v6264, %v6260
    %v6301 = vpack.c.bf16 %v6265, %v6261
    %v6302 = vpack.c.bf16 %v6266, %v6262
    %v6303 = vpack.c.bf16 %v6267, %v6263
    %v6304 = vpack.c.bf16 %v6272, %v6268
    %v6305 = vpack.c.bf16 %v6273, %v6269
    %v6306 = vpack.c.bf16 %v6274, %v6270
    %v6307 = vpack.c.bf16 %v6275, %v6271
    %v6308 = vld [vmem:[#allocation11] sm:$0xf]
    %v6310 = vlaneseq
    %v6311 = vshrl.u32 %v6310, 7
    %v6312 = vsub.s32 0, %v6311
    %v6313 = vrot.slane %v6308, %v6312
    %v6314 = vlaneseq
    %v6315 = vshrl.u32 %v6314, 7
    %v6316 = vsub.s32 1, %v6315
    %v6317 = vrot.slane %v6308, %v6316
    %v6318 = vlaneseq
    %v6319 = vshrl.u32 %v6318, 7
    %v6320 = vsub.s32 2, %v6319
    %v6321 = vrot.slane %v6308, %v6320
    %v6322 = vlaneseq
    %v6323 = vshrl.u32 %v6322, 7
    %v6324 = vsub.s32 3, %v6323
    %v6325 = vrot.slane %v6308, %v6324
    %6330 = vmatprep.subr.bf16.mxu0 %v6277
    %6331 = vmatpush1.bf16.msra.mxu0 %v6276
    %6332 = vmatprep.subr.bf16.mxu0 %v6281
    %6333 = vmatpush1.bf16.msra.mxu0 %v6280
    %6334 = vmatprep.subr.bf16.mxu0 %v6285
    %6335 = vmatpush1.bf16.msra.mxu0 %v6284
    %6336 = vmatprep.subr.bf16.mxu0 %v6289
    %6337 = vmatpush1.bf16.msra.mxu0 %v6288
    %6338 = vmatprep.subr.bf16.mxu0 %v6293
    %6339 = vmatpush1.bf16.msra.mxu0 %v6292
    %6340 = vmatprep.subr.bf16.mxu0 %v6297
    %6341 = vmatpush1.bf16.msra.mxu0 %v6296
    %6342 = vmatprep.subr.bf16.mxu0 %v6301
    %6343 = vmatpush1.bf16.msra.mxu0 %v6300
    %6344 = vmatprep.subr.bf16.mxu0 %v6305
    %6345 = vmatpush1.bf16.msra.mxu0 %v6304
    %6346 = vmatprep.subr.bf16.mxu0 0
    %6347 = vmatpush1.bf16.msra.mxu0 0
    %6348 = vmatprep.subr.bf16.mxu0 0
    %6349 = vmatpush1.bf16.msra.mxu0 0
    %6350 = vmatprep.subr.bf16.mxu0 0
    %6351 = vmatpush1.bf16.msra.mxu0 0
    %6352 = vmatprep.subr.bf16.mxu0 0
    %6353 = vmatpush1.bf16.msra.mxu0 0
    %6354 = vmatprep.subr.bf16.mxu0 0
    %6355 = vmatpush1.bf16.msra.mxu0 0
    %6356 = vmatprep.subr.bf16.mxu0 0
    %6357 = vmatpush1.bf16.msra.mxu0 0
    %6358 = vmatprep.subr.bf16.mxu0 0
    %6359 = vmatpush1.bf16.msra.mxu0 0
    %6360 = vmatprep.subr.bf16.mxu0 0
    %6361 = vmatpush1.bf16.msra.mxu0 0
    %6362 = vmatprep.mubr.bf16.mxu0 0
    %6363 = vmatmul.mubr.bf16.gmra.mrb[0].mxu0 %v167
    %v6364 = vpop.f32.mrb[0].mxu0
    %v6365 = vadd.f32 %v6313, %v6364
    %v6366 = vpop.f32.mrb[0].mxu0
    %v6367 = vadd.f32 %v6317, %v6366
    %v6368 = vpop.f32.mrb[0].mxu0
    %v6369 = vadd.f32 %v6313, %v6368
    %v6370 = vpop.f32.mrb[0].mxu0
    %v6371 = vadd.f32 %v6317, %v6370
    %6372 = vmatprep.mubr.bf16.mxu0 0
    %6373 = vmatmul.mubr.bf16.gmra.mrb[0].mxu0 %v168
    %v6374 = vpop.f32.mrb[0].mxu0
    %v6375 = vadd.f32 %v6313, %v6374
    %v6376 = vpop.f32.mrb[0].mxu0
    %v6377 = vadd.f32 %v6317, %v6376
    %v6378 = vpop.f32.mrb[0].mxu0
    %v6379 = vadd.f32 %v6313, %v6378
    %v6380 = vpop.f32.mrb[0].mxu0
    %v6381 = vadd.f32 %v6317, %v6380
    %6382 = vmatprep.mubr.bf16.mxu0 0
    %6383 = vmatmul.mubr.bf16.gmra.mrb[0].mxu0 %v169
    %v6384 = vpop.f32.mrb[0].mxu0
    %v6385 = vadd.f32 %v6313, %v6384
    %v6386 = vpop.f32.mrb[0].mxu0
    %v6387 = vadd.f32 %v6317, %v6386
    %v6388 = vpop.f32.mrb[0].mxu0
    %v6389 = vadd.f32 %v6313, %v6388
    %v6390 = vpop.f32.mrb[0].mxu0
    %v6391 = vadd.f32 %v6317, %v6390
    %6392 = vmatprep.mubr.bf16.mxu0 0
    %6393 = vmatmul.mubr.bf16.gmra.mrb[0].mxu0 %v170
    %v6394 = vpop.f32.mrb[0].mxu0
    %v6395 = vadd.f32 %v6313, %v6394
    %v6396 = vpop.f32.mrb[0].mxu0
    %v6397 = vadd.f32 %v6317, %v6396
    %v6398 = vpop.f32.mrb[0].mxu0
    %v6399 = vadd.f32 %v6313, %v6398
    %v6400 = vpop.f32.mrb[0].mxu0
    %v6401 = vadd.f32 %v6317, %v6400
    %6402 = vmatprep.mubr.bf16.mxu0 0
    %6403 = vmatmul.mubr.bf16.gmra.mrb[0].mxu0 %v171
    %v6404 = vpop.f32.mrb[0].mxu0
    %v6405 = vadd.f32 %v6313, %v6404
    %v6406 = vpop.f32.mrb[0].mxu0
    %v6407 = vadd.f32 %v6317, %v6406
    %v6408 = vpop.f32.mrb[0].mxu0
    %v6409 = vadd.f32 %v6313, %v6408
    %v6410 = vpop.f32.mrb[0].mxu0
    %v6411 = vadd.f32 %v6317, %v6410
    %6412 = vmatprep.mubr.bf16.mxu0 0
    %6413 = vmatmul.mubr.bf16.gmra.mrb[0].mxu0 %v172
    %v6414 = vpop.f32.mrb[0].mxu0
    %v6415 = vadd.f32 %v6313, %v6414
    %v6416 = vpop.f32.mrb[0].mxu0
    %v6417 = vadd.f32 %v6317, %v6416
    %v6418 = vpop.f32.mrb[0].mxu0
    %v6419 = vadd.f32 %v6313, %v6418
    %v6420 = vpop.f32.mrb[0].mxu0
    %v6421 = vadd.f32 %v6317, %v6420
    %6422 = vmatprep.mubr.bf16.mxu0 0
    %6423 = vmatmul.mubr.bf16.gmra.mrb[0].mxu0 %v173
    %v6424 = vpop.f32.mrb[0].mxu0
    %v6425 = vadd.f32 %v6313, %v6424
    %v6426 = vpop.f32.mrb[0].mxu0
    %v6427 = vadd.f32 %v6317, %v6426
    %v6428 = vpop.f32.mrb[0].mxu0
    %v6429 = vadd.f32 %v6313, %v6428
    %v6430 = vpop.f32.mrb[0].mxu0
    %v6431 = vadd.f32 %v6317, %v6430
    %6432 = vmatprep.mubr.bf16.mxu0 0
    %6433 = vmatmul.mubr.bf16.gmra.mrb[0].mxu0 %v174
    %v6434 = vpop.f32.mrb[0].mxu0
    %v6435 = vadd.f32 %v6313, %v6434
    %v6436 = vpop.f32.mrb[0].mxu0
    %v6437 = vadd.f32 %v6317, %v6436
    %v6438 = vpop.f32.mrb[0].mxu0
    %v6439 = vadd.f32 %v6313, %v6438
    %v6440 = vpop.f32.mrb[0].mxu0
    %v6441 = vadd.f32 %v6317, %v6440
    %6442 = vdwg.mxu0
    %6443 = vmatprep.subr.bf16.mxu0 %v6279
    %6444 = vmatpush1.bf16.msra.mxu0 %v6278
    %6445 = vmatprep.subr.bf16.mxu0 %v6283
    %6446 = vmatpush1.bf16.msra.mxu0 %v6282
    %6447 = vmatprep.subr.bf16.mxu0 %v6287
    %6448 = vmatpush1.bf16.msra.mxu0 %v6286
    %6449 = vmatprep.subr.bf16.mxu0 %v6291
    %6450 = vmatpush1.bf16.msra.mxu0 %v6290
    %6451 = vmatprep.subr.bf16.mxu0 %v6295
    %6452 = vmatpush1.bf16.msra.mxu0 %v6294
    %6453 = vmatprep.subr.bf16.mxu0 %v6299
    %6454 = vmatpush1.bf16.msra.mxu0 %v6298
    %6455 = vmatprep.subr.bf16.mxu0 %v6303
    %6456 = vmatpush1.bf16.msra.mxu0 %v6302
    %6457 = vmatprep.subr.bf16.mxu0 %v6307
    %6458 = vmatpush1.bf16.msra.mxu0 %v6306
    %6459 = vmatprep.subr.bf16.mxu0 0
    %6460 = vmatpush1.bf16.msra.mxu0 0
    %6461 = vmatprep.subr.bf16.mxu0 0
    %6462 = vmatpush1.bf16.msra.mxu0 0
    %6463 = vmatprep.subr.bf16.mxu0 0
    %6464 = vmatpush1.bf16.msra.mxu0 0
    %6465 = vmatprep.subr.bf16.mxu0 0
    %6466 = vmatpush1.bf16.msra.mxu0 0
    %6467 = vmatprep.subr.bf16.mxu0 0
    %6468 = vmatpush1.bf16.msra.mxu0 0
    %6469 = vmatprep.subr.bf16.mxu0 0
    %6470 = vmatpush1.bf16.msra.mxu0 0
    %6471 = vmatprep.subr.bf16.mxu0 0
    %6472 = vmatpush1.bf16.msra.mxu0 0
    %6473 = vmatprep.subr.bf16.mxu0 0
    %6474 = vmatpush1.bf16.msra.mxu0 0
    %6475 = vmatprep.mubr.bf16.mxu0 0
    %6476 = vmatmul.mubr.bf16.gmra.mrb[0].mxu0 %v167
    %v6477 = vpop.f32.mrb[0].mxu0
    %v6478 = vadd.f32 %v6321, %v6477
    %v6479 = vpop.f32.mrb[0].mxu0
    %v6480 = vadd.f32 %v6325, %v6479
    %v6481 = vpop.f32.mrb[0].mxu0
    %v6482 = vadd.f32 %v6321, %v6481
    %v6483 = vpop.f32.mrb[0].mxu0
    %v6484 = vadd.f32 %v6325, %v6483
    %6485 = vmatprep.mubr.bf16.mxu0 0
    %6486 = vmatmul.mubr.bf16.gmra.mrb[0].mxu0 %v168
    %v6487 = vpop.f32.mrb[0].mxu0
    %v6488 = vadd.f32 %v6321, %v6487
    %v6489 = vpop.f32.mrb[0].mxu0
    %v6490 = vadd.f32 %v6325, %v6489
    %v6491 = vpop.f32.mrb[0].mxu0
    %v6492 = vadd.f32 %v6321, %v6491
    %v6493 = vpop.f32.mrb[0].mxu0
    %v6494 = vadd.f32 %v6325, %v6493
    %6495 = vmatprep.mubr.bf16.mxu0 0
    %6496 = vmatmul.mubr.bf16.gmra.mrb[0].mxu0 %v169
    %v6497 = vpop.f32.mrb[0].mxu0
    %v6498 = vadd.f32 %v6321, %v6497
    %v6499 = vpop.f32.mrb[0].mxu0
    %v6500 = vadd.f32 %v6325, %v6499
    %v6501 = vpop.f32.mrb[0].mxu0
    %v6502 = vadd.f32 %v6321, %v6501
    %v6503 = vpop.f32.mrb[0].mxu0
    %v6504 = vadd.f32 %v6325, %v6503
    %6505 = vmatprep.mubr.bf16.mxu0 0
    %6506 = vmatmul.mubr.bf16.gmra.mrb[0].mxu0 %v170
    %v6507 = vpop.f32.mrb[0].mxu0
    %v6508 = vadd.f32 %v6321, %v6507
    %v6509 = vpop.f32.mrb[0].mxu0
    %v6510 = vadd.f32 %v6325, %v6509
    %v6511 = vpop.f32.mrb[0].mxu0
    %v6512 = vadd.f32 %v6321, %v6511
    %v6513 = vpop.f32.mrb[0].mxu0
    %v6514 = vadd.f32 %v6325, %v6513
    %6515 = vmatprep.mubr.bf16.mxu0 0
    %6516 = vmatmul.mubr.bf16.gmra.mrb[0].mxu0 %v171
    %v6517 = vpop.f32.mrb[0].mxu0
    %v6518 = vadd.f32 %v6321, %v6517
    %v6519 = vpop.f32.mrb[0].mxu0
    %v6520 = vadd.f32 %v6325, %v6519
    %v6521 = vpop.f32.mrb[0].mxu0
    %v6522 = vadd.f32 %v6321, %v6521
    %v6523 = vpop.f32.mrb[0].mxu0
    %v6524 = vadd.f32 %v6325, %v6523
    %6525 = vmatprep.mubr.bf16.mxu0 0
    %6526 = vmatmul.mubr.bf16.gmra.mrb[0].mxu0 %v172
    %v6527 = vpop.f32.mrb[0].mxu0
    %v6528 = vadd.f32 %v6321, %v6527
    %v6529 = vpop.f32.mrb[0].mxu0
    %v6530 = vadd.f32 %v6325, %v6529
    %v6531 = vpop.f32.mrb[0].mxu0
    %v6532 = vadd.f32 %v6321, %v6531
    %v6533 = vpop.f32.mrb[0].mxu0
    %v6534 = vadd.f32 %v6325, %v6533
    %6535 = vmatprep.mubr.bf16.mxu0 0
    %6536 = vmatmul.mubr.bf16.gmra.mrb[0].mxu0 %v173
    %v6537 = vpop.f32.mrb[0].mxu0
    %v6538 = vadd.f32 %v6321, %v6537
    %v6539 = vpop.f32.mrb[0].mxu0
    %v6540 = vadd.f32 %v6325, %v6539
    %v6541 = vpop.f32.mrb[0].mxu0
    %v6542 = vadd.f32 %v6321, %v6541
    %v6543 = vpop.f32.mrb[0].mxu0
    %v6544 = vadd.f32 %v6325, %v6543
    %6545 = vmatprep.mubr.bf16.mxu0 0
    %6546 = vmatmul.mubr.bf16.gmra.mrb[0].mxu0 %v174
    %v6547 = vpop.f32.mrb[0].mxu0
    %v6548 = vadd.f32 %v6321, %v6547
    %v6549 = vpop.f32.mrb[0].mxu0
    %v6550 = vadd.f32 %v6325, %v6549
    %v6551 = vpop.f32.mrb[0].mxu0
    %v6552 = vadd.f32 %v6321, %v6551
    %v6553 = vpop.f32.mrb[0].mxu0
    %v6554 = vadd.f32 %v6325, %v6553
    %6555 = vdwg.mxu0
    %6556 = vst [vmem:[#allocation13] sm:$0xff] %v6365
    %6557 = vst [vmem:[#allocation13 + $0x8] sm:$0xff] %v6367
    %6558 = vst [vmem:[#allocation13 + $0x10] sm:$0xff] %v6478
    %6559 = vst [vmem:[#allocation13 + $0x18] sm:$0xff] %v6480
    %6560 = vst [vmem:[#allocation13 + $0x20] sm:$0xff] %v6369
    %6561 = vst [vmem:[#allocation13 + $0x28] sm:$0xff] %v6371
    %6562 = vst [vmem:[#allocation13 + $0x30] sm:$0xff] %v6482
    %6563 = vst [vmem:[#allocation13 + $0x38] sm:$0xff] %v6484
    %6564 = vst [vmem:[#allocation13 + $0x40] sm:$0xff] %v6375
    %6565 = vst [vmem:[#allocation13 + $0x48] sm:$0xff] %v6377
    %6566 = vst [vmem:[#allocation13 + $0x50] sm:$0xff] %v6488
    %6567 = vst [vmem:[#allocation13 + $0x58] sm:$0xff] %v6490
    %6568 = vst [vmem:[#allocation13 + $0x60] sm:$0xff] %v6379
    %6569 = vst [vmem:[#allocation13 + $0x68] sm:$0xff] %v6381
    %6570 = vst [vmem:[#allocation13 + $0x70] sm:$0xff] %v6492
    %6571 = vst [vmem:[#allocation13 + $0x78] sm:$0xff] %v6494
    %6572 = vst [vmem:[#allocation13 + $0x80] sm:$0xff] %v6385
    %6573 = vst [vmem:[#allocation13 + $0x88] sm:$0xff] %v6387
    %6574 = vst [vmem:[#allocation13 + $0x90] sm:$0xff] %v6498
    %6575 = vst [vmem:[#allocation13 + $0x98] sm:$0xff] %v6500
    %6576 = vst [vmem:[#allocation13 + $0xa0] sm:$0xff] %v6389
    %6577 = vst [vmem:[#allocation13 + $0xa8] sm:$0xff] %v6391
    %6578 = vst [vmem:[#allocation13 + $0xb0] sm:$0xff] %v6502
    %6579 = vst [vmem:[#allocation13 + $0xb8] sm:$0xff] %v6504
    %6580 = vst [vmem:[#allocation13 + $0xc0] sm:$0xff] %v6395
    %6581 = vst [vmem:[#allocation13 + $0xc8] sm:$0xff] %v6397
    %6582 = vst [vmem:[#allocation13 + $0xd0] sm:$0xff] %v6508
    %6583 = vst [vmem:[#allocation13 + $0xd8] sm:$0xff] %v6510
    %6584 = vst [vmem:[#allocation13 + $0xe0] sm:$0xff] %v6399
    %6585 = vst [vmem:[#allocation13 + $0xe8] sm:$0xff] %v6401
    %6586 = vst [vmem:[#allocation13 + $0xf0] sm:$0xff] %v6512
    %6587 = vst [vmem:[#allocation13 + $0xf8] sm:$0xff] %v6514
    %6588 = vst [vmem:[#allocation13 + $0x100] sm:$0xff] %v6405
    %6589 = vst [vmem:[#allocation13 + $0x108] sm:$0xff] %v6407
    %6590 = vst [vmem:[#allocation13 + $0x110] sm:$0xff] %v6518
    %6591 = vst [vmem:[#allocation13 + $0x118] sm:$0xff] %v6520
    %6592 = vst [vmem:[#allocation13 + $0x120] sm:$0xff] %v6409
    %6593 = vst [vmem:[#allocation13 + $0x128] sm:$0xff] %v6411
    %6594 = vst [vmem:[#allocation13 + $0x130] sm:$0xff] %v6522
    %6595 = vst [vmem:[#allocation13 + $0x138] sm:$0xff] %v6524
    %6596 = vst [vmem:[#allocation13 + $0x140] sm:$0xff] %v6415
    %6597 = vst [vmem:[#allocation13 + $0x148] sm:$0xff] %v6417
    %6598 = vst [vmem:[#allocation13 + $0x150] sm:$0xff] %v6528
    %6599 = vst [vmem:[#allocation13 + $0x158] sm:$0xff] %v6530
    %6600 = vst [vmem:[#allocation13 + $0x160] sm:$0xff] %v6419
    %6601 = vst [vmem:[#allocation13 + $0x168] sm:$0xff] %v6421
    %6602 = vst [vmem:[#allocation13 + $0x170] sm:$0xff] %v6532
    %6603 = vst [vmem:[#allocation13 + $0x178] sm:$0xff] %v6534
    %6604 = vst [vmem:[#allocation13 + $0x180] sm:$0xff] %v6425
    %6605 = vst [vmem:[#allocation13 + $0x188] sm:$0xff] %v6427
    %6606 = vst [vmem:[#allocation13 + $0x190] sm:$0xff] %v6538
    %6607 = vst [vmem:[#allocation13 + $0x198] sm:$0xff] %v6540
    %6608 = vst [vmem:[#allocation13 + $0x1a0] sm:$0xff] %v6429
    %6609 = vst [vmem:[#allocation13 + $0x1a8] sm:$0xff] %v6431
    %6610 = vst [vmem:[#allocation13 + $0x1b0] sm:$0xff] %v6542
    %6611 = vst [vmem:[#allocation13 + $0x1b8] sm:$0xff] %v6544
    %6612 = vst [vmem:[#allocation13 + $0x1c0] sm:$0xff] %v6435
    %6613 = vst [vmem:[#allocation13 + $0x1c8] sm:$0xff] %v6437
    %6614 = vst [vmem:[#allocation13 + $0x1d0] sm:$0xff] %v6548
    %6615 = vst [vmem:[#allocation13 + $0x1d8] sm:$0xff] %v6550
    %6616 = vst [vmem:[#allocation13 + $0x1e0] sm:$0xff] %v6439
    %6617 = vst [vmem:[#allocation13 + $0x1e8] sm:$0xff] %v6441
    %6618 = vst [vmem:[#allocation13 + $0x1f0] sm:$0xff] %v6552
    %6619 = vst [vmem:[#allocation13 + $0x1f8] sm:$0xff] %v6554
    // Predicated region
    $region50: #{tpu_custom_call.1} parent=1 // pred_check
      _
    $region51: #{tpu_custom_call.1} parent=1 // pred_check_branch
      %6621 = sbr.rel (0) target = $region53
    $region52: #{tpu_custom_call.1} parent=1 // pred_region
      %s6623 = ssub.s32 8192, 8192
      %6624 = vsyncadd [#allocation4], %s6623
      %s6625 = sshll.u32 [#allocation13], 4
      %s6626 = int_to_ptr.vmem [resolvable:$true] %s6625
      %6631 = dma.vmem_to_hbm [thread:$0]  %s6626, 8192, %s6, [#allocation4], 512, 512, 32
    $region53: #{tpu_custom_call.1} parent=1 // pred_fallthru
      _
    // Predicated region
    $region54: #{tpu_custom_call.1} parent=1 // pred_check
      _
    $region55: #{tpu_custom_call.1} parent=1 // pred_check_branch
      %6633 = sbr.rel (0) target = $region57
    $region56: #{tpu_custom_call.1} parent=1 // pred_region
      %6634 = dma.done [#allocation4], 8192
    $region57: #{tpu_custom_call.1} parent=1 // pred_fallthru
      _
    %6635 = vsyncpa [#allocation3], 1
    %6636 = vsyncpa [#allocation6], 1
    %6637 = vsyncpa [#allocation9], 1
    %6638 = vsyncpa [#allocation12], 1
    %6639 = vsyncpa [#allocation4], 1

</llo_original>
